<compile_context>
chip_gen: v7x
topology: tpu7x:2x2x1
jax: 0.10.0
libtpu: 0.0.40
codegen_flags: <defaults>
</compile_context>

<pallas_src>
import functools

import jax
import jax.numpy as jnp
from jax.experimental import pallas as pl
from jax.experimental.pallas import tpu as pltpu


def _attention_kernel(x_ref, ctx_ref, wq_ref, wkv_ref, wo_ref, o_ref, *,
                      heads, dim_head, scale):
    # x_ref: (1, N, Dq) bf16 ; ctx_ref: (1, M, Dc) bf16
    # wq: (Dq, inner) ; wkv: (Dc, 2*inner) ; wo: (inner, Dq) ; o: (1, N, Dq)
    x = x_ref[0]                                           # (N, Dq)  bf16
    ctx = ctx_ref[0]                                       # (M, Dc)  bf16
    inner = heads * dim_head

    # Projections: bf16 MXU matmuls, fp32 accumulate.  The softmax scale is a
    # power of two (dim_head**-0.5 with dim_head=64) so folding it into q and
    # re-casting to bf16 is exact.
    q = (jnp.dot(x, wq_ref[...], preferred_element_type=jnp.float32)
         * scale).astype(jnp.bfloat16)                     # (N, inner)
    kv = jnp.dot(ctx, wkv_ref[...],
                 preferred_element_type=jnp.float32).astype(jnp.bfloat16)
    k = kv[:, :inner]                                      # (M, inner)
    v = kv[:, inner:]                                      # (M, inner)

    # Per-head attention; static Python loop -> static lane slices, fully
    # unrolled (heads is small and compile-time constant).
    head_outs = []
    for h in range(heads):
        sl = slice(h * dim_head, (h + 1) * dim_head)
        qh, kh, vh = q[:, sl], k[:, sl], v[:, sl]          # (N,d),(M,d),(M,d)
        # s = qh @ kh^T, fp32 accumulate on the MXU.
        s = jax.lax.dot_general(qh, kh, (((1,), (1,)), ((), ())),
                                preferred_element_type=jnp.float32)  # (N, M)
        m = jnp.max(s, axis=-1, keepdims=True)
        p = jnp.exp(s - m)
        denom = jnp.sum(p, axis=-1, keepdims=True)
        p = (p * pl.reciprocal(denom, approx=True)).astype(jnp.bfloat16)
        oh = jnp.dot(p, vh, preferred_element_type=jnp.float32)      # (N, d)
        head_outs.append(oh.astype(jnp.bfloat16))
    o_heads = jnp.concatenate(head_outs, axis=-1)          # (N, inner) bf16

    out = jnp.dot(o_heads, wo_ref[...],
                  preferred_element_type=jnp.float32)      # (N, Dq) fp32
    # Single unmasked, lane-dense (Dq multiple of 128) full-tile store.
    o_ref[0] = out.astype(o_ref.dtype)


def attention_forward(x, wq, wkv, wo, *, heads, dim_head, context=None):
    """x: (B, N, query_dim).  Returns (B, N, query_dim) bf16.

    Weights are stored transposed relative to torch.nn.Linear:
      wq  = to_q.weight.T   (query_dim,  inner)
      wkv = to_kv.weight.T  (context_dim, 2*inner)
      wo  = to_out.weight.T (inner,      query_dim)
    """
    if context is None:
        context = x
    B, N, Dq = x.shape
    _, M, Dc = context.shape
    inner = heads * dim_head
    assert wq.shape == (Dq, inner)
    assert wkv.shape == (Dc, 2 * inner)
    assert wo.shape == (inner, Dq)

    # Cast once in the wrapper (halves DMA for any fp32 params/inputs).
    x = x.astype(jnp.bfloat16)
    context = context.astype(jnp.bfloat16)
    wq = wq.astype(jnp.bfloat16)
    wkv = wkv.astype(jnp.bfloat16)
    wo = wo.astype(jnp.bfloat16)

    kernel = functools.partial(_attention_kernel, heads=heads,
                               dim_head=dim_head, scale=dim_head ** -0.5)

    return pl.pallas_call(
        kernel,
        out_shape=jax.ShapeDtypeStruct((B, N, Dq), jnp.bfloat16),
        grid_spec=pltpu.PrefetchScalarGridSpec(
            num_scalar_prefetch=0,
            grid=(B,),
            in_specs=[
                pl.BlockSpec((1, N, Dq), lambda b: (b, 0, 0)),       # x
                pl.BlockSpec((1, M, Dc), lambda b: (b, 0, 0)),       # context
                pl.BlockSpec((Dq, inner), lambda b: (0, 0)),         # Wq
                pl.BlockSpec((Dc, 2 * inner), lambda b: (0, 0)),     # Wkv
                pl.BlockSpec((inner, Dq), lambda b: (0, 0)),         # Wo
            ],
            out_specs=pl.BlockSpec((1, N, Dq), lambda b: (b, 0, 0)),
        ),
        compiler_params=pltpu.CompilerParams(
            dimension_semantics=("parallel",)),
    )(x, context, wq, wkv, wo)


def reference(x, wq, wkv, wo, *, heads, dim_head, context=None):
    if context is None:
        context = x
    f32 = jnp.float32
    inner = heads * dim_head
    B, N, _ = x.shape
    M = context.shape[1]

    q = (x.astype(f32) @ wq.astype(f32)).astype(jnp.bfloat16)
    kv = (context.astype(f32) @ wkv.astype(f32)).astype(jnp.bfloat16)
    k, v = kv[..., :inner], kv[..., inner:]

    def split(t, L):  # 'b n (h d) -> b h n d'
        return t.reshape(B, L, heads, dim_head).transpose(0, 2, 1, 3).astype(f32)

    qh, kh, vh = split(q, N), split(k, M), split(v, M)
    s = jnp.einsum('bhnd,bhmd->bhnm', qh, kh) * (dim_head ** -0.5)
    p = jax.nn.softmax(s, axis=-1)
    o = jnp.einsum('bhnm,bhmd->bhnd', p, vh)
    o = o.transpose(0, 2, 1, 3).reshape(B, N, inner).astype(jnp.bfloat16)
    out = o.astype(f32) @ wo.astype(f32)
    return out.astype(jnp.bfloat16)


if __name__ == "__main__":
    # Small but MXU/lane-aligned shapes implied by the module.
    B, N = 2, 128
    query_dim = 128
    heads, dim_head = 4, 64
    inner = heads * dim_head

    key = jax.random.PRNGKey(0)
    kx, kq, kkv, ko = jax.random.split(key, 4)
    x = jax.random.normal(kx, (B, N, query_dim), jnp.float32).astype(jnp.bfloat16)
    wq = (jax.random.normal(kq, (query_dim, inner), jnp.float32) * 0.05
          ).astype(jnp.bfloat16)
    wkv = (jax.random.normal(kkv, (query_dim, 2 * inner), jnp.float32) * 0.05
           ).astype(jnp.bfloat16)
    wo = (jax.random.normal(ko, (inner, query_dim), jnp.float32) * 0.05
          ).astype(jnp.bfloat16)

    out = attention_forward(x, wq, wkv, wo, heads=heads, dim_head=dim_head)
    out = jax.block_until_ready(out)

    ref = reference(x, wq, wkv, wo, heads=heads, dim_head=dim_head)
    assert out.shape == (B, N, query_dim), out.shape
    assert out.dtype == jnp.bfloat16, out.dtype
    err = float(jnp.max(jnp.abs(out.astype(jnp.float32) - ref.astype(jnp.float32))))
    assert err < 3e-2, err

    # TODO(synk): the original forward accepts a `mask` argument but never
    # passes it to scaled_dot_product_attention, so it is intentionally omitted.
    print("KERNEL_OK")
</pallas_src>

<mosaic_0001>
module attributes {stable_mosaic.version = 11 : i64} {
  func.func @_attention_kernel(%arg0: i32, %arg1: memref<1x128x128xbf16, #tpu.memory_space<vmem>>, %arg2: memref<1x128x128xbf16, #tpu.memory_space<vmem>>, %arg3: memref<128x256xbf16, #tpu.memory_space<vmem>>, %arg4: memref<128x512xbf16, #tpu.memory_space<vmem>>, %arg5: memref<256x128xbf16, #tpu.memory_space<vmem>>, %arg6: memref<1x128x128xbf16, #tpu.memory_space<vmem>>) attributes {dimension_semantics = [#tpu.dimension_semantics<parallel>], iteration_bounds = array<i64: 2>, scalar_prefetch = 0 : i64, scratch_operands = 0 : i64, tpu.core_type = #tpu.core_type<tc>, window_params = [{transform_indices = @transform_0, window_bounds = array<i64: 1, 128, 128>}, {transform_indices = @transform_1, window_bounds = array<i64: 1, 128, 128>}, {pipeline_mode = #tpu.pipeline_mode<synchronous>, transform_indices = @transform_2, window_bounds = array<i64: 128, 256>}, {pipeline_mode = #tpu.pipeline_mode<synchronous>, transform_indices = @transform_3, window_bounds = array<i64: 128, 512>}, {pipeline_mode = #tpu.pipeline_mode<synchronous>, transform_indices = @transform_4, window_bounds = array<i64: 256, 128>}, {transform_indices = @transform_5, window_bounds = array<i64: 1, 128, 128>}]} {
    %c0 = arith.constant 0 : index
    %c0_0 = arith.constant 0 : index
    %c0_1 = arith.constant 0 : index
    %0 = vector.load %arg1[%c0, %c0_0, %c0_1] : memref<1x128x128xbf16, #tpu.memory_space<vmem>>, vector<1x128x128xbf16>
    %1 = vector.shape_cast %0 : vector<1x128x128xbf16> to vector<128x128xbf16>
    %c0_2 = arith.constant 0 : index
    %c0_3 = arith.constant 0 : index
    %c0_4 = arith.constant 0 : index
    %2 = vector.load %arg2[%c0_2, %c0_3, %c0_4] : memref<1x128x128xbf16, #tpu.memory_space<vmem>>, vector<1x128x128xbf16>
    %3 = vector.shape_cast %2 : vector<1x128x128xbf16> to vector<128x128xbf16>
    %c0_5 = arith.constant 0 : index
    %c0_6 = arith.constant 0 : index
    %4 = vector.load %arg3[%c0_5, %c0_6] : memref<128x256xbf16, #tpu.memory_space<vmem>>, vector<128x256xbf16>
    %cst = arith.constant dense<0.000000e+00> : vector<128x256xf32>
    %5 = tpu.matmul %1, %4, %cst {dimension_numbers = #tpu.dot_dimension_numbers<[1], [0], [0], [1], [0, 0, 1, 1], [], []>} : vector<128x128xbf16>, vector<128x256xbf16>, vector<128x256xf32> -> vector<128x256xf32>
    %cst_7 = arith.constant 1.250000e-01 : f32
    %6 = vector.broadcast %cst_7 : f32 to vector<128x256xf32>
    %7 = arith.mulf %5, %6 : vector<128x256xf32>
    %8 = arith.truncf %7 : vector<128x256xf32> to vector<128x256xbf16>
    %c0_8 = arith.constant 0 : index
    %c0_9 = arith.constant 0 : index
    %9 = vector.load %arg4[%c0_8, %c0_9] : memref<128x512xbf16, #tpu.memory_space<vmem>>, vector<128x512xbf16>
    %cst_10 = arith.constant dense<0.000000e+00> : vector<128x512xf32>
    %10 = tpu.matmul %3, %9, %cst_10 {dimension_numbers = #tpu.dot_dimension_numbers<[1], [0], [0], [1], [0, 0, 1, 1], [], []>} : vector<128x128xbf16>, vector<128x512xbf16>, vector<128x512xf32> -> vector<128x512xf32>
    %11 = arith.truncf %10 : vector<128x512xf32> to vector<128x512xbf16>
    %12 = vector.extract_strided_slice %11 {offsets = [0, 0], sizes = [128, 256], strides = [1, 1]} : vector<128x512xbf16> to vector<128x256xbf16>
    %13 = vector.extract_strided_slice %11 {offsets = [0, 256], sizes = [128, 256], strides = [1, 1]} : vector<128x512xbf16> to vector<128x256xbf16>
    %14 = vector.extract_strided_slice %8 {offsets = [0, 0], sizes = [128, 64], strides = [1, 1]} : vector<128x256xbf16> to vector<128x64xbf16>
    %15 = vector.extract_strided_slice %12 {offsets = [0, 0], sizes = [128, 64], strides = [1, 1]} : vector<128x256xbf16> to vector<128x64xbf16>
    %16 = vector.extract_strided_slice %13 {offsets = [0, 0], sizes = [128, 64], strides = [1, 1]} : vector<128x256xbf16> to vector<128x64xbf16>
    %cst_11 = arith.constant dense<0.000000e+00> : vector<128x128xf32>
    %17 = tpu.matmul %14, %15, %cst_11 {dimension_numbers = #tpu.dot_dimension_numbers<[1], [1], [0], [0], [0, 0, 1, 0], [], []>} : vector<128x64xbf16>, vector<128x64xbf16>, vector<128x128xf32> -> vector<128x128xf32>
    %cst_12 = arith.constant dense<0xFF800000> : vector<128xf32>
    %18 = vector.multi_reduction <maximumf>, %17, %cst_12 [1] : vector<128x128xf32> to vector<128xf32>
    %19 = vector.shape_cast %18 : vector<128xf32> to vector<128x1xf32>
    %20 = vector.broadcast %19 : vector<128x1xf32> to vector<128x128xf32>
    %21 = arith.subf %17, %20 : vector<128x128xf32>
    %22 = math.exp %21 : vector<128x128xf32>
    %cst_13 = arith.constant dense<0.000000e+00> : vector<128xf32>
    %23 = vector.multi_reduction <add>, %22, %cst_13 [1] : vector<128x128xf32> to vector<128xf32>
    %24 = vector.shape_cast %23 : vector<128xf32> to vector<128x1xf32>
    %25 = tpu.reciprocal %24 {approx = true} : vector<128x1xf32> -> vector<128x1xf32>
    %26 = vector.broadcast %25 : vector<128x1xf32> to vector<128x128xf32>
    %27 = arith.mulf %22, %26 : vector<128x128xf32>
    %28 = arith.truncf %27 : vector<128x128xf32> to vector<128x128xbf16>
    %cst_14 = arith.constant dense<0.000000e+00> : vector<128x64xf32>
    %29 = tpu.matmul %28, %16, %cst_14 {dimension_numbers = #tpu.dot_dimension_numbers<[1], [0], [0], [1], [0, 0, 1, 1], [], []>} : vector<128x128xbf16>, vector<128x64xbf16>, vector<128x64xf32> -> vector<128x64xf32>
    %30 = arith.truncf %29 : vector<128x64xf32> to vector<128x64xbf16>
    %31 = vector.extract_strided_slice %8 {offsets = [0, 64], sizes = [128, 64], strides = [1, 1]} : vector<128x256xbf16> to vector<128x64xbf16>
    %32 = vector.extract_strided_slice %12 {offsets = [0, 64], sizes = [128, 64], strides = [1, 1]} : vector<128x256xbf16> to vector<128x64xbf16>
    %33 = vector.extract_strided_slice %13 {offsets = [0, 64], sizes = [128, 64], strides = [1, 1]} : vector<128x256xbf16> to vector<128x64xbf16>
    %cst_15 = arith.constant dense<0.000000e+00> : vector<128x128xf32>
    %34 = tpu.matmul %31, %32, %cst_15 {dimension_numbers = #tpu.dot_dimension_numbers<[1], [1], [0], [0], [0, 0, 1, 0], [], []>} : vector<128x64xbf16>, vector<128x64xbf16>, vector<128x128xf32> -> vector<128x128xf32>
    %cst_16 = arith.constant dense<0xFF800000> : vector<128xf32>
    %35 = vector.multi_reduction <maximumf>, %34, %cst_16 [1] : vector<128x128xf32> to vector<128xf32>
    %36 = vector.shape_cast %35 : vector<128xf32> to vector<128x1xf32>
    %37 = vector.broadcast %36 : vector<128x1xf32> to vector<128x128xf32>
    %38 = arith.subf %34, %37 : vector<128x128xf32>
    %39 = math.exp %38 : vector<128x128xf32>
    %cst_17 = arith.constant dense<0.000000e+00> : vector<128xf32>
    %40 = vector.multi_reduction <add>, %39, %cst_17 [1] : vector<128x128xf32> to vector<128xf32>
    %41 = vector.shape_cast %40 : vector<128xf32> to vector<128x1xf32>
    %42 = tpu.reciprocal %41 {approx = true} : vector<128x1xf32> -> vector<128x1xf32>
    %43 = vector.broadcast %42 : vector<128x1xf32> to vector<128x128xf32>
    %44 = arith.mulf %39, %43 : vector<128x128xf32>
    %45 = arith.truncf %44 : vector<128x128xf32> to vector<128x128xbf16>
    %cst_18 = arith.constant dense<0.000000e+00> : vector<128x64xf32>
    %46 = tpu.matmul %45, %33, %cst_18 {dimension_numbers = #tpu.dot_dimension_numbers<[1], [0], [0], [1], [0, 0, 1, 1], [], []>} : vector<128x128xbf16>, vector<128x64xbf16>, vector<128x64xf32> -> vector<128x64xf32>
    %47 = arith.truncf %46 : vector<128x64xf32> to vector<128x64xbf16>
    %48 = vector.extract_strided_slice %8 {offsets = [0, 128], sizes = [128, 64], strides = [1, 1]} : vector<128x256xbf16> to vector<128x64xbf16>
    %49 = vector.extract_strided_slice %12 {offsets = [0, 128], sizes = [128, 64], strides = [1, 1]} : vector<128x256xbf16> to vector<128x64xbf16>
    %50 = vector.extract_strided_slice %13 {offsets = [0, 128], sizes = [128, 64], strides = [1, 1]} : vector<128x256xbf16> to vector<128x64xbf16>
    %cst_19 = arith.constant dense<0.000000e+00> : vector<128x128xf32>
    %51 = tpu.matmul %48, %49, %cst_19 {dimension_numbers = #tpu.dot_dimension_numbers<[1], [1], [0], [0], [0, 0, 1, 0], [], []>} : vector<128x64xbf16>, vector<128x64xbf16>, vector<128x128xf32> -> vector<128x128xf32>
    %cst_20 = arith.constant dense<0xFF800000> : vector<128xf32>
    %52 = vector.multi_reduction <maximumf>, %51, %cst_20 [1] : vector<128x128xf32> to vector<128xf32>
    %53 = vector.shape_cast %52 : vector<128xf32> to vector<128x1xf32>
    %54 = vector.broadcast %53 : vector<128x1xf32> to vector<128x128xf32>
    %55 = arith.subf %51, %54 : vector<128x128xf32>
    %56 = math.exp %55 : vector<128x128xf32>
    %cst_21 = arith.constant dense<0.000000e+00> : vector<128xf32>
    %57 = vector.multi_reduction <add>, %56, %cst_21 [1] : vector<128x128xf32> to vector<128xf32>
    %58 = vector.shape_cast %57 : vector<128xf32> to vector<128x1xf32>
    %59 = tpu.reciprocal %58 {approx = true} : vector<128x1xf32> -> vector<128x1xf32>
    %60 = vector.broadcast %59 : vector<128x1xf32> to vector<128x128xf32>
    %61 = arith.mulf %56, %60 : vector<128x128xf32>
    %62 = arith.truncf %61 : vector<128x128xf32> to vector<128x128xbf16>
    %cst_22 = arith.constant dense<0.000000e+00> : vector<128x64xf32>
    %63 = tpu.matmul %62, %50, %cst_22 {dimension_numbers = #tpu.dot_dimension_numbers<[1], [0], [0], [1], [0, 0, 1, 1], [], []>} : vector<128x128xbf16>, vector<128x64xbf16>, vector<128x64xf32> -> vector<128x64xf32>
    %64 = arith.truncf %63 : vector<128x64xf32> to vector<128x64xbf16>
    %65 = vector.extract_strided_slice %8 {offsets = [0, 192], sizes = [128, 64], strides = [1, 1]} : vector<128x256xbf16> to vector<128x64xbf16>
    %66 = vector.extract_strided_slice %12 {offsets = [0, 192], sizes = [128, 64], strides = [1, 1]} : vector<128x256xbf16> to vector<128x64xbf16>
    %67 = vector.extract_strided_slice %13 {offsets = [0, 192], sizes = [128, 64], strides = [1, 1]} : vector<128x256xbf16> to vector<128x64xbf16>
    %cst_23 = arith.constant dense<0.000000e+00> : vector<128x128xf32>
    %68 = tpu.matmul %65, %66, %cst_23 {dimension_numbers = #tpu.dot_dimension_numbers<[1], [1], [0], [0], [0, 0, 1, 0], [], []>} : vector<128x64xbf16>, vector<128x64xbf16>, vector<128x128xf32> -> vector<128x128xf32>
    %cst_24 = arith.constant dense<0xFF800000> : vector<128xf32>
    %69 = vector.multi_reduction <maximumf>, %68, %cst_24 [1] : vector<128x128xf32> to vector<128xf32>
    %70 = vector.shape_cast %69 : vector<128xf32> to vector<128x1xf32>
    %71 = vector.broadcast %70 : vector<128x1xf32> to vector<128x128xf32>
    %72 = arith.subf %68, %71 : vector<128x128xf32>
    %73 = math.exp %72 : vector<128x128xf32>
    %cst_25 = arith.constant dense<0.000000e+00> : vector<128xf32>
    %74 = vector.multi_reduction <add>, %73, %cst_25 [1] : vector<128x128xf32> to vector<128xf32>
    %75 = vector.shape_cast %74 : vector<128xf32> to vector<128x1xf32>
    %76 = tpu.reciprocal %75 {approx = true} : vector<128x1xf32> -> vector<128x1xf32>
    %77 = vector.broadcast %76 : vector<128x1xf32> to vector<128x128xf32>
    %78 = arith.mulf %73, %77 : vector<128x128xf32>
    %79 = arith.truncf %78 : vector<128x128xf32> to vector<128x128xbf16>
    %cst_26 = arith.constant dense<0.000000e+00> : vector<128x64xf32>
    %80 = tpu.matmul %79, %67, %cst_26 {dimension_numbers = #tpu.dot_dimension_numbers<[1], [0], [0], [1], [0, 0, 1, 1], [], []>} : vector<128x128xbf16>, vector<128x64xbf16>, vector<128x64xf32> -> vector<128x64xf32>
    %81 = arith.truncf %80 : vector<128x64xf32> to vector<128x64xbf16>
    %82 = tpu.concatenate %30, %47, %64, %81 in 1 : vector<128x64xbf16>, vector<128x64xbf16>, vector<128x64xbf16>, vector<128x64xbf16> -> vector<128x256xbf16>
    %c0_27 = arith.constant 0 : index
    %c0_28 = arith.constant 0 : index
    %83 = vector.load %arg5[%c0_27, %c0_28] : memref<256x128xbf16, #tpu.memory_space<vmem>>, vector<256x128xbf16>
    %cst_29 = arith.constant dense<0.000000e+00> : vector<128x128xf32>
    %84 = tpu.matmul %82, %83, %cst_29 {dimension_numbers = #tpu.dot_dimension_numbers<[1], [0], [0], [1], [0, 0, 1, 1], [], []>} : vector<128x256xbf16>, vector<256x128xbf16>, vector<128x128xf32> -> vector<128x128xf32>
    %85 = arith.truncf %84 : vector<128x128xf32> to vector<128x128xbf16>
    %c0_30 = arith.constant 0 : index
    %c0_31 = arith.constant 0 : index
    %c0_32 = arith.constant 0 : index
    %86 = vector.load %arg6[%c0_30, %c0_31, %c0_32] : memref<1x128x128xbf16, #tpu.memory_space<vmem>>, vector<1x128x128xbf16>
    %87 = vector.shape_cast %86 : vector<1x128x128xbf16> to vector<128x128xbf16>
    %88 = vector.shape_cast %85 : vector<128x128xbf16> to vector<1x128x128xbf16>
    tpu.vector_store %arg6[%c0_30, %c0_31, %c0_32], %88 {strides = array<i32>} : memref<1x128x128xbf16, #tpu.memory_space<vmem>>, vector<1x128x128xbf16>,
    return
  }
  func.func @transform_0(%arg0: i32) -> (i32, i32, i32) {
    %c0_i32 = arith.constant 0 : i32
    %c0_i32_0 = arith.constant 0 : i32
    %c0_i32_1 = arith.constant 0 : i32
    return %arg0, %c0_i32, %c0_i32_0 : i32, i32, i32
  }
  func.func @transform_1(%arg0: i32) -> (i32, i32, i32) {
    %c0_i32 = arith.constant 0 : i32
    %c0_i32_0 = arith.constant 0 : i32
    %c0_i32_1 = arith.constant 0 : i32
    return %arg0, %c0_i32, %c0_i32_0 : i32, i32, i32
  }
  func.func @transform_2(%arg0: i32) -> (i32, i32) {
    %c0_i32 = arith.constant 0 : i32
    %c0_i32_0 = arith.constant 0 : i32
    %c0_i32_1 = arith.constant 0 : i32
    return %c0_i32, %c0_i32_0 : i32, i32
  }
  func.func @transform_3(%arg0: i32) -> (i32, i32) {
    %c0_i32 = arith.constant 0 : i32
    %c0_i32_0 = arith.constant 0 : i32
    %c0_i32_1 = arith.constant 0 : i32
    return %c0_i32, %c0_i32_0 : i32, i32
  }
  func.func @transform_4(%arg0: i32) -> (i32, i32) {
    %c0_i32 = arith.constant 0 : i32
    %c0_i32_0 = arith.constant 0 : i32
    %c0_i32_1 = arith.constant 0 : i32
    return %c0_i32, %c0_i32_0 : i32, i32
  }
  func.func @transform_5(%arg0: i32) -> (i32, i32, i32) {
    %c0_i32 = arith.constant 0 : i32
    %c0_i32_0 = arith.constant 0 : i32
    %c0_i32_1 = arith.constant 0 : i32
    return %arg0, %c0_i32, %c0_i32_0 : i32, i32, i32
  }
}

</mosaic_0001>

<llo_original>
// kernel: tpu_custom_call.1
$region0: #{tpu_custom_call.1}
  #allocation0 [shape = 'u32[]', space=smem, size = 0x4, offset = 0x4, fixed_abs, tag = 'smem constant byte address 0x4 - core index']
  #allocation1 [shape = 'u32[144,128]{1,0:T(1,128)}', space=vmem, size = 0x12000, scoped, tag = 'internal scratch']
  %s0 = inlined_call_operand.hbm [shape: bf16[2,128,128], index: 0, kind: input, shape index: {}]
  %s1 = inlined_call_operand.hbm [shape: bf16[2,128,128], index: 1, kind: input, shape index: {}]
  %s2 = inlined_call_operand.hbm [shape: bf16[128,256], index: 2, kind: input, shape index: {}]
  %s3 = inlined_call_operand.hbm [shape: bf16[128,512], index: 3, kind: input, shape index: {}]
  %s4 = inlined_call_operand.hbm [shape: bf16[256,128], index: 4, kind: input, shape index: {}]
  %s5 = inlined_call_operand.hbm [shape: bf16[2,128,128], index: 5, kind: output, shape index: {}]
  %s6 = sld [smem:[#allocation0]]
  $region73: #{tpu_custom_call.1} parent=0
    _
  %s8 = ssub.s32 1, %s6
  %s9 = scalar_select 0, %s8, %s6
  $region1: #{tpu_custom_call.1} parent=0
    #allocation2 [shape = 'u8[65536]{0}', space=vmem, size = 0x10000, scoped, tag = 'input window, operand 0']
    #allocation3 [shape = 's32[2]{0}', space=sflag, size = 0x8, scoped, tag = 'scoped memory for tpu_custom_call.1']
    #allocation4 [shape = 's32[2]{0}', space=sflag, size = 0x8, scoped, tag = 'scoped memory for tpu_custom_call.1']
    #allocation5 [shape = 'u8[65536]{0}', space=vmem, size = 0x10000, scoped, tag = 'input window, operand 1']
    #allocation6 [shape = 's32[2]{0}', space=sflag, size = 0x8, scoped, tag = 'scoped memory for tpu_custom_call.1']
    #allocation7 [shape = 'u8[65536]{0}', space=vmem, size = 0x10000, scoped, tag = 'input window, operand 2, single buffered']
    #allocation8 [shape = 'u8[131072]{0}', space=vmem, size = 0x20000, scoped, tag = 'input window, operand 3, single buffered']
    #allocation9 [shape = 's32[1]{0}', space=sflag, size = 0x4, scoped, tag = 'scoped memory for tpu_custom_call.1']
    #allocation10 [shape = 'u8[65536]{0}', space=vmem, size = 0x10000, scoped, tag = 'input window, operand 4, single buffered']
    #allocation11 [shape = 'u8[65536]{0}', space=vmem, size = 0x10000, scoped, tag = 'output window, operand 0']
    %10 = vsyncpa [#allocation3], 0
    %s11 = scalar_lea.sflag [#allocation3], 1
    %12 = vsyncpa %s11, 0
    %13 = vsyncpa [#allocation6], 0
    %s14 = scalar_lea.sflag [#allocation6], 1
    %15 = vsyncpa %s14, 0
    %16 = vsyncpa [#allocation9], 0
    %17 = vsyncpa [#allocation4], 0
    %s18 = scalar_lea.sflag [#allocation4], 1
    %19 = vsyncpa %s18, 0
    loop: start=0, step=1, limit=4
    $region2: #{tpu_custom_call.1} parent=1 // loop_pre_header
      _
    $region3: #{tpu_custom_call.1} parent=1 // loop_header
      %s21 = sphi 0, %s25
      %p22 = scmp.ge.s32.totalorder %s21, 4
      %s31 = sphi 0, %s33
      %s34 = sphi 0, %s31
      %s35 = sphi 0, %s34
      %s51 = sphi 0, %s35
      %s57 = sphi 0, %s59
      %s60 = sphi 0, %s57
      %s61 = sphi 0, %s60
      %s77 = sphi 0, %s61
      %s81 = sphi 0, %s81
      %s83 = sphi 0, %s81
      %s84 = sphi 0, %s83
      %s98 = sphi 0, %s84
      %s102 = sphi 0, %s102
      %s104 = sphi 0, %s102
      %s105 = sphi 0, %s104
      %s119 = sphi 0, %s105
      %s123 = sphi 0, %s123
      %s125 = sphi 0, %s123
      %s126 = sphi 0, %s125
      %s140 = sphi 0, %s126
      %s146 = sphi 0, %s148
      %s149 = sphi 0, %s146
      %s150 = sphi 0, %s149
      %s166 = sphi 0, %s150
    $region4: #{tpu_custom_call.1} parent=1 // loop_header_branch
      %24 = sbr.rel (%p22) target = $region8
    $region5: #{tpu_custom_call.1} parent=1 // loop_body
      %s26 = ssub.s32 %s21, 1
      %s27 = ssub.s32 %s21, 2
      %s28 = sadd.s32 %s21, 1
      %s29 = ssub.s32 %s21, %s28
      %p30 = scmp.eq.s32.totalorder %s29, 0
      %s32 = sadd.s32 %s31, 1
      %s33 = scalar_select %p30, %s31, %s32
      %p36 = pneg %p30
      %p37 = scmp.eq.s32.totalorder %s21, 1
      %p38 = por %p36, %p37
      %p39 = scmp.ne.s32.totalorder %s31, %s34
      %p40 = scmp.eq.s32.totalorder %s21, 0
      %p41 = por %p39, %p40
      %p42 = scmp.ne.s32.totalorder %s31, %s34
      %p43 = scmp.eq.s32.totalorder %s26, 1
      %p44 = por %p42, %p43
      %p45 = scmp.ne.s32.totalorder %s34, %s35
      %p46 = scmp.eq.s32.totalorder %s26, 0
      %p47 = por %p45, %p46
      %p48 = scmp.ne.s32.totalorder %s34, %s35
      %p49 = scmp.eq.s32.totalorder %s27, 1
      %p50 = por %p48, %p49
      %p52 = scmp.ne.s32.totalorder %s35, %s51
      %p53 = scmp.eq.s32.totalorder %s27, 0
      %p54 = por %p52, %p53
      %s55 = ssub.s32 %s21, %s28
      %p56 = scmp.eq.s32.totalorder %s55, 0
      %s58 = sadd.s32 %s57, 1
      %s59 = scalar_select %p56, %s57, %s58
      %p62 = pneg %p56
      %p63 = scmp.eq.s32.totalorder %s21, 1
      %p64 = por %p62, %p63
      %p65 = scmp.ne.s32.totalorder %s57, %s60
      %p66 = scmp.eq.s32.totalorder %s21, 0
      %p67 = por %p65, %p66
      %p68 = scmp.ne.s32.totalorder %s57, %s60
      %p69 = scmp.eq.s32.totalorder %s26, 1
      %p70 = por %p68, %p69
      %p71 = scmp.ne.s32.totalorder %s60, %s61
      %p72 = scmp.eq.s32.totalorder %s26, 0
      %p73 = por %p71, %p72
      %p74 = scmp.ne.s32.totalorder %s60, %s61
      %p75 = scmp.eq.s32.totalorder %s27, 1
      %p76 = por %p74, %p75
      %p78 = scmp.ne.s32.totalorder %s61, %s77
      %p79 = scmp.eq.s32.totalorder %s27, 0
      %p80 = por %p78, %p79
      %s82 = sadd.s32 %s81, 1
      %p85 = scmp.eq.s32.totalorder %s21, 1
      %p86 = scmp.ne.s32.totalorder %s81, %s83
      %p87 = scmp.eq.s32.totalorder %s21, 0
      %p88 = por %p86, %p87
      %p89 = scmp.ne.s32.totalorder %s81, %s83
      %p90 = scmp.eq.s32.totalorder %s26, 1
      %p91 = por %p89, %p90
      %p92 = scmp.ne.s32.totalorder %s83, %s84
      %p93 = scmp.eq.s32.totalorder %s26, 0
      %p94 = por %p92, %p93
      %p95 = scmp.ne.s32.totalorder %s83, %s84
      %p96 = scmp.eq.s32.totalorder %s27, 1
      %p97 = por %p95, %p96
      %p99 = scmp.ne.s32.totalorder %s84, %s98
      %p100 = scmp.eq.s32.totalorder %s27, 0
      %p101 = por %p99, %p100
      %s103 = sadd.s32 %s102, 1
      %p106 = scmp.eq.s32.totalorder %s21, 1
      %p107 = scmp.ne.s32.totalorder %s102, %s104
      %p108 = scmp.eq.s32.totalorder %s21, 0
      %p109 = por %p107, %p108
      %p110 = scmp.ne.s32.totalorder %s102, %s104
      %p111 = scmp.eq.s32.totalorder %s26, 1
      %p112 = por %p110, %p111
      %p113 = scmp.ne.s32.totalorder %s104, %s105
      %p114 = scmp.eq.s32.totalorder %s26, 0
      %p115 = por %p113, %p114
      %p116 = scmp.ne.s32.totalorder %s104, %s105
      %p117 = scmp.eq.s32.totalorder %s27, 1
      %p118 = por %p116, %p117
      %p120 = scmp.ne.s32.totalorder %s105, %s119
      %p121 = scmp.eq.s32.totalorder %s27, 0
      %p122 = por %p120, %p121
      %s124 = sadd.s32 %s123, 1
      %p127 = scmp.eq.s32.totalorder %s21, 1
      %p128 = scmp.ne.s32.totalorder %s123, %s125
      %p129 = scmp.eq.s32.totalorder %s21, 0
      %p130 = por %p128, %p129
      %p131 = scmp.ne.s32.totalorder %s123, %s125
      %p132 = scmp.eq.s32.totalorder %s26, 1
      %p133 = por %p131, %p132
      %p134 = scmp.ne.s32.totalorder %s125, %s126
      %p135 = scmp.eq.s32.totalorder %s26, 0
      %p136 = por %p134, %p135
      %p137 = scmp.ne.s32.totalorder %s125, %s126
      %p138 = scmp.eq.s32.totalorder %s27, 1
      %p139 = por %p137, %p138
      %p141 = scmp.ne.s32.totalorder %s126, %s140
      %p142 = scmp.eq.s32.totalorder %s27, 0
      %p143 = por %p141, %p142
      %s144 = ssub.s32 %s21, %s28
      %p145 = scmp.eq.s32.totalorder %s144, 0
      %s147 = sadd.s32 %s146, 1
      %s148 = scalar_select %p145, %s146, %s147
      %p151 = pneg %p145
      %p152 = scmp.eq.s32.totalorder %s21, 1
      %p153 = por %p151, %p152
      %p154 = scmp.ne.s32.totalorder %s146, %s149
      %p155 = scmp.eq.s32.totalorder %s21, 0
      %p156 = por %p154, %p155
      %p157 = scmp.ne.s32.totalorder %s146, %s149
      %p158 = scmp.eq.s32.totalorder %s26, 1
      %p159 = por %p157, %p158
      %p160 = scmp.ne.s32.totalorder %s149, %s150
      %p161 = scmp.eq.s32.totalorder %s26, 0
      %p162 = por %p160, %p161
      %p163 = scmp.ne.s32.totalorder %s149, %s150
      %p164 = scmp.eq.s32.totalorder %s27, 1
      %p165 = por %p163, %p164
      %p167 = scmp.ne.s32.totalorder %s150, %s166
      %p168 = scmp.eq.s32.totalorder %s27, 0
      %p169 = por %p167, %p168
      %p170 = scmp.le.s32.totalorder 1, %s21
      %p171 = scmp.lt.s32.totalorder %s21, 3
      %p172 = pnand %p170, %p171
      %p173 = pneg %p172
      // Predicated region
      $region9: #{tpu_custom_call.1} parent=5 // pred_check
        _
      $region10: #{tpu_custom_call.1} parent=5 // pred_check_branch
        %175 = sbr.rel (%p172) target = $region12
      $region11: #{tpu_custom_call.1} parent=5 // pred_region
        %s176 = ssub.s32 %s21, 1
        // Predicated region
        $region13: #{tpu_custom_call.1} parent=11 // pred_check
          %p177 = pneg %p94
        $region14: #{tpu_custom_call.1} parent=11 // pred_check_branch
          %179 = sbr.rel (%p177) target = $region16
        $region15: #{tpu_custom_call.1} parent=11 // pred_region
          %s181 = ssub.s32 2048, 2048
          %182 = vsyncadd [#allocation6], %s181
          %s183 = sshll.u32 [#allocation7], 4
          %s184 = int_to_ptr.vmem [resolvable:$true] %s183
          %189 = dma.hbm_to_vmem [thread:$0]  %s2, 2048, %s184, [#allocation6], 128, 128, 8
        $region16: #{tpu_custom_call.1} parent=11 // pred_fallthru
          _
        // Predicated region
        $region17: #{tpu_custom_call.1} parent=11 // pred_check
          %p190 = pneg %p115
        $region18: #{tpu_custom_call.1} parent=11 // pred_check_branch
          %192 = sbr.rel (%p190) target = $region20
        $region19: #{tpu_custom_call.1} parent=11 // pred_region
          %s194 = ssub.s32 4096, 4096
          %195 = vsyncadd [#allocation9], %s194
          %s196 = sshll.u32 [#allocation8], 4
          %s197 = int_to_ptr.vmem [resolvable:$true] %s196
          %202 = dma.hbm_to_vmem [thread:$0]  %s3, 4096, %s197, [#allocation9], 256, 256, 16
        $region20: #{tpu_custom_call.1} parent=11 // pred_fallthru
          _
        // Predicated region
        $region21: #{tpu_custom_call.1} parent=11 // pred_check
          %p203 = pneg %p136
        $region22: #{tpu_custom_call.1} parent=11 // pred_check_branch
          %205 = sbr.rel (%p203) target = $region24
        $region23: #{tpu_custom_call.1} parent=11 // pred_region
          %s207 = ssub.s32 2048, 2048
          %208 = vsyncadd [#allocation9], %s207
          %s209 = sshll.u32 [#allocation10], 4
          %s210 = int_to_ptr.vmem [resolvable:$true] %s209
          %215 = dma.hbm_to_vmem [thread:$0]  %s4, 2048, %s210, [#allocation9], 64, 64, 4
        $region24: #{tpu_custom_call.1} parent=11 // pred_fallthru
          _
      $region12: #{tpu_custom_call.1} parent=5 // pred_fallthru
        _
      %p216 = scmp.lt.s32.totalorder %s21, 2
      // Predicated region
      $region25: #{tpu_custom_call.1} parent=5 // pred_check
        %p217 = pneg %p216
      $region26: #{tpu_custom_call.1} parent=5 // pred_check_branch
        %219 = sbr.rel (%p217) target = $region28
      $region27: #{tpu_custom_call.1} parent=5 // pred_region
        // Predicated region
        $region29: #{tpu_custom_call.1} parent=27 // pred_check
          %p220 = pneg %p41
        $region30: #{tpu_custom_call.1} parent=27 // pred_check_branch
          %222 = sbr.rel (%p220) target = $region32
        $region31: #{tpu_custom_call.1} parent=27 // pred_region
          %s223 = sand.u32 %s31, 1
          %s224 = scalar_lea.sflag [#allocation3], %s223
          %s225 = sand.u32 %s31, 1
          %s226 = smul.addr %s225, 64
          %s227 = scalar_lea.vmem [#allocation2], %s226
          %s229 = ssub.s32 1024, 1024
          %230 = vsyncadd %s224, %s229
          %s231 = smul.addr %s21, 16
          %s232 = smul.addr %s231, 64
          %s233 = scalar_lea.hbm %s0, %s232
          %s234 = sshll.u32 %s227, 4
          %s235 = int_to_ptr.vmem [resolvable:$true] %s234
          %240 = dma.hbm_to_vmem [thread:$0]  %s233, 1024, %s235, %s224, 64, 64, 4
        $region32: #{tpu_custom_call.1} parent=27 // pred_fallthru
          _
        // Predicated region
        $region33: #{tpu_custom_call.1} parent=27 // pred_check
          %p241 = pneg %p67
        $region34: #{tpu_custom_call.1} parent=27 // pred_check_branch
          %243 = sbr.rel (%p241) target = $region36
        $region35: #{tpu_custom_call.1} parent=27 // pred_region
          %s244 = sand.u32 %s21, 1
          %s245 = scalar_lea.sflag [#allocation6], %s244
          %s246 = sand.u32 %s57, 1
          %s247 = smul.addr %s246, 64
          %s248 = scalar_lea.vmem [#allocation5], %s247
          %s250 = ssub.s32 1024, 1024
          %251 = vsyncadd %s245, %s250
          %s252 = smul.addr %s21, 16
          %s253 = smul.addr %s252, 64
          %s254 = scalar_lea.hbm %s1, %s253
          %s255 = sshll.u32 %s248, 4
          %s256 = int_to_ptr.vmem [resolvable:$true] %s255
          %261 = dma.hbm_to_vmem [thread:$0]  %s254, 1024, %s256, %s245, 64, 64, 4
        $region36: #{tpu_custom_call.1} parent=27 // pred_fallthru
          _
      $region28: #{tpu_custom_call.1} parent=5 // pred_fallthru
        _
      %p262 = scmp.le.s32.totalorder 1, %s21
      %p263 = scmp.lt.s32.totalorder %s21, 3
      %p264 = pnand %p262, %p263
      %p265 = pneg %p264
      // Predicated region
      $region37: #{tpu_custom_call.1} parent=5 // pred_check
        _
      $region38: #{tpu_custom_call.1} parent=5 // pred_check_branch
        %267 = sbr.rel (%p264) target = $region40
      $region39: #{tpu_custom_call.1} parent=5 // pred_region
        %s268 = ssub.s32 %s21, 1
        %s269 = sand.u32 %s34, 1
        %s270 = scalar_lea.sflag [#allocation3], %s269
        %s271 = sand.u32 %s34, 1
        %s272 = smul.addr %s271, 64
        %s273 = scalar_lea.vmem [#allocation2], %s272
        // Predicated region
        $region41: #{tpu_custom_call.1} parent=39 // pred_check
          %p274 = pneg %p47
        $region42: #{tpu_custom_call.1} parent=39 // pred_check_branch
          %276 = sbr.rel (%p274) target = $region44
        $region43: #{tpu_custom_call.1} parent=39 // pred_region
          %277 = dma.done %s270, 1024
        $region44: #{tpu_custom_call.1} parent=39 // pred_fallthru
          _
        %s278 = sand.u32 %s26, 1
        %s279 = scalar_lea.sflag [#allocation6], %s278
        %s280 = sand.u32 %s60, 1
        %s281 = smul.addr %s280, 64
        %s282 = scalar_lea.vmem [#allocation5], %s281
        // Predicated region
        $region45: #{tpu_custom_call.1} parent=39 // pred_check
          %p283 = pneg %p73
        $region46: #{tpu_custom_call.1} parent=39 // pred_check_branch
          %285 = sbr.rel (%p283) target = $region48
        $region47: #{tpu_custom_call.1} parent=39 // pred_region
          %286 = dma.done %s279, 1024
        $region48: #{tpu_custom_call.1} parent=39 // pred_fallthru
          _
        // Predicated region
        $region49: #{tpu_custom_call.1} parent=39 // pred_check
          %p287 = pneg %p94
        $region50: #{tpu_custom_call.1} parent=39 // pred_check_branch
          %289 = sbr.rel (%p287) target = $region52
        $region51: #{tpu_custom_call.1} parent=39 // pred_region
          %290 = dma.done [#allocation6], 2048
        $region52: #{tpu_custom_call.1} parent=39 // pred_fallthru
          _
        // Predicated region
        $region53: #{tpu_custom_call.1} parent=39 // pred_check
          %p291 = pneg %p115
        $region54: #{tpu_custom_call.1} parent=39 // pred_check_branch
          %293 = sbr.rel (%p291) target = $region56
        $region55: #{tpu_custom_call.1} parent=39 // pred_region
          %294 = dma.done [#allocation9], 4096
        $region56: #{tpu_custom_call.1} parent=39 // pred_fallthru
          _
        // Predicated region
        $region57: #{tpu_custom_call.1} parent=39 // pred_check
          %p295 = pneg %p136
        $region58: #{tpu_custom_call.1} parent=39 // pred_check_branch
          %297 = sbr.rel (%p295) target = $region60
        $region59: #{tpu_custom_call.1} parent=39 // pred_region
          %298 = dma.done [#allocation9], 2048
        $region60: #{tpu_custom_call.1} parent=39 // pred_fallthru
          _
        %s299 = sand.u32 %s34, 1
        %s300 = scalar_lea.sflag [#allocation3], %s299
        %s301 = sand.u32 %s34, 1
        %s302 = smul.addr %s301, 64
        %s303 = scalar_lea.vmem [#allocation2], %s302
        %p304 = pneg %p47
        %p305 = pneg %p44
        %s306 = sand.u32 %s26, 1
        %s307 = scalar_lea.sflag [#allocation6], %s306
        %s308 = sand.u32 %s60, 1
        %s309 = smul.addr %s308, 64
        %s310 = scalar_lea.vmem [#allocation5], %s309
        %p311 = pneg %p73
        %p312 = pneg %p70
        %p313 = pneg %p94
        %p314 = pneg %p91
        %p315 = pneg %p115
        %p316 = pneg %p112
        %p317 = pneg %p136
        %p318 = pneg %p133
        %p319 = pneg %p162
        %p320 = pneg %p159
        %s321 = sand.u32 %s149, 1
        %s322 = scalar_lea.sflag [#allocation4], %s321
        %s323 = sand.u32 %s149, 1
        %s324 = smul.addr %s323, 64
        %s325 = scalar_lea.vmem [#allocation11], %s324
        %v327 = vld [vmem:[%s273] sm:$0xf]
        %v328 = vld [vmem:[%s273 + $0x4] sm:$0xf]
        %v329 = vld [vmem:[%s273 + $0x8] sm:$0xf]
        %v330 = vld [vmem:[%s273 + $0xc] sm:$0xf]
        %v331 = vld [vmem:[%s273 + $0x10] sm:$0xf]
        %v332 = vld [vmem:[%s273 + $0x14] sm:$0xf]
        %v333 = vld [vmem:[%s273 + $0x18] sm:$0xf]
        %v334 = vld [vmem:[%s273 + $0x1c] sm:$0xf]
        %v335 = vld [vmem:[%s273 + $0x20] sm:$0xf]
        %v336 = vld [vmem:[%s273 + $0x24] sm:$0xf]
        %v337 = vld [vmem:[%s273 + $0x28] sm:$0xf]
        %v338 = vld [vmem:[%s273 + $0x2c] sm:$0xf]
        %v339 = vld [vmem:[%s273 + $0x30] sm:$0xf]
        %v340 = vld [vmem:[%s273 + $0x34] sm:$0xf]
        %v341 = vld [vmem:[%s273 + $0x38] sm:$0xf]
        %v342 = vld [vmem:[%s273 + $0x3c] sm:$0xf]
        %v343 = vld [vmem:[%s282] sm:$0xf]
        %v344 = vld [vmem:[%s282 + $0x4] sm:$0xf]
        %v345 = vld [vmem:[%s282 + $0x8] sm:$0xf]
        %v346 = vld [vmem:[%s282 + $0xc] sm:$0xf]
        %v347 = vld [vmem:[%s282 + $0x10] sm:$0xf]
        %v348 = vld [vmem:[%s282 + $0x14] sm:$0xf]
        %v349 = vld [vmem:[%s282 + $0x18] sm:$0xf]
        %v350 = vld [vmem:[%s282 + $0x1c] sm:$0xf]
        %v351 = vld [vmem:[%s282 + $0x20] sm:$0xf]
        %v352 = vld [vmem:[%s282 + $0x24] sm:$0xf]
        %v353 = vld [vmem:[%s282 + $0x28] sm:$0xf]
        %v354 = vld [vmem:[%s282 + $0x2c] sm:$0xf]
        %v355 = vld [vmem:[%s282 + $0x30] sm:$0xf]
        %v356 = vld [vmem:[%s282 + $0x34] sm:$0xf]
        %v357 = vld [vmem:[%s282 + $0x38] sm:$0xf]
        %v358 = vld [vmem:[%s282 + $0x3c] sm:$0xf]
        %v359 = vld [vmem:[#allocation7] sm:$0xff]
        %v360 = vld [vmem:[#allocation7 + $0x8] sm:$0xff]
        %v361 = vld [vmem:[#allocation7 + $0x10] sm:$0xff]
        %v362 = vld [vmem:[#allocation7 + $0x18] sm:$0xff]
        %v363 = vld [vmem:[#allocation7 + $0x20] sm:$0xff]
        %v364 = vld [vmem:[#allocation7 + $0x28] sm:$0xff]
        %v365 = vld [vmem:[#allocation7 + $0x30] sm:$0xff]
        %v366 = vld [vmem:[#allocation7 + $0x38] sm:$0xff]
        %v367 = vld [vmem:[#allocation7 + $0x40] sm:$0xff]
        %v368 = vld [vmem:[#allocation7 + $0x48] sm:$0xff]
        %v369 = vld [vmem:[#allocation7 + $0x50] sm:$0xff]
        %v370 = vld [vmem:[#allocation7 + $0x58] sm:$0xff]
        %v371 = vld [vmem:[#allocation7 + $0x60] sm:$0xff]
        %v372 = vld [vmem:[#allocation7 + $0x68] sm:$0xff]
        %v373 = vld [vmem:[#allocation7 + $0x70] sm:$0xff]
        %v374 = vld [vmem:[#allocation7 + $0x78] sm:$0xff]
        %v391 = vunpack.c.l.b16 %v327
        %v392 = vunpack.c.l.b16 %v328
        %v393 = vunpack.c.l.b16 %v329
        %v394 = vunpack.c.l.b16 %v330
        %v395 = vunpack.c.l.b16 %v331
        %v396 = vunpack.c.l.b16 %v332
        %v397 = vunpack.c.l.b16 %v333
        %v398 = vunpack.c.l.b16 %v334
        %v399 = vunpack.c.l.b16 %v335
        %v400 = vunpack.c.l.b16 %v336
        %v401 = vunpack.c.l.b16 %v337
        %v402 = vunpack.c.l.b16 %v338
        %v403 = vunpack.c.l.b16 %v339
        %v404 = vunpack.c.l.b16 %v340
        %v405 = vunpack.c.l.b16 %v341
        %v406 = vunpack.c.l.b16 %v342
        %v407 = vpack.c.b16 %v392, %v391
        %v408 = vpack.c.b16 %v394, %v393
        %v409 = vpack.c.b16 %v396, %v395
        %v410 = vpack.c.b16 %v398, %v397
        %v411 = vpack.c.b16 %v400, %v399
        %v412 = vpack.c.b16 %v402, %v401
        %v413 = vpack.c.b16 %v404, %v403
        %v414 = vpack.c.b16 %v406, %v405
        %v439 = vunpack.c.l.b16 %v359
        %v440 = vunpack.c.h.b16 %v359
        %v441 = vunpack.c.l.b16 %v360
        %v442 = vunpack.c.h.b16 %v360
        %v443 = vunpack.c.l.b16 %v361
        %v444 = vunpack.c.h.b16 %v361
        %v445 = vunpack.c.l.b16 %v362
        %v446 = vunpack.c.h.b16 %v362
        %v447 = vunpack.c.l.b16 %v363
        %v448 = vunpack.c.h.b16 %v363
        %v449 = vunpack.c.l.b16 %v364
        %v450 = vunpack.c.h.b16 %v364
        %v451 = vunpack.c.l.b16 %v365
        %v452 = vunpack.c.h.b16 %v365
        %v453 = vunpack.c.l.b16 %v366
        %v454 = vunpack.c.h.b16 %v366
        %v455 = vunpack.c.l.b16 %v367
        %v456 = vunpack.c.h.b16 %v367
        %v457 = vunpack.c.l.b16 %v368
        %v458 = vunpack.c.h.b16 %v368
        %v459 = vunpack.c.l.b16 %v369
        %v460 = vunpack.c.h.b16 %v369
        %v461 = vunpack.c.l.b16 %v370
        %v462 = vunpack.c.h.b16 %v370
        %v463 = vunpack.c.l.b16 %v371
        %v464 = vunpack.c.h.b16 %v371
        %v465 = vunpack.c.l.b16 %v372
        %v466 = vunpack.c.h.b16 %v372
        %v467 = vunpack.c.l.b16 %v373
        %v468 = vunpack.c.h.b16 %v373
        %v469 = vunpack.c.l.b16 %v374
        %v470 = vunpack.c.h.b16 %v374
        %v471 = vpack.c.b16 %v441, %v439
        %v472 = vpack.c.b16 %v442, %v440
        %v473 = vpack.c.b16 %v445, %v443
        %v474 = vpack.c.b16 %v446, %v444
        %v475 = vpack.c.b16 %v449, %v447
        %v476 = vpack.c.b16 %v450, %v448
        %v477 = vpack.c.b16 %v453, %v451
        %v478 = vpack.c.b16 %v454, %v452
        %v479 = vpack.c.b16 %v457, %v455
        %v480 = vpack.c.b16 %v458, %v456
        %v481 = vpack.c.b16 %v461, %v459
        %v482 = vpack.c.b16 %v462, %v460
        %v483 = vpack.c.b16 %v465, %v463
        %v484 = vpack.c.b16 %v466, %v464
        %v485 = vpack.c.b16 %v469, %v467
        %v486 = vpack.c.b16 %v470, %v468
        %503 = vmatprep.subr.bf16.mxu0 %v472
        %504 = vmatpush1.bf16.msra.mxu0 %v471
        %505 = vmatprep.subr.bf16.mxu0 %v474
        %506 = vmatpush1.bf16.msra.mxu0 %v473
        %507 = vmatprep.subr.bf16.mxu0 %v476
        %508 = vmatpush1.bf16.msra.mxu0 %v475
        %509 = vmatprep.subr.bf16.mxu0 %v478
        %510 = vmatpush1.bf16.msra.mxu0 %v477
        %511 = vmatprep.subr.bf16.mxu0 %v480
        %512 = vmatpush1.bf16.msra.mxu0 %v479
        %513 = vmatprep.subr.bf16.mxu0 %v482
        %514 = vmatpush1.bf16.msra.mxu0 %v481
        %515 = vmatprep.subr.bf16.mxu0 %v484
        %516 = vmatpush1.bf16.msra.mxu0 %v483
        %517 = vmatprep.subr.bf16.mxu0 %v486
        %518 = vmatpush1.bf16.msra.mxu0 %v485
        %519 = vmatprep.subr.bf16.mxu0 0
        %520 = vmatpush1.bf16.msra.mxu0 0
        %521 = vmatprep.subr.bf16.mxu0 0
        %522 = vmatpush1.bf16.msra.mxu0 0
        %523 = vmatprep.subr.bf16.mxu0 0
        %524 = vmatpush1.bf16.msra.mxu0 0
        %525 = vmatprep.subr.bf16.mxu0 0
        %526 = vmatpush1.bf16.msra.mxu0 0
        %527 = vmatprep.subr.bf16.mxu0 0
        %528 = vmatpush1.bf16.msra.mxu0 0
        %529 = vmatprep.subr.bf16.mxu0 0
        %530 = vmatpush1.bf16.msra.mxu0 0
        %531 = vmatprep.subr.bf16.mxu0 0
        %532 = vmatpush1.bf16.msra.mxu0 0
        %533 = vmatprep.subr.bf16.mxu0 0
        %534 = vmatpush1.bf16.msra.mxu0 0
        %535 = vmatprep.mubr.bf16.mxu0 0
        %536 = vmatmul.mubr.bf16.gmra.mrb[0].mxu0 %v407
        %v537 = vpop.f32.mrb[0].mxu0
        %v538 = vadd.f32 0.0, %v537
        %v539 = vpop.f32.mrb[0].mxu0
        %v540 = vadd.f32 0.0, %v539
        %v541 = vpop.f32.mrb[0].mxu0
        %v542 = vadd.f32 0.0, %v541
        %v543 = vpop.f32.mrb[0].mxu0
        %v544 = vadd.f32 0.0, %v543
        %545 = vmatprep.mubr.bf16.mxu0 0
        %546 = vmatmul.mubr.bf16.gmra.mrb[0].mxu0 %v408
        %v547 = vpop.f32.mrb[0].mxu0
        %v548 = vadd.f32 0.0, %v547
        %v549 = vpop.f32.mrb[0].mxu0
        %v550 = vadd.f32 0.0, %v549
        %v551 = vpop.f32.mrb[0].mxu0
        %v552 = vadd.f32 0.0, %v551
        %v553 = vpop.f32.mrb[0].mxu0
        %v554 = vadd.f32 0.0, %v553
        %555 = vmatprep.mubr.bf16.mxu0 0
        %556 = vmatmul.mubr.bf16.gmra.mrb[0].mxu0 %v409
        %v557 = vpop.f32.mrb[0].mxu0
        %v558 = vadd.f32 0.0, %v557
        %v559 = vpop.f32.mrb[0].mxu0
        %v560 = vadd.f32 0.0, %v559
        %v561 = vpop.f32.mrb[0].mxu0
        %v562 = vadd.f32 0.0, %v561
        %v563 = vpop.f32.mrb[0].mxu0
        %v564 = vadd.f32 0.0, %v563
        %565 = vmatprep.mubr.bf16.mxu0 0
        %566 = vmatmul.mubr.bf16.gmra.mrb[0].mxu0 %v410
        %v567 = vpop.f32.mrb[0].mxu0
        %v568 = vadd.f32 0.0, %v567
        %v569 = vpop.f32.mrb[0].mxu0
        %v570 = vadd.f32 0.0, %v569
        %v571 = vpop.f32.mrb[0].mxu0
        %v572 = vadd.f32 0.0, %v571
        %v573 = vpop.f32.mrb[0].mxu0
        %v574 = vadd.f32 0.0, %v573
        %575 = vmatprep.mubr.bf16.mxu0 0
        %576 = vmatmul.mubr.bf16.gmra.mrb[0].mxu0 %v411
        %v577 = vpop.f32.mrb[0].mxu0
        %v578 = vadd.f32 0.0, %v577
        %v579 = vpop.f32.mrb[0].mxu0
        %v580 = vadd.f32 0.0, %v579
        %v581 = vpop.f32.mrb[0].mxu0
        %v582 = vadd.f32 0.0, %v581
        %v583 = vpop.f32.mrb[0].mxu0
        %v584 = vadd.f32 0.0, %v583
        %585 = vmatprep.mubr.bf16.mxu0 0
        %586 = vmatmul.mubr.bf16.gmra.mrb[0].mxu0 %v412
        %v587 = vpop.f32.mrb[0].mxu0
        %v588 = vadd.f32 0.0, %v587
        %v589 = vpop.f32.mrb[0].mxu0
        %v590 = vadd.f32 0.0, %v589
        %v591 = vpop.f32.mrb[0].mxu0
        %v592 = vadd.f32 0.0, %v591
        %v593 = vpop.f32.mrb[0].mxu0
        %v594 = vadd.f32 0.0, %v593
        %595 = vmatprep.mubr.bf16.mxu0 0
        %596 = vmatmul.mubr.bf16.gmra.mrb[0].mxu0 %v413
        %v597 = vpop.f32.mrb[0].mxu0
        %v598 = vadd.f32 0.0, %v597
        %v599 = vpop.f32.mrb[0].mxu0
        %v600 = vadd.f32 0.0, %v599
        %v601 = vpop.f32.mrb[0].mxu0
        %v602 = vadd.f32 0.0, %v601
        %v603 = vpop.f32.mrb[0].mxu0
        %v604 = vadd.f32 0.0, %v603
        %605 = vmatprep.mubr.bf16.mxu0 0
        %606 = vmatmul.mubr.bf16.gmra.mrb[0].mxu0 %v414
        %v607 = vpop.f32.mrb[0].mxu0
        %v608 = vadd.f32 0.0, %v607
        %v609 = vpop.f32.mrb[0].mxu0
        %v610 = vadd.f32 0.0, %v609
        %v611 = vpop.f32.mrb[0].mxu0
        %v612 = vadd.f32 0.0, %v611
        %v613 = vpop.f32.mrb[0].mxu0
        %v614 = vadd.f32 0.0, %v613
        %615 = vdwg.mxu0
        %v616 = vmul.f32 %v538, 0.125
        %v617 = vmul.f32 %v540, 0.125
        %v618 = vmul.f32 %v542, 0.125
        %v619 = vmul.f32 %v544, 0.125
        %v620 = vmul.f32 %v548, 0.125
        %v621 = vmul.f32 %v550, 0.125
        %v622 = vmul.f32 %v552, 0.125
        %v623 = vmul.f32 %v554, 0.125
        %v624 = vmul.f32 %v558, 0.125
        %v625 = vmul.f32 %v560, 0.125
        %v626 = vmul.f32 %v562, 0.125
        %v627 = vmul.f32 %v564, 0.125
        %v628 = vmul.f32 %v568, 0.125
        %v629 = vmul.f32 %v570, 0.125
        %v630 = vmul.f32 %v572, 0.125
        %v631 = vmul.f32 %v574, 0.125
        %v632 = vmul.f32 %v578, 0.125
        %v633 = vmul.f32 %v580, 0.125
        %v634 = vmul.f32 %v582, 0.125
        %v635 = vmul.f32 %v584, 0.125
        %v636 = vmul.f32 %v588, 0.125
        %v637 = vmul.f32 %v590, 0.125
        %v638 = vmul.f32 %v592, 0.125
        %v639 = vmul.f32 %v594, 0.125
        %v640 = vmul.f32 %v598, 0.125
        %v641 = vmul.f32 %v600, 0.125
        %v642 = vmul.f32 %v602, 0.125
        %v643 = vmul.f32 %v604, 0.125
        %v644 = vmul.f32 %v608, 0.125
        %v645 = vmul.f32 %v610, 0.125
        %v646 = vmul.f32 %v612, 0.125
        %v647 = vmul.f32 %v614, 0.125
        %v648 = vpack.c.bf16 %v618, %v616
        %v649 = vpack.c.bf16 %v619, %v617
        %v650 = vpack.c.bf16 %v622, %v620
        %v651 = vpack.c.bf16 %v623, %v621
        %v652 = vpack.c.bf16 %v626, %v624
        %v653 = vpack.c.bf16 %v627, %v625
        %v654 = vpack.c.bf16 %v630, %v628
        %v655 = vpack.c.bf16 %v631, %v629
        %v656 = vpack.c.bf16 %v634, %v632
        %v657 = vpack.c.bf16 %v635, %v633
        %v658 = vpack.c.bf16 %v638, %v636
        %v659 = vpack.c.bf16 %v639, %v637
        %v660 = vpack.c.bf16 %v642, %v640
        %v661 = vpack.c.bf16 %v643, %v641
        %v662 = vpack.c.bf16 %v646, %v644
        %v663 = vpack.c.bf16 %v647, %v645
        %v664 = vld [vmem:[#allocation8] sm:$0xff]
        %v665 = vld [vmem:[#allocation8 + $0x8] sm:$0xff]
        %v666 = vld [vmem:[#allocation8 + $0x10] sm:$0xff]
        %v667 = vld [vmem:[#allocation8 + $0x18] sm:$0xff]
        %v668 = vld [vmem:[#allocation8 + $0x20] sm:$0xff]
        %v669 = vld [vmem:[#allocation8 + $0x28] sm:$0xff]
        %v670 = vld [vmem:[#allocation8 + $0x30] sm:$0xff]
        %v671 = vld [vmem:[#allocation8 + $0x38] sm:$0xff]
        %v672 = vld [vmem:[#allocation8 + $0x40] sm:$0xff]
        %v673 = vld [vmem:[#allocation8 + $0x48] sm:$0xff]
        %v674 = vld [vmem:[#allocation8 + $0x50] sm:$0xff]
        %v675 = vld [vmem:[#allocation8 + $0x58] sm:$0xff]
        %v676 = vld [vmem:[#allocation8 + $0x60] sm:$0xff]
        %v677 = vld [vmem:[#allocation8 + $0x68] sm:$0xff]
        %v678 = vld [vmem:[#allocation8 + $0x70] sm:$0xff]
        %v679 = vld [vmem:[#allocation8 + $0x78] sm:$0xff]
        %v680 = vld [vmem:[#allocation8 + $0x80] sm:$0xff]
        %v681 = vld [vmem:[#allocation8 + $0x88] sm:$0xff]
        %v682 = vld [vmem:[#allocation8 + $0x90] sm:$0xff]
        %v683 = vld [vmem:[#allocation8 + $0x98] sm:$0xff]
        %v684 = vld [vmem:[#allocation8 + $0xa0] sm:$0xff]
        %v685 = vld [vmem:[#allocation8 + $0xa8] sm:$0xff]
        %v686 = vld [vmem:[#allocation8 + $0xb0] sm:$0xff]
        %v687 = vld [vmem:[#allocation8 + $0xb8] sm:$0xff]
        %v688 = vld [vmem:[#allocation8 + $0xc0] sm:$0xff]
        %v689 = vld [vmem:[#allocation8 + $0xc8] sm:$0xff]
        %v690 = vld [vmem:[#allocation8 + $0xd0] sm:$0xff]
        %v691 = vld [vmem:[#allocation8 + $0xd8] sm:$0xff]
        %v692 = vld [vmem:[#allocation8 + $0xe0] sm:$0xff]
        %v693 = vld [vmem:[#allocation8 + $0xe8] sm:$0xff]
        %v694 = vld [vmem:[#allocation8 + $0xf0] sm:$0xff]
        %v695 = vld [vmem:[#allocation8 + $0xf8] sm:$0xff]
        %v712 = vunpack.c.l.b16 %v343
        %v713 = vunpack.c.l.b16 %v344
        %v714 = vunpack.c.l.b16 %v345
        %v715 = vunpack.c.l.b16 %v346
        %v716 = vunpack.c.l.b16 %v347
        %v717 = vunpack.c.l.b16 %v348
        %v718 = vunpack.c.l.b16 %v349
        %v719 = vunpack.c.l.b16 %v350
        %v720 = vunpack.c.l.b16 %v351
        %v721 = vunpack.c.l.b16 %v352
        %v722 = vunpack.c.l.b16 %v353
        %v723 = vunpack.c.l.b16 %v354
        %v724 = vunpack.c.l.b16 %v355
        %v725 = vunpack.c.l.b16 %v356
        %v726 = vunpack.c.l.b16 %v357
        %v727 = vunpack.c.l.b16 %v358
        %v728 = vpack.c.b16 %v713, %v712
        %v729 = vpack.c.b16 %v715, %v714
        %v730 = vpack.c.b16 %v717, %v716
        %v731 = vpack.c.b16 %v719, %v718
        %v732 = vpack.c.b16 %v721, %v720
        %v733 = vpack.c.b16 %v723, %v722
        %v734 = vpack.c.b16 %v725, %v724
        %v735 = vpack.c.b16 %v727, %v726
        %v776 = vunpack.c.l.b16 %v664
        %v777 = vunpack.c.h.b16 %v664
        %v778 = vunpack.c.l.b16 %v665
        %v779 = vunpack.c.h.b16 %v665
        %v780 = vunpack.c.l.b16 %v666
        %v781 = vunpack.c.h.b16 %v666
        %v782 = vunpack.c.l.b16 %v667
        %v783 = vunpack.c.h.b16 %v667
        %v784 = vunpack.c.l.b16 %v668
        %v785 = vunpack.c.h.b16 %v668
        %v786 = vunpack.c.l.b16 %v669
        %v787 = vunpack.c.h.b16 %v669
        %v788 = vunpack.c.l.b16 %v670
        %v789 = vunpack.c.h.b16 %v670
        %v790 = vunpack.c.l.b16 %v671
        %v791 = vunpack.c.h.b16 %v671
        %v792 = vunpack.c.l.b16 %v672
        %v793 = vunpack.c.h.b16 %v672
        %v794 = vunpack.c.l.b16 %v673
        %v795 = vunpack.c.h.b16 %v673
        %v796 = vunpack.c.l.b16 %v674
        %v797 = vunpack.c.h.b16 %v674
        %v798 = vunpack.c.l.b16 %v675
        %v799 = vunpack.c.h.b16 %v675
        %v800 = vunpack.c.l.b16 %v676
        %v801 = vunpack.c.h.b16 %v676
        %v802 = vunpack.c.l.b16 %v677
        %v803 = vunpack.c.h.b16 %v677
        %v804 = vunpack.c.l.b16 %v678
        %v805 = vunpack.c.h.b16 %v678
        %v806 = vunpack.c.l.b16 %v679
        %v807 = vunpack.c.h.b16 %v679
        %v808 = vunpack.c.l.b16 %v680
        %v809 = vunpack.c.h.b16 %v680
        %v810 = vunpack.c.l.b16 %v681
        %v811 = vunpack.c.h.b16 %v681
        %v812 = vunpack.c.l.b16 %v682
        %v813 = vunpack.c.h.b16 %v682
        %v814 = vunpack.c.l.b16 %v683
        %v815 = vunpack.c.h.b16 %v683
        %v816 = vunpack.c.l.b16 %v684
        %v817 = vunpack.c.h.b16 %v684
        %v818 = vunpack.c.l.b16 %v685
        %v819 = vunpack.c.h.b16 %v685
        %v820 = vunpack.c.l.b16 %v686
        %v821 = vunpack.c.h.b16 %v686
        %v822 = vunpack.c.l.b16 %v687
        %v823 = vunpack.c.h.b16 %v687
        %v824 = vunpack.c.l.b16 %v688
        %v825 = vunpack.c.h.b16 %v688
        %v826 = vunpack.c.l.b16 %v689
        %v827 = vunpack.c.h.b16 %v689
        %v828 = vunpack.c.l.b16 %v690
        %v829 = vunpack.c.h.b16 %v690
        %v830 = vunpack.c.l.b16 %v691
        %v831 = vunpack.c.h.b16 %v691
        %v832 = vunpack.c.l.b16 %v692
        %v833 = vunpack.c.h.b16 %v692
        %v834 = vunpack.c.l.b16 %v693
        %v835 = vunpack.c.h.b16 %v693
        %v836 = vunpack.c.l.b16 %v694
        %v837 = vunpack.c.h.b16 %v694
        %v838 = vunpack.c.l.b16 %v695
        %v839 = vunpack.c.h.b16 %v695
        %v840 = vpack.c.b16 %v780, %v776
        %v841 = vpack.c.b16 %v781, %v777
        %v842 = vpack.c.b16 %v782, %v778
        %v843 = vpack.c.b16 %v783, %v779
        %v844 = vpack.c.b16 %v788, %v784
        %v845 = vpack.c.b16 %v789, %v785
        %v846 = vpack.c.b16 %v790, %v786
        %v847 = vpack.c.b16 %v791, %v787
        %v848 = vpack.c.b16 %v796, %v792
        %v849 = vpack.c.b16 %v797, %v793
        %v850 = vpack.c.b16 %v798, %v794
        %v851 = vpack.c.b16 %v799, %v795
        %v852 = vpack.c.b16 %v804, %v800
        %v853 = vpack.c.b16 %v805, %v801
        %v854 = vpack.c.b16 %v806, %v802
        %v855 = vpack.c.b16 %v807, %v803
        %v856 = vpack.c.b16 %v812, %v808
        %v857 = vpack.c.b16 %v813, %v809
        %v858 = vpack.c.b16 %v814, %v810
        %v859 = vpack.c.b16 %v815, %v811
        %v860 = vpack.c.b16 %v820, %v816
        %v861 = vpack.c.b16 %v821, %v817
        %v862 = vpack.c.b16 %v822, %v818
        %v863 = vpack.c.b16 %v823, %v819
        %v864 = vpack.c.b16 %v828, %v824
        %v865 = vpack.c.b16 %v829, %v825
        %v866 = vpack.c.b16 %v830, %v826
        %v867 = vpack.c.b16 %v831, %v827
        %v868 = vpack.c.b16 %v836, %v832
        %v869 = vpack.c.b16 %v837, %v833
        %v870 = vpack.c.b16 %v838, %v834
        %v871 = vpack.c.b16 %v839, %v835
        %904 = vmatprep.subr.bf16.mxu0 %v841
        %905 = vmatpush1.bf16.msra.mxu0 %v840
        %906 = vmatprep.subr.bf16.mxu0 %v845
        %907 = vmatpush1.bf16.msra.mxu0 %v844
        %908 = vmatprep.subr.bf16.mxu0 %v849
        %909 = vmatpush1.bf16.msra.mxu0 %v848
        %910 = vmatprep.subr.bf16.mxu0 %v853
        %911 = vmatpush1.bf16.msra.mxu0 %v852
        %912 = vmatprep.subr.bf16.mxu0 %v857
        %913 = vmatpush1.bf16.msra.mxu0 %v856
        %914 = vmatprep.subr.bf16.mxu0 %v861
        %915 = vmatpush1.bf16.msra.mxu0 %v860
        %916 = vmatprep.subr.bf16.mxu0 %v865
        %917 = vmatpush1.bf16.msra.mxu0 %v864
        %918 = vmatprep.subr.bf16.mxu0 %v869
        %919 = vmatpush1.bf16.msra.mxu0 %v868
        %920 = vmatprep.subr.bf16.mxu0 0
        %921 = vmatpush1.bf16.msra.mxu0 0
        %922 = vmatprep.subr.bf16.mxu0 0
        %923 = vmatpush1.bf16.msra.mxu0 0
        %924 = vmatprep.subr.bf16.mxu0 0
        %925 = vmatpush1.bf16.msra.mxu0 0
        %926 = vmatprep.subr.bf16.mxu0 0
        %927 = vmatpush1.bf16.msra.mxu0 0
        %928 = vmatprep.subr.bf16.mxu0 0
        %929 = vmatpush1.bf16.msra.mxu0 0
        %930 = vmatprep.subr.bf16.mxu0 0
        %931 = vmatpush1.bf16.msra.mxu0 0
        %932 = vmatprep.subr.bf16.mxu0 0
        %933 = vmatpush1.bf16.msra.mxu0 0
        %934 = vmatprep.subr.bf16.mxu0 0
        %935 = vmatpush1.bf16.msra.mxu0 0
        %936 = vmatprep.mubr.bf16.mxu0 0
        %937 = vmatmul.mubr.bf16.gmra.mrb[0].mxu0 %v728
        %v938 = vpop.f32.mrb[0].mxu0
        %v939 = vadd.f32 0.0, %v938
        %v940 = vpop.f32.mrb[0].mxu0
        %v941 = vadd.f32 0.0, %v940
        %v942 = vpop.f32.mrb[0].mxu0
        %v943 = vadd.f32 0.0, %v942
        %v944 = vpop.f32.mrb[0].mxu0
        %v945 = vadd.f32 0.0, %v944
        %946 = vmatprep.mubr.bf16.mxu0 0
        %947 = vmatmul.mubr.bf16.gmra.mrb[0].mxu0 %v729
        %v948 = vpop.f32.mrb[0].mxu0
        %v949 = vadd.f32 0.0, %v948
        %v950 = vpop.f32.mrb[0].mxu0
        %v951 = vadd.f32 0.0, %v950
        %v952 = vpop.f32.mrb[0].mxu0
        %v953 = vadd.f32 0.0, %v952
        %v954 = vpop.f32.mrb[0].mxu0
        %v955 = vadd.f32 0.0, %v954
        %956 = vmatprep.mubr.bf16.mxu0 0
        %957 = vmatmul.mubr.bf16.gmra.mrb[0].mxu0 %v730
        %v958 = vpop.f32.mrb[0].mxu0
        %v959 = vadd.f32 0.0, %v958
        %v960 = vpop.f32.mrb[0].mxu0
        %v961 = vadd.f32 0.0, %v960
        %v962 = vpop.f32.mrb[0].mxu0
        %v963 = vadd.f32 0.0, %v962
        %v964 = vpop.f32.mrb[0].mxu0
        %v965 = vadd.f32 0.0, %v964
        %966 = vmatprep.mubr.bf16.mxu0 0
        %967 = vmatmul.mubr.bf16.gmra.mrb[0].mxu0 %v731
        %v968 = vpop.f32.mrb[0].mxu0
        %v969 = vadd.f32 0.0, %v968
        %v970 = vpop.f32.mrb[0].mxu0
        %v971 = vadd.f32 0.0, %v970
        %v972 = vpop.f32.mrb[0].mxu0
        %v973 = vadd.f32 0.0, %v972
        %v974 = vpop.f32.mrb[0].mxu0
        %v975 = vadd.f32 0.0, %v974
        %976 = vmatprep.mubr.bf16.mxu0 0
        %977 = vmatmul.mubr.bf16.gmra.mrb[0].mxu0 %v732
        %v978 = vpop.f32.mrb[0].mxu0
        %v979 = vadd.f32 0.0, %v978
        %v980 = vpop.f32.mrb[0].mxu0
        %v981 = vadd.f32 0.0, %v980
        %v982 = vpop.f32.mrb[0].mxu0
        %v983 = vadd.f32 0.0, %v982
        %v984 = vpop.f32.mrb[0].mxu0
        %v985 = vadd.f32 0.0, %v984
        %986 = vmatprep.mubr.bf16.mxu0 0
        %987 = vmatmul.mubr.bf16.gmra.mrb[0].mxu0 %v733
        %v988 = vpop.f32.mrb[0].mxu0
        %v989 = vadd.f32 0.0, %v988
        %v990 = vpop.f32.mrb[0].mxu0
        %v991 = vadd.f32 0.0, %v990
        %v992 = vpop.f32.mrb[0].mxu0
        %v993 = vadd.f32 0.0, %v992
        %v994 = vpop.f32.mrb[0].mxu0
        %v995 = vadd.f32 0.0, %v994
        %996 = vmatprep.mubr.bf16.mxu0 0
        %997 = vmatmul.mubr.bf16.gmra.mrb[0].mxu0 %v734
        %v998 = vpop.f32.mrb[0].mxu0
        %v999 = vadd.f32 0.0, %v998
        %v1000 = vpop.f32.mrb[0].mxu0
        %v1001 = vadd.f32 0.0, %v1000
        %v1002 = vpop.f32.mrb[0].mxu0
        %v1003 = vadd.f32 0.0, %v1002
        %v1004 = vpop.f32.mrb[0].mxu0
        %v1005 = vadd.f32 0.0, %v1004
        %1006 = vmatprep.mubr.bf16.mxu0 0
        %1007 = vmatmul.mubr.bf16.gmra.mrb[0].mxu0 %v735
        %v1008 = vpop.f32.mrb[0].mxu0
        %v1009 = vadd.f32 0.0, %v1008
        %v1010 = vpop.f32.mrb[0].mxu0
        %v1011 = vadd.f32 0.0, %v1010
        %v1012 = vpop.f32.mrb[0].mxu0
        %v1013 = vadd.f32 0.0, %v1012
        %v1014 = vpop.f32.mrb[0].mxu0
        %v1015 = vadd.f32 0.0, %v1014
        %1016 = vdwg.mxu0
        %1017 = vmatprep.subr.bf16.mxu0 %v843
        %1018 = vmatpush1.bf16.msra.mxu0 %v842
        %1019 = vmatprep.subr.bf16.mxu0 %v847
        %1020 = vmatpush1.bf16.msra.mxu0 %v846
        %1021 = vmatprep.subr.bf16.mxu0 %v851
        %1022 = vmatpush1.bf16.msra.mxu0 %v850
        %1023 = vmatprep.subr.bf16.mxu0 %v855
        %1024 = vmatpush1.bf16.msra.mxu0 %v854
        %1025 = vmatprep.subr.bf16.mxu0 %v859
        %1026 = vmatpush1.bf16.msra.mxu0 %v858
        %1027 = vmatprep.subr.bf16.mxu0 %v863
        %1028 = vmatpush1.bf16.msra.mxu0 %v862
        %1029 = vmatprep.subr.bf16.mxu0 %v867
        %1030 = vmatpush1.bf16.msra.mxu0 %v866
        %1031 = vmatprep.subr.bf16.mxu0 %v871
        %1032 = vmatpush1.bf16.msra.mxu0 %v870
        %1033 = vmatprep.subr.bf16.mxu0 0
        %1034 = vmatpush1.bf16.msra.mxu0 0
        %1035 = vmatprep.subr.bf16.mxu0 0
        %1036 = vmatpush1.bf16.msra.mxu0 0
        %1037 = vmatprep.subr.bf16.mxu0 0
        %1038 = vmatpush1.bf16.msra.mxu0 0
        %1039 = vmatprep.subr.bf16.mxu0 0
        %1040 = vmatpush1.bf16.msra.mxu0 0
        %1041 = vmatprep.subr.bf16.mxu0 0
        %1042 = vmatpush1.bf16.msra.mxu0 0
        %1043 = vmatprep.subr.bf16.mxu0 0
        %1044 = vmatpush1.bf16.msra.mxu0 0
        %1045 = vmatprep.subr.bf16.mxu0 0
        %1046 = vmatpush1.bf16.msra.mxu0 0
        %1047 = vmatprep.subr.bf16.mxu0 0
        %1048 = vmatpush1.bf16.msra.mxu0 0
        %1049 = vmatprep.mubr.bf16.mxu0 0
        %1050 = vmatmul.mubr.bf16.gmra.mrb[0].mxu0 %v728
        %v1051 = vpop.f32.mrb[0].mxu0
        %v1052 = vadd.f32 0.0, %v1051
        %v1053 = vpop.f32.mrb[0].mxu0
        %v1054 = vadd.f32 0.0, %v1053
        %v1055 = vpop.f32.mrb[0].mxu0
        %v1056 = vadd.f32 0.0, %v1055
        %v1057 = vpop.f32.mrb[0].mxu0
        %v1058 = vadd.f32 0.0, %v1057
        %1059 = vmatprep.mubr.bf16.mxu0 0
        %1060 = vmatmul.mubr.bf16.gmra.mrb[0].mxu0 %v729
        %v1061 = vpop.f32.mrb[0].mxu0
        %v1062 = vadd.f32 0.0, %v1061
        %v1063 = vpop.f32.mrb[0].mxu0
        %v1064 = vadd.f32 0.0, %v1063
        %v1065 = vpop.f32.mrb[0].mxu0
        %v1066 = vadd.f32 0.0, %v1065
        %v1067 = vpop.f32.mrb[0].mxu0
        %v1068 = vadd.f32 0.0, %v1067
        %1069 = vmatprep.mubr.bf16.mxu0 0
        %1070 = vmatmul.mubr.bf16.gmra.mrb[0].mxu0 %v730
        %v1071 = vpop.f32.mrb[0].mxu0
        %v1072 = vadd.f32 0.0, %v1071
        %v1073 = vpop.f32.mrb[0].mxu0
        %v1074 = vadd.f32 0.0, %v1073
        %v1075 = vpop.f32.mrb[0].mxu0
        %v1076 = vadd.f32 0.0, %v1075
        %v1077 = vpop.f32.mrb[0].mxu0
        %v1078 = vadd.f32 0.0, %v1077
        %1079 = vmatprep.mubr.bf16.mxu0 0
        %1080 = vmatmul.mubr.bf16.gmra.mrb[0].mxu0 %v731
        %v1081 = vpop.f32.mrb[0].mxu0
        %v1082 = vadd.f32 0.0, %v1081
        %v1083 = vpop.f32.mrb[0].mxu0
        %v1084 = vadd.f32 0.0, %v1083
        %v1085 = vpop.f32.mrb[0].mxu0
        %v1086 = vadd.f32 0.0, %v1085
        %v1087 = vpop.f32.mrb[0].mxu0
        %v1088 = vadd.f32 0.0, %v1087
        %1089 = vmatprep.mubr.bf16.mxu0 0
        %1090 = vmatmul.mubr.bf16.gmra.mrb[0].mxu0 %v732
        %v1091 = vpop.f32.mrb[0].mxu0
        %v1092 = vadd.f32 0.0, %v1091
        %v1093 = vpop.f32.mrb[0].mxu0
        %v1094 = vadd.f32 0.0, %v1093
        %v1095 = vpop.f32.mrb[0].mxu0
        %v1096 = vadd.f32 0.0, %v1095
        %v1097 = vpop.f32.mrb[0].mxu0
        %v1098 = vadd.f32 0.0, %v1097
        %1099 = vmatprep.mubr.bf16.mxu0 0
        %1100 = vmatmul.mubr.bf16.gmra.mrb[0].mxu0 %v733
        %v1101 = vpop.f32.mrb[0].mxu0
        %v1102 = vadd.f32 0.0, %v1101
        %v1103 = vpop.f32.mrb[0].mxu0
        %v1104 = vadd.f32 0.0, %v1103
        %v1105 = vpop.f32.mrb[0].mxu0
        %v1106 = vadd.f32 0.0, %v1105
        %v1107 = vpop.f32.mrb[0].mxu0
        %v1108 = vadd.f32 0.0, %v1107
        %1109 = vmatprep.mubr.bf16.mxu0 0
        %1110 = vmatmul.mubr.bf16.gmra.mrb[0].mxu0 %v734
        %v1111 = vpop.f32.mrb[0].mxu0
        %v1112 = vadd.f32 0.0, %v1111
        %v1113 = vpop.f32.mrb[0].mxu0
        %v1114 = vadd.f32 0.0, %v1113
        %v1115 = vpop.f32.mrb[0].mxu0
        %v1116 = vadd.f32 0.0, %v1115
        %v1117 = vpop.f32.mrb[0].mxu0
        %v1118 = vadd.f32 0.0, %v1117
        %1119 = vmatprep.mubr.bf16.mxu0 0
        %1120 = vmatmul.mubr.bf16.gmra.mrb[0].mxu0 %v735
        %v1121 = vpop.f32.mrb[0].mxu0
        %v1122 = vadd.f32 0.0, %v1121
        %v1123 = vpop.f32.mrb[0].mxu0
        %v1124 = vadd.f32 0.0, %v1123
        %v1125 = vpop.f32.mrb[0].mxu0
        %v1126 = vadd.f32 0.0, %v1125
        %v1127 = vpop.f32.mrb[0].mxu0
        %v1128 = vadd.f32 0.0, %v1127
        %1129 = vdwg.mxu0
        %v1130 = vpack.c.bf16 %v943, %v939
        %v1131 = vpack.c.bf16 %v945, %v941
        %v1132 = vpack.c.bf16 %v1056, %v1052
        %v1133 = vpack.c.bf16 %v1058, %v1054
        %v1134 = vpack.c.bf16 %v953, %v949
        %v1135 = vpack.c.bf16 %v955, %v951
        %v1136 = vpack.c.bf16 %v1066, %v1062
        %v1137 = vpack.c.bf16 %v1068, %v1064
        %v1138 = vpack.c.bf16 %v963, %v959
        %v1139 = vpack.c.bf16 %v965, %v961
        %v1140 = vpack.c.bf16 %v1076, %v1072
        %v1141 = vpack.c.bf16 %v1078, %v1074
        %v1142 = vpack.c.bf16 %v973, %v969
        %v1143 = vpack.c.bf16 %v975, %v971
        %v1144 = vpack.c.bf16 %v1086, %v1082
        %v1145 = vpack.c.bf16 %v1088, %v1084
        %v1146 = vpack.c.bf16 %v983, %v979
        %v1147 = vpack.c.bf16 %v985, %v981
        %v1148 = vpack.c.bf16 %v1096, %v1092
        %v1149 = vpack.c.bf16 %v1098, %v1094
        %v1150 = vpack.c.bf16 %v993, %v989
        %v1151 = vpack.c.bf16 %v995, %v991
        %v1152 = vpack.c.bf16 %v1106, %v1102
        %v1153 = vpack.c.bf16 %v1108, %v1104
        %v1154 = vpack.c.bf16 %v1003, %v999
        %v1155 = vpack.c.bf16 %v1005, %v1001
        %v1156 = vpack.c.bf16 %v1116, %v1112
        %v1157 = vpack.c.bf16 %v1118, %v1114
        %v1158 = vpack.c.bf16 %v1013, %v1009
        %v1159 = vpack.c.bf16 %v1015, %v1011
        %v1160 = vpack.c.bf16 %v1126, %v1122
        %v1161 = vpack.c.bf16 %v1128, %v1124
        %vm1162 = vcmask 523264
        %v1164 = vsel %vm1162, %v648, 0
        %v1167 = vsel %vm1162, %v650, 0
        %v1170 = vsel %vm1162, %v652, 0
        %v1173 = vsel %vm1162, %v654, 0
        %v1176 = vsel %vm1162, %v656, 0
        %v1179 = vsel %vm1162, %v658, 0
        %v1182 = vsel %vm1162, %v660, 0
        %v1185 = vsel %vm1162, %v662, 0
        %v1188 = vsel %vm1162, %v1130, 0
        %v1191 = vsel %vm1162, %v1134, 0
        %v1194 = vsel %vm1162, %v1138, 0
        %v1197 = vsel %vm1162, %v1142, 0
        %v1200 = vsel %vm1162, %v1146, 0
        %v1203 = vsel %vm1162, %v1150, 0
        %v1206 = vsel %vm1162, %v1154, 0
        %v1209 = vsel %vm1162, %v1158, 0
        %1211 = vmatprep.subr.bf16.mxu0 0
        %1212 = vmatpush1.bf16.xpose.msra.mxu0 %v1188
        %1213 = vmatprep.subr.bf16.mxu0 0
        %1214 = vmatpush1.bf16.xpose.msra.mxu0 %v1191
        %1215 = vmatprep.subr.bf16.mxu0 0
        %1216 = vmatpush1.bf16.xpose.msra.mxu0 %v1194
        %1217 = vmatprep.subr.bf16.mxu0 0
        %1218 = vmatpush1.bf16.xpose.msra.mxu0 %v1197
        %1219 = vmatprep.subr.bf16.mxu0 0
        %1220 = vmatpush1.bf16.xpose.msra.mxu0 %v1200
        %1221 = vmatprep.subr.bf16.mxu0 0
        %1222 = vmatpush1.bf16.xpose.msra.mxu0 %v1203
        %1223 = vmatprep.subr.bf16.mxu0 0
        %1224 = vmatpush1.bf16.xpose.msra.mxu0 %v1206
        %1225 = vmatprep.subr.bf16.mxu0 0
        %1226 = vmatpush1.bf16.xpose.msra.mxu0 %v1209
        %1227 = vmatprep.subr.bf16.mxu0 0
        %1228 = vmatpush1.bf16.xpose.msra.mxu0 0
        %1229 = vmatprep.subr.bf16.mxu0 0
        %1230 = vmatpush1.bf16.xpose.msra.mxu0 0
        %1231 = vmatprep.subr.bf16.mxu0 0
        %1232 = vmatpush1.bf16.xpose.msra.mxu0 0
        %1233 = vmatprep.subr.bf16.mxu0 0
        %1234 = vmatpush1.bf16.xpose.msra.mxu0 0
        %1235 = vmatprep.subr.bf16.mxu0 0
        %1236 = vmatpush1.bf16.xpose.msra.mxu0 0
        %1237 = vmatprep.subr.bf16.mxu0 0
        %1238 = vmatpush1.bf16.xpose.msra.mxu0 0
        %1239 = vmatprep.subr.bf16.mxu0 0
        %1240 = vmatpush1.bf16.xpose.msra.mxu0 0
        %1241 = vmatprep.subr.bf16.mxu0 0
        %1242 = vmatpush1.bf16.xpose.msra.mxu0 0
        %1243 = vmatprep.mubr.bf16.mxu0 0
        %1244 = vmatmul.mubr.bf16.gmra.mrb[0].mxu0 %v1164
        %v1245 = vpop.f32.mrb[0].mxu0
        %v1246 = vadd.f32 0.0, %v1245
        %v1247 = vpop.f32.mrb[0].mxu0
        %v1248 = vpop.f32.mrb[0].mxu0
        %v1249 = vadd.f32 0.0, %v1248
        %v1250 = vpop.f32.mrb[0].mxu0
        %1251 = vmatprep.mubr.bf16.mxu0 0
        %1252 = vmatmul.mubr.bf16.gmra.mrb[0].mxu0 %v1167
        %v1253 = vpop.f32.mrb[0].mxu0
        %v1254 = vadd.f32 0.0, %v1253
        %v1255 = vpop.f32.mrb[0].mxu0
        %v1256 = vpop.f32.mrb[0].mxu0
        %v1257 = vadd.f32 0.0, %v1256
        %v1258 = vpop.f32.mrb[0].mxu0
        %1259 = vmatprep.mubr.bf16.mxu0 0
        %1260 = vmatmul.mubr.bf16.gmra.mrb[0].mxu0 %v1170
        %v1261 = vpop.f32.mrb[0].mxu0
        %v1262 = vadd.f32 0.0, %v1261
        %v1263 = vpop.f32.mrb[0].mxu0
        %v1264 = vpop.f32.mrb[0].mxu0
        %v1265 = vadd.f32 0.0, %v1264
        %v1266 = vpop.f32.mrb[0].mxu0
        %1267 = vmatprep.mubr.bf16.mxu0 0
        %1268 = vmatmul.mubr.bf16.gmra.mrb[0].mxu0 %v1173
        %v1269 = vpop.f32.mrb[0].mxu0
        %v1270 = vadd.f32 0.0, %v1269
        %v1271 = vpop.f32.mrb[0].mxu0
        %v1272 = vpop.f32.mrb[0].mxu0
        %v1273 = vadd.f32 0.0, %v1272
        %v1274 = vpop.f32.mrb[0].mxu0
        %1275 = vmatprep.mubr.bf16.mxu0 0
        %1276 = vmatmul.mubr.bf16.gmra.mrb[0].mxu0 %v1176
        %v1277 = vpop.f32.mrb[0].mxu0
        %v1278 = vadd.f32 0.0, %v1277
        %v1279 = vpop.f32.mrb[0].mxu0
        %v1280 = vpop.f32.mrb[0].mxu0
        %v1281 = vadd.f32 0.0, %v1280
        %v1282 = vpop.f32.mrb[0].mxu0
        %1283 = vmatprep.mubr.bf16.mxu0 0
        %1284 = vmatmul.mubr.bf16.gmra.mrb[0].mxu0 %v1179
        %v1285 = vpop.f32.mrb[0].mxu0
        %v1286 = vadd.f32 0.0, %v1285
        %v1287 = vpop.f32.mrb[0].mxu0
        %v1288 = vpop.f32.mrb[0].mxu0
        %v1289 = vadd.f32 0.0, %v1288
        %v1290 = vpop.f32.mrb[0].mxu0
        %1291 = vmatprep.mubr.bf16.mxu0 0
        %1292 = vmatmul.mubr.bf16.gmra.mrb[0].mxu0 %v1182
        %v1293 = vpop.f32.mrb[0].mxu0
        %v1294 = vadd.f32 0.0, %v1293
        %v1295 = vpop.f32.mrb[0].mxu0
        %v1296 = vpop.f32.mrb[0].mxu0
        %v1297 = vadd.f32 0.0, %v1296
        %v1298 = vpop.f32.mrb[0].mxu0
        %1299 = vmatprep.mubr.bf16.mxu0 0
        %1300 = vmatmul.mubr.bf16.gmra.mrb[0].mxu0 %v1185
        %v1301 = vpop.f32.mrb[0].mxu0
        %v1302 = vadd.f32 0.0, %v1301
        %v1303 = vpop.f32.mrb[0].mxu0
        %v1304 = vpop.f32.mrb[0].mxu0
        %v1305 = vadd.f32 0.0, %v1304
        %v1306 = vpop.f32.mrb[0].mxu0
        %1307 = vdwg.mxu0
        %1308 = vmax.xlane.f32.xlu0 %v1246
        %v1309 = vpop.xlane.xlu0 %1308
        %1310 = vmax.xlane.f32.xlu0 %v1249
        %v1311 = vpop.xlane.xlu0 %1310
        %1312 = vmax.xlane.f32.xlu0 %v1254
        %v1313 = vpop.xlane.xlu0 %1312
        %1314 = vmax.xlane.f32.xlu0 %v1257
        %v1315 = vpop.xlane.xlu0 %1314
        %1316 = vmax.xlane.f32.xlu0 %v1262
        %v1317 = vpop.xlane.xlu0 %1316
        %1318 = vmax.xlane.f32.xlu0 %v1265
        %v1319 = vpop.xlane.xlu0 %1318
        %1320 = vmax.xlane.f32.xlu0 %v1270
        %v1321 = vpop.xlane.xlu0 %1320
        %1322 = vmax.xlane.f32.xlu0 %v1273
        %v1323 = vpop.xlane.xlu0 %1322
        %1324 = vmax.xlane.f32.xlu0 %v1278
        %v1325 = vpop.xlane.xlu0 %1324
        %1326 = vmax.xlane.f32.xlu0 %v1281
        %v1327 = vpop.xlane.xlu0 %1326
        %1328 = vmax.xlane.f32.xlu0 %v1286
        %v1329 = vpop.xlane.xlu0 %1328
        %1330 = vmax.xlane.f32.xlu0 %v1289
        %v1331 = vpop.xlane.xlu0 %1330
        %1332 = vmax.xlane.f32.xlu0 %v1294
        %v1333 = vpop.xlane.xlu0 %1332
        %1334 = vmax.xlane.f32.xlu0 %v1297
        %v1335 = vpop.xlane.xlu0 %1334
        %1336 = vmax.xlane.f32.xlu0 %v1302
        %v1337 = vpop.xlane.xlu0 %1336
        %1338 = vmax.xlane.f32.xlu0 %v1305
        %v1339 = vpop.xlane.xlu0 %1338
        %v1340 = vsub.f32 %v1246, %v1309
        %v1341 = vsub.f32 %v1249, %v1311
        %v1342 = vsub.f32 %v1254, %v1313
        %v1343 = vsub.f32 %v1257, %v1315
        %v1344 = vsub.f32 %v1262, %v1317
        %v1345 = vsub.f32 %v1265, %v1319
        %v1346 = vsub.f32 %v1270, %v1321
        %v1347 = vsub.f32 %v1273, %v1323
        %v1348 = vsub.f32 %v1278, %v1325
        %v1349 = vsub.f32 %v1281, %v1327
        %v1350 = vsub.f32 %v1286, %v1329
        %v1351 = vsub.f32 %v1289, %v1331
        %v1352 = vsub.f32 %v1294, %v1333
        %v1353 = vsub.f32 %v1297, %v1335
        %v1354 = vsub.f32 %v1302, %v1337
        %v1355 = vsub.f32 %v1305, %v1339
        %v1356 = vmul.f32 %v1340, 1.442695
        %v1357 = vpow.pop %v1356
        %v1358 = vmul.f32 %v1341, 1.442695
        %v1359 = vpow.pop %v1358
        %v1360 = vmul.f32 %v1342, 1.442695
        %v1361 = vpow.pop %v1360
        %v1362 = vmul.f32 %v1343, 1.442695
        %v1363 = vpow.pop %v1362
        %v1364 = vmul.f32 %v1344, 1.442695
        %v1365 = vpow.pop %v1364
        %v1366 = vmul.f32 %v1345, 1.442695
        %v1367 = vpow.pop %v1366
        %v1368 = vmul.f32 %v1346, 1.442695
        %v1369 = vpow.pop %v1368
        %v1370 = vmul.f32 %v1347, 1.442695
        %v1371 = vpow.pop %v1370
        %v1372 = vmul.f32 %v1348, 1.442695
        %v1373 = vpow.pop %v1372
        %v1374 = vmul.f32 %v1349, 1.442695
        %v1375 = vpow.pop %v1374
        %v1376 = vmul.f32 %v1350, 1.442695
        %v1377 = vpow.pop %v1376
        %v1378 = vmul.f32 %v1351, 1.442695
        %v1379 = vpow.pop %v1378
        %v1380 = vmul.f32 %v1352, 1.442695
        %v1381 = vpow.pop %v1380
        %v1382 = vmul.f32 %v1353, 1.442695
        %v1383 = vpow.pop %v1382
        %v1384 = vmul.f32 %v1354, 1.442695
        %v1385 = vpow.pop %v1384
        %v1386 = vmul.f32 %v1355, 1.442695
        %v1387 = vpow.pop %v1386
        %1388 = vadd.xlane.f32.xlu0 %v1357
        %v1389 = vpop.xlane.xlu0 %1388
        %1390 = vadd.xlane.f32.xlu0 %v1359
        %v1391 = vpop.xlane.xlu0 %1390
        %1392 = vadd.xlane.f32.xlu0 %v1361
        %v1393 = vpop.xlane.xlu0 %1392
        %1394 = vadd.xlane.f32.xlu0 %v1363
        %v1395 = vpop.xlane.xlu0 %1394
        %1396 = vadd.xlane.f32.xlu0 %v1365
        %v1397 = vpop.xlane.xlu0 %1396
        %1398 = vadd.xlane.f32.xlu0 %v1367
        %v1399 = vpop.xlane.xlu0 %1398
        %1400 = vadd.xlane.f32.xlu0 %v1369
        %v1401 = vpop.xlane.xlu0 %1400
        %1402 = vadd.xlane.f32.xlu0 %v1371
        %v1403 = vpop.xlane.xlu0 %1402
        %1404 = vadd.xlane.f32.xlu0 %v1373
        %v1405 = vpop.xlane.xlu0 %1404
        %1406 = vadd.xlane.f32.xlu0 %v1375
        %v1407 = vpop.xlane.xlu0 %1406
        %1408 = vadd.xlane.f32.xlu0 %v1377
        %v1409 = vpop.xlane.xlu0 %1408
        %1410 = vadd.xlane.f32.xlu0 %v1379
        %v1411 = vpop.xlane.xlu0 %1410
        %1412 = vadd.xlane.f32.xlu0 %v1381
        %v1413 = vpop.xlane.xlu0 %1412
        %1414 = vadd.xlane.f32.xlu0 %v1383
        %v1415 = vpop.xlane.xlu0 %1414
        %1416 = vadd.xlane.f32.xlu0 %v1385
        %v1417 = vpop.xlane.xlu0 %1416
        %1418 = vadd.xlane.f32.xlu0 %v1387
        %v1419 = vpop.xlane.xlu0 %1418
        %v1420 = vrcp.pop %v1389
        %v1421 = vrcp.pop %v1391
        %v1422 = vrcp.pop %v1393
        %v1423 = vrcp.pop %v1395
        %v1424 = vrcp.pop %v1397
        %v1425 = vrcp.pop %v1399
        %v1426 = vrcp.pop %v1401
        %v1427 = vrcp.pop %v1403
        %v1428 = vrcp.pop %v1405
        %v1429 = vrcp.pop %v1407
        %v1430 = vrcp.pop %v1409
        %v1431 = vrcp.pop %v1411
        %v1432 = vrcp.pop %v1413
        %v1433 = vrcp.pop %v1415
        %v1434 = vrcp.pop %v1417
        %v1435 = vrcp.pop %v1419
        %v1436 = vmul.f32 %v1357, %v1420
        %v1437 = vmul.f32 %v1359, %v1421
        %v1438 = vmul.f32 %v1361, %v1422
        %v1439 = vmul.f32 %v1363, %v1423
        %v1440 = vmul.f32 %v1365, %v1424
        %v1441 = vmul.f32 %v1367, %v1425
        %v1442 = vmul.f32 %v1369, %v1426
        %v1443 = vmul.f32 %v1371, %v1427
        %v1444 = vmul.f32 %v1373, %v1428
        %v1445 = vmul.f32 %v1375, %v1429
        %v1446 = vmul.f32 %v1377, %v1430
        %v1447 = vmul.f32 %v1379, %v1431
        %v1448 = vmul.f32 %v1381, %v1432
        %v1449 = vmul.f32 %v1383, %v1433
        %v1450 = vmul.f32 %v1385, %v1434
        %v1451 = vmul.f32 %v1387, %v1435
        %v1452 = vpack.c.bf16 %v1437, %v1436
        %v1453 = vpack.c.bf16 %v1439, %v1438
        %v1454 = vpack.c.bf16 %v1441, %v1440
        %v1455 = vpack.c.bf16 %v1443, %v1442
        %v1456 = vpack.c.bf16 %v1445, %v1444
        %v1457 = vpack.c.bf16 %v1447, %v1446
        %v1458 = vpack.c.bf16 %v1449, %v1448
        %v1459 = vpack.c.bf16 %v1451, %v1450
        %1460 = vmatprep.subr.bf16.mxu0 0
        %1461 = vmatpush1.bf16.msra.mxu0 %v1132
        %1462 = vmatprep.subr.bf16.mxu0 0
        %1463 = vmatpush1.bf16.msra.mxu0 %v1136
        %1464 = vmatprep.subr.bf16.mxu0 0
        %1465 = vmatpush1.bf16.msra.mxu0 %v1140
        %1466 = vmatprep.subr.bf16.mxu0 0
        %1467 = vmatpush1.bf16.msra.mxu0 %v1144
        %1468 = vmatprep.subr.bf16.mxu0 0
        %1469 = vmatpush1.bf16.msra.mxu0 %v1148
        %1470 = vmatprep.subr.bf16.mxu0 0
        %1471 = vmatpush1.bf16.msra.mxu0 %v1152
        %1472 = vmatprep.subr.bf16.mxu0 0
        %1473 = vmatpush1.bf16.msra.mxu0 %v1156
        %1474 = vmatprep.subr.bf16.mxu0 0
        %1475 = vmatpush1.bf16.msra.mxu0 %v1160
        %1476 = vmatprep.subr.bf16.mxu0 0
        %1477 = vmatpush1.bf16.msra.mxu0 0
        %1478 = vmatprep.subr.bf16.mxu0 0
        %1479 = vmatpush1.bf16.msra.mxu0 0
        %1480 = vmatprep.subr.bf16.mxu0 0
        %1481 = vmatpush1.bf16.msra.mxu0 0
        %1482 = vmatprep.subr.bf16.mxu0 0
        %1483 = vmatpush1.bf16.msra.mxu0 0
        %1484 = vmatprep.subr.bf16.mxu0 0
        %1485 = vmatpush1.bf16.msra.mxu0 0
        %1486 = vmatprep.subr.bf16.mxu0 0
        %1487 = vmatpush1.bf16.msra.mxu0 0
        %1488 = vmatprep.subr.bf16.mxu0 0
        %1489 = vmatpush1.bf16.msra.mxu0 0
        %1490 = vmatprep.subr.bf16.mxu0 0
        %1491 = vmatpush1.bf16.msra.mxu0 0
        %1492 = vmatprep.mubr.bf16.mxu0 0
        %1493 = vmatmul.mubr.bf16.gmra.mrb[0].mxu0 %v1452
        %v1494 = vpop.f32.mrb[0].mxu0
        %v1495 = vadd.f32 0.0, %v1494
        %v1496 = vpop.f32.mrb[0].mxu0
        %v1497 = vpop.f32.mrb[0].mxu0
        %v1498 = vadd.f32 0.0, %v1497
        %v1499 = vpop.f32.mrb[0].mxu0
        %1500 = vmatprep.mubr.bf16.mxu0 0
        %1501 = vmatmul.mubr.bf16.gmra.mrb[0].mxu0 %v1453
        %v1502 = vpop.f32.mrb[0].mxu0
        %v1503 = vadd.f32 0.0, %v1502
        %v1504 = vpop.f32.mrb[0].mxu0
        %v1505 = vpop.f32.mrb[0].mxu0
        %v1506 = vadd.f32 0.0, %v1505
        %v1507 = vpop.f32.mrb[0].mxu0
        %1508 = vmatprep.mubr.bf16.mxu0 0
        %1509 = vmatmul.mubr.bf16.gmra.mrb[0].mxu0 %v1454
        %v1510 = vpop.f32.mrb[0].mxu0
        %v1511 = vadd.f32 0.0, %v1510
        %v1512 = vpop.f32.mrb[0].mxu0
        %v1513 = vpop.f32.mrb[0].mxu0
        %v1514 = vadd.f32 0.0, %v1513
        %v1515 = vpop.f32.mrb[0].mxu0
        %1516 = vmatprep.mubr.bf16.mxu0 0
        %1517 = vmatmul.mubr.bf16.gmra.mrb[0].mxu0 %v1455
        %v1518 = vpop.f32.mrb[0].mxu0
        %v1519 = vadd.f32 0.0, %v1518
        %v1520 = vpop.f32.mrb[0].mxu0
        %v1521 = vpop.f32.mrb[0].mxu0
        %v1522 = vadd.f32 0.0, %v1521
        %v1523 = vpop.f32.mrb[0].mxu0
        %1524 = vmatprep.mubr.bf16.mxu0 0
        %1525 = vmatmul.mubr.bf16.gmra.mrb[0].mxu0 %v1456
        %v1526 = vpop.f32.mrb[0].mxu0
        %v1527 = vadd.f32 0.0, %v1526
        %v1528 = vpop.f32.mrb[0].mxu0
        %v1529 = vpop.f32.mrb[0].mxu0
        %v1530 = vadd.f32 0.0, %v1529
        %v1531 = vpop.f32.mrb[0].mxu0
        %1532 = vmatprep.mubr.bf16.mxu0 0
        %1533 = vmatmul.mubr.bf16.gmra.mrb[0].mxu0 %v1457
        %v1534 = vpop.f32.mrb[0].mxu0
        %v1535 = vadd.f32 0.0, %v1534
        %v1536 = vpop.f32.mrb[0].mxu0
        %v1537 = vpop.f32.mrb[0].mxu0
        %v1538 = vadd.f32 0.0, %v1537
        %v1539 = vpop.f32.mrb[0].mxu0
        %1540 = vmatprep.mubr.bf16.mxu0 0
        %1541 = vmatmul.mubr.bf16.gmra.mrb[0].mxu0 %v1458
        %v1542 = vpop.f32.mrb[0].mxu0
        %v1543 = vadd.f32 0.0, %v1542
        %v1544 = vpop.f32.mrb[0].mxu0
        %v1545 = vpop.f32.mrb[0].mxu0
        %v1546 = vadd.f32 0.0, %v1545
        %v1547 = vpop.f32.mrb[0].mxu0
        %1548 = vmatprep.mubr.bf16.mxu0 0
        %1549 = vmatmul.mubr.bf16.gmra.mrb[0].mxu0 %v1459
        %v1550 = vpop.f32.mrb[0].mxu0
        %v1551 = vadd.f32 0.0, %v1550
        %v1552 = vpop.f32.mrb[0].mxu0
        %v1553 = vpop.f32.mrb[0].mxu0
        %v1554 = vadd.f32 0.0, %v1553
        %v1555 = vpop.f32.mrb[0].mxu0
        %1556 = vdwg.mxu0
        %v1557 = vpack.c.bf16 %v1498, %v1495
        %v1558 = vpack.c.bf16 %v1506, %v1503
        %v1559 = vpack.c.bf16 %v1514, %v1511
        %v1560 = vpack.c.bf16 %v1522, %v1519
        %v1561 = vpack.c.bf16 %v1530, %v1527
        %v1562 = vpack.c.bf16 %v1538, %v1535
        %v1563 = vpack.c.bf16 %v1546, %v1543
        %v1564 = vpack.c.bf16 %v1554, %v1551
        %1573 = vrot.lane.b32.xlu0 %v648, 64
        %v1574 = vpop.permute.xlu0 %1573
        %1575 = vrot.lane.b32.xlu0 %v650, 64
        %v1576 = vpop.permute.xlu0 %1575
        %1577 = vrot.lane.b32.xlu0 %v652, 64
        %v1578 = vpop.permute.xlu0 %1577
        %1579 = vrot.lane.b32.xlu0 %v654, 64
        %v1580 = vpop.permute.xlu0 %1579
        %1581 = vrot.lane.b32.xlu0 %v656, 64
        %v1582 = vpop.permute.xlu0 %1581
        %1583 = vrot.lane.b32.xlu0 %v658, 64
        %v1584 = vpop.permute.xlu0 %1583
        %1585 = vrot.lane.b32.xlu0 %v660, 64
        %v1586 = vpop.permute.xlu0 %1585
        %1587 = vrot.lane.b32.xlu0 %v662, 64
        %v1588 = vpop.permute.xlu0 %1587
        %1597 = vrot.lane.b32.xlu0 %v1130, 64
        %v1598 = vpop.permute.xlu0 %1597
        %1599 = vrot.lane.b32.xlu0 %v1134, 64
        %v1600 = vpop.permute.xlu0 %1599
        %1601 = vrot.lane.b32.xlu0 %v1138, 64
        %v1602 = vpop.permute.xlu0 %1601
        %1603 = vrot.lane.b32.xlu0 %v1142, 64
        %v1604 = vpop.permute.xlu0 %1603
        %1605 = vrot.lane.b32.xlu0 %v1146, 64
        %v1606 = vpop.permute.xlu0 %1605
        %1607 = vrot.lane.b32.xlu0 %v1150, 64
        %v1608 = vpop.permute.xlu0 %1607
        %1609 = vrot.lane.b32.xlu0 %v1154, 64
        %v1610 = vpop.permute.xlu0 %1609
        %1611 = vrot.lane.b32.xlu0 %v1158, 64
        %v1612 = vpop.permute.xlu0 %1611
        %v1614 = vsel %vm1162, %v1574, 0
        %v1617 = vsel %vm1162, %v1576, 0
        %v1620 = vsel %vm1162, %v1578, 0
        %v1623 = vsel %vm1162, %v1580, 0
        %v1626 = vsel %vm1162, %v1582, 0
        %v1629 = vsel %vm1162, %v1584, 0
        %v1632 = vsel %vm1162, %v1586, 0
        %v1635 = vsel %vm1162, %v1588, 0
        %v1638 = vsel %vm1162, %v1598, 0
        %v1641 = vsel %vm1162, %v1600, 0
        %v1644 = vsel %vm1162, %v1602, 0
        %v1647 = vsel %vm1162, %v1604, 0
        %v1650 = vsel %vm1162, %v1606, 0
        %v1653 = vsel %vm1162, %v1608, 0
        %v1656 = vsel %vm1162, %v1610, 0
        %v1659 = vsel %vm1162, %v1612, 0
        %1661 = vmatprep.subr.bf16.mxu0 0
        %1662 = vmatpush1.bf16.xpose.msra.mxu0 %v1638
        %1663 = vmatprep.subr.bf16.mxu0 0
        %1664 = vmatpush1.bf16.xpose.msra.mxu0 %v1641
        %1665 = vmatprep.subr.bf16.mxu0 0
        %1666 = vmatpush1.bf16.xpose.msra.mxu0 %v1644
        %1667 = vmatprep.subr.bf16.mxu0 0
        %1668 = vmatpush1.bf16.xpose.msra.mxu0 %v1647
        %1669 = vmatprep.subr.bf16.mxu0 0
        %1670 = vmatpush1.bf16.xpose.msra.mxu0 %v1650
        %1671 = vmatprep.subr.bf16.mxu0 0
        %1672 = vmatpush1.bf16.xpose.msra.mxu0 %v1653
        %1673 = vmatprep.subr.bf16.mxu0 0
        %1674 = vmatpush1.bf16.xpose.msra.mxu0 %v1656
        %1675 = vmatprep.subr.bf16.mxu0 0
        %1676 = vmatpush1.bf16.xpose.msra.mxu0 %v1659
        %1677 = vmatprep.subr.bf16.mxu0 0
        %1678 = vmatpush1.bf16.xpose.msra.mxu0 0
        %1679 = vmatprep.subr.bf16.mxu0 0
        %1680 = vmatpush1.bf16.xpose.msra.mxu0 0
        %1681 = vmatprep.subr.bf16.mxu0 0
        %1682 = vmatpush1.bf16.xpose.msra.mxu0 0
        %1683 = vmatprep.subr.bf16.mxu0 0
        %1684 = vmatpush1.bf16.xpose.msra.mxu0 0
        %1685 = vmatprep.subr.bf16.mxu0 0
        %1686 = vmatpush1.bf16.xpose.msra.mxu0 0
        %1687 = vmatprep.subr.bf16.mxu0 0
        %1688 = vmatpush1.bf16.xpose.msra.mxu0 0
        %1689 = vmatprep.subr.bf16.mxu0 0
        %1690 = vmatpush1.bf16.xpose.msra.mxu0 0
        %1691 = vmatprep.subr.bf16.mxu0 0
        %1692 = vmatpush1.bf16.xpose.msra.mxu0 0
        %1693 = vmatprep.mubr.bf16.mxu0 0
        %1694 = vmatmul.mubr.bf16.gmra.mrb[0].mxu0 %v1614
        %v1695 = vpop.f32.mrb[0].mxu0
        %v1696 = vadd.f32 0.0, %v1695
        %v1697 = vpop.f32.mrb[0].mxu0
        %v1698 = vpop.f32.mrb[0].mxu0
        %v1699 = vadd.f32 0.0, %v1698
        %v1700 = vpop.f32.mrb[0].mxu0
        %1701 = vmatprep.mubr.bf16.mxu0 0
        %1702 = vmatmul.mubr.bf16.gmra.mrb[0].mxu0 %v1617
        %v1703 = vpop.f32.mrb[0].mxu0
        %v1704 = vadd.f32 0.0, %v1703
        %v1705 = vpop.f32.mrb[0].mxu0
        %v1706 = vpop.f32.mrb[0].mxu0
        %v1707 = vadd.f32 0.0, %v1706
        %v1708 = vpop.f32.mrb[0].mxu0
        %1709 = vmatprep.mubr.bf16.mxu0 0
        %1710 = vmatmul.mubr.bf16.gmra.mrb[0].mxu0 %v1620
        %v1711 = vpop.f32.mrb[0].mxu0
        %v1712 = vadd.f32 0.0, %v1711
        %v1713 = vpop.f32.mrb[0].mxu0
        %v1714 = vpop.f32.mrb[0].mxu0
        %v1715 = vadd.f32 0.0, %v1714
        %v1716 = vpop.f32.mrb[0].mxu0
        %1717 = vmatprep.mubr.bf16.mxu0 0
        %1718 = vmatmul.mubr.bf16.gmra.mrb[0].mxu0 %v1623
        %v1719 = vpop.f32.mrb[0].mxu0
        %v1720 = vadd.f32 0.0, %v1719
        %v1721 = vpop.f32.mrb[0].mxu0
        %v1722 = vpop.f32.mrb[0].mxu0
        %v1723 = vadd.f32 0.0, %v1722
        %v1724 = vpop.f32.mrb[0].mxu0
        %1725 = vmatprep.mubr.bf16.mxu0 0
        %1726 = vmatmul.mubr.bf16.gmra.mrb[0].mxu0 %v1626
        %v1727 = vpop.f32.mrb[0].mxu0
        %v1728 = vadd.f32 0.0, %v1727
        %v1729 = vpop.f32.mrb[0].mxu0
        %v1730 = vpop.f32.mrb[0].mxu0
        %v1731 = vadd.f32 0.0, %v1730
        %v1732 = vpop.f32.mrb[0].mxu0
        %1733 = vmatprep.mubr.bf16.mxu0 0
        %1734 = vmatmul.mubr.bf16.gmra.mrb[0].mxu0 %v1629
        %v1735 = vpop.f32.mrb[0].mxu0
        %v1736 = vadd.f32 0.0, %v1735
        %v1737 = vpop.f32.mrb[0].mxu0
        %v1738 = vpop.f32.mrb[0].mxu0
        %v1739 = vadd.f32 0.0, %v1738
        %v1740 = vpop.f32.mrb[0].mxu0
        %1741 = vmatprep.mubr.bf16.mxu0 0
        %1742 = vmatmul.mubr.bf16.gmra.mrb[0].mxu0 %v1632
        %v1743 = vpop.f32.mrb[0].mxu0
        %v1744 = vadd.f32 0.0, %v1743
        %v1745 = vpop.f32.mrb[0].mxu0
        %v1746 = vpop.f32.mrb[0].mxu0
        %v1747 = vadd.f32 0.0, %v1746
        %v1748 = vpop.f32.mrb[0].mxu0
        %1749 = vmatprep.mubr.bf16.mxu0 0
        %1750 = vmatmul.mubr.bf16.gmra.mrb[0].mxu0 %v1635
        %v1751 = vpop.f32.mrb[0].mxu0
        %v1752 = vadd.f32 0.0, %v1751
        %v1753 = vpop.f32.mrb[0].mxu0
        %v1754 = vpop.f32.mrb[0].mxu0
        %v1755 = vadd.f32 0.0, %v1754
        %v1756 = vpop.f32.mrb[0].mxu0
        %1757 = vdwg.mxu0
        %1758 = vmax.xlane.f32.xlu0 %v1696
        %v1759 = vpop.xlane.xlu0 %1758
        %1760 = vmax.xlane.f32.xlu0 %v1699
        %v1761 = vpop.xlane.xlu0 %1760
        %1762 = vmax.xlane.f32.xlu0 %v1704
        %v1763 = vpop.xlane.xlu0 %1762
        %1764 = vmax.xlane.f32.xlu0 %v1707
        %v1765 = vpop.xlane.xlu0 %1764
        %1766 = vmax.xlane.f32.xlu0 %v1712
        %v1767 = vpop.xlane.xlu0 %1766
        %1768 = vmax.xlane.f32.xlu0 %v1715
        %v1769 = vpop.xlane.xlu0 %1768
        %1770 = vmax.xlane.f32.xlu0 %v1720
        %v1771 = vpop.xlane.xlu0 %1770
        %1772 = vmax.xlane.f32.xlu0 %v1723
        %v1773 = vpop.xlane.xlu0 %1772
        %1774 = vmax.xlane.f32.xlu0 %v1728
        %v1775 = vpop.xlane.xlu0 %1774
        %1776 = vmax.xlane.f32.xlu0 %v1731
        %v1777 = vpop.xlane.xlu0 %1776
        %1778 = vmax.xlane.f32.xlu0 %v1736
        %v1779 = vpop.xlane.xlu0 %1778
        %1780 = vmax.xlane.f32.xlu0 %v1739
        %v1781 = vpop.xlane.xlu0 %1780
        %1782 = vmax.xlane.f32.xlu0 %v1744
        %v1783 = vpop.xlane.xlu0 %1782
        %1784 = vmax.xlane.f32.xlu0 %v1747
        %v1785 = vpop.xlane.xlu0 %1784
        %1786 = vmax.xlane.f32.xlu0 %v1752
        %v1787 = vpop.xlane.xlu0 %1786
        %1788 = vmax.xlane.f32.xlu0 %v1755
        %v1789 = vpop.xlane.xlu0 %1788
        %v1790 = vsub.f32 %v1696, %v1759
        %v1791 = vsub.f32 %v1699, %v1761
        %v1792 = vsub.f32 %v1704, %v1763
        %v1793 = vsub.f32 %v1707, %v1765
        %v1794 = vsub.f32 %v1712, %v1767
        %v1795 = vsub.f32 %v1715, %v1769
        %v1796 = vsub.f32 %v1720, %v1771
        %v1797 = vsub.f32 %v1723, %v1773
        %v1798 = vsub.f32 %v1728, %v1775
        %v1799 = vsub.f32 %v1731, %v1777
        %v1800 = vsub.f32 %v1736, %v1779
        %v1801 = vsub.f32 %v1739, %v1781
        %v1802 = vsub.f32 %v1744, %v1783
        %v1803 = vsub.f32 %v1747, %v1785
        %v1804 = vsub.f32 %v1752, %v1787
        %v1805 = vsub.f32 %v1755, %v1789
        %v1806 = vmul.f32 %v1790, 1.442695
        %v1807 = vpow.pop %v1806
        %v1808 = vmul.f32 %v1791, 1.442695
        %v1809 = vpow.pop %v1808
        %v1810 = vmul.f32 %v1792, 1.442695
        %v1811 = vpow.pop %v1810
        %v1812 = vmul.f32 %v1793, 1.442695
        %v1813 = vpow.pop %v1812
        %v1814 = vmul.f32 %v1794, 1.442695
        %v1815 = vpow.pop %v1814
        %v1816 = vmul.f32 %v1795, 1.442695
        %v1817 = vpow.pop %v1816
        %v1818 = vmul.f32 %v1796, 1.442695
        %v1819 = vpow.pop %v1818
        %v1820 = vmul.f32 %v1797, 1.442695
        %v1821 = vpow.pop %v1820
        %v1822 = vmul.f32 %v1798, 1.442695
        %v1823 = vpow.pop %v1822
        %v1824 = vmul.f32 %v1799, 1.442695
        %v1825 = vpow.pop %v1824
        %v1826 = vmul.f32 %v1800, 1.442695
        %v1827 = vpow.pop %v1826
        %v1828 = vmul.f32 %v1801, 1.442695
        %v1829 = vpow.pop %v1828
        %v1830 = vmul.f32 %v1802, 1.442695
        %v1831 = vpow.pop %v1830
        %v1832 = vmul.f32 %v1803, 1.442695
        %v1833 = vpow.pop %v1832
        %v1834 = vmul.f32 %v1804, 1.442695
        %v1835 = vpow.pop %v1834
        %v1836 = vmul.f32 %v1805, 1.442695
        %v1837 = vpow.pop %v1836
        %1838 = vadd.xlane.f32.xlu0 %v1807
        %v1839 = vpop.xlane.xlu0 %1838
        %1840 = vadd.xlane.f32.xlu0 %v1809
        %v1841 = vpop.xlane.xlu0 %1840
        %1842 = vadd.xlane.f32.xlu0 %v1811
        %v1843 = vpop.xlane.xlu0 %1842
        %1844 = vadd.xlane.f32.xlu0 %v1813
        %v1845 = vpop.xlane.xlu0 %1844
        %1846 = vadd.xlane.f32.xlu0 %v1815
        %v1847 = vpop.xlane.xlu0 %1846
        %1848 = vadd.xlane.f32.xlu0 %v1817
        %v1849 = vpop.xlane.xlu0 %1848
        %1850 = vadd.xlane.f32.xlu0 %v1819
        %v1851 = vpop.xlane.xlu0 %1850
        %1852 = vadd.xlane.f32.xlu0 %v1821
        %v1853 = vpop.xlane.xlu0 %1852
        %1854 = vadd.xlane.f32.xlu0 %v1823
        %v1855 = vpop.xlane.xlu0 %1854
        %1856 = vadd.xlane.f32.xlu0 %v1825
        %v1857 = vpop.xlane.xlu0 %1856
        %1858 = vadd.xlane.f32.xlu0 %v1827
        %v1859 = vpop.xlane.xlu0 %1858
        %1860 = vadd.xlane.f32.xlu0 %v1829
        %v1861 = vpop.xlane.xlu0 %1860
        %1862 = vadd.xlane.f32.xlu0 %v1831
        %v1863 = vpop.xlane.xlu0 %1862
        %1864 = vadd.xlane.f32.xlu0 %v1833
        %v1865 = vpop.xlane.xlu0 %1864
        %1866 = vadd.xlane.f32.xlu0 %v1835
        %v1867 = vpop.xlane.xlu0 %1866
        %1868 = vadd.xlane.f32.xlu0 %v1837
        %v1869 = vpop.xlane.xlu0 %1868
        %v1870 = vrcp.pop %v1839
        %v1871 = vrcp.pop %v1841
        %v1872 = vrcp.pop %v1843
        %v1873 = vrcp.pop %v1845
        %v1874 = vrcp.pop %v1847
        %v1875 = vrcp.pop %v1849
        %v1876 = vrcp.pop %v1851
        %v1877 = vrcp.pop %v1853
        %v1878 = vrcp.pop %v1855
        %v1879 = vrcp.pop %v1857
        %v1880 = vrcp.pop %v1859
        %v1881 = vrcp.pop %v1861
        %v1882 = vrcp.pop %v1863
        %v1883 = vrcp.pop %v1865
        %v1884 = vrcp.pop %v1867
        %v1885 = vrcp.pop %v1869
        %v1886 = vmul.f32 %v1807, %v1870
        %v1887 = vmul.f32 %v1809, %v1871
        %v1888 = vmul.f32 %v1811, %v1872
        %v1889 = vmul.f32 %v1813, %v1873
        %v1890 = vmul.f32 %v1815, %v1874
        %v1891 = vmul.f32 %v1817, %v1875
        %v1892 = vmul.f32 %v1819, %v1876
        %v1893 = vmul.f32 %v1821, %v1877
        %v1894 = vmul.f32 %v1823, %v1878
        %v1895 = vmul.f32 %v1825, %v1879
        %v1896 = vmul.f32 %v1827, %v1880
        %v1897 = vmul.f32 %v1829, %v1881
        %v1898 = vmul.f32 %v1831, %v1882
        %v1899 = vmul.f32 %v1833, %v1883
        %v1900 = vmul.f32 %v1835, %v1884
        %v1901 = vmul.f32 %v1837, %v1885
        %v1902 = vpack.c.bf16 %v1887, %v1886
        %v1903 = vpack.c.bf16 %v1889, %v1888
        %v1904 = vpack.c.bf16 %v1891, %v1890
        %v1905 = vpack.c.bf16 %v1893, %v1892
        %v1906 = vpack.c.bf16 %v1895, %v1894
        %v1907 = vpack.c.bf16 %v1897, %v1896
        %v1908 = vpack.c.bf16 %v1899, %v1898
        %v1909 = vpack.c.bf16 %v1901, %v1900
        %1918 = vrot.lane.b32.xlu0 %v1132, 64
        %v1919 = vpop.permute.xlu0 %1918
        %1920 = vrot.lane.b32.xlu0 %v1136, 64
        %v1921 = vpop.permute.xlu0 %1920
        %1922 = vrot.lane.b32.xlu0 %v1140, 64
        %v1923 = vpop.permute.xlu0 %1922
        %1924 = vrot.lane.b32.xlu0 %v1144, 64
        %v1925 = vpop.permute.xlu0 %1924
        %1926 = vrot.lane.b32.xlu0 %v1148, 64
        %v1927 = vpop.permute.xlu0 %1926
        %1928 = vrot.lane.b32.xlu0 %v1152, 64
        %v1929 = vpop.permute.xlu0 %1928
        %1930 = vrot.lane.b32.xlu0 %v1156, 64
        %v1931 = vpop.permute.xlu0 %1930
        %1932 = vrot.lane.b32.xlu0 %v1160, 64
        %v1933 = vpop.permute.xlu0 %1932
        %1942 = vmatprep.subr.bf16.mxu0 0
        %1943 = vmatpush1.bf16.msra.mxu0 %v1919
        %1944 = vmatprep.subr.bf16.mxu0 0
        %1945 = vmatpush1.bf16.msra.mxu0 %v1921
        %1946 = vmatprep.subr.bf16.mxu0 0
        %1947 = vmatpush1.bf16.msra.mxu0 %v1923
        %1948 = vmatprep.subr.bf16.mxu0 0
        %1949 = vmatpush1.bf16.msra.mxu0 %v1925
        %1950 = vmatprep.subr.bf16.mxu0 0
        %1951 = vmatpush1.bf16.msra.mxu0 %v1927
        %1952 = vmatprep.subr.bf16.mxu0 0
        %1953 = vmatpush1.bf16.msra.mxu0 %v1929
        %1954 = vmatprep.subr.bf16.mxu0 0
        %1955 = vmatpush1.bf16.msra.mxu0 %v1931
        %1956 = vmatprep.subr.bf16.mxu0 0
        %1957 = vmatpush1.bf16.msra.mxu0 %v1933
        %1958 = vmatprep.subr.bf16.mxu0 0
        %1959 = vmatpush1.bf16.msra.mxu0 0
        %1960 = vmatprep.subr.bf16.mxu0 0
        %1961 = vmatpush1.bf16.msra.mxu0 0
        %1962 = vmatprep.subr.bf16.mxu0 0
        %1963 = vmatpush1.bf16.msra.mxu0 0
        %1964 = vmatprep.subr.bf16.mxu0 0
        %1965 = vmatpush1.bf16.msra.mxu0 0
        %1966 = vmatprep.subr.bf16.mxu0 0
        %1967 = vmatpush1.bf16.msra.mxu0 0
        %1968 = vmatprep.subr.bf16.mxu0 0
        %1969 = vmatpush1.bf16.msra.mxu0 0
        %1970 = vmatprep.subr.bf16.mxu0 0
        %1971 = vmatpush1.bf16.msra.mxu0 0
        %1972 = vmatprep.subr.bf16.mxu0 0
        %1973 = vmatpush1.bf16.msra.mxu0 0
        %1974 = vmatprep.mubr.bf16.mxu0 0
        %1975 = vmatmul.mubr.bf16.gmra.mrb[0].mxu0 %v1902
        %v1976 = vpop.f32.mrb[0].mxu0
        %v1977 = vadd.f32 0.0, %v1976
        %v1978 = vpop.f32.mrb[0].mxu0
        %v1979 = vpop.f32.mrb[0].mxu0
        %v1980 = vadd.f32 0.0, %v1979
        %v1981 = vpop.f32.mrb[0].mxu0
        %1982 = vmatprep.mubr.bf16.mxu0 0
        %1983 = vmatmul.mubr.bf16.gmra.mrb[0].mxu0 %v1903
        %v1984 = vpop.f32.mrb[0].mxu0
        %v1985 = vadd.f32 0.0, %v1984
        %v1986 = vpop.f32.mrb[0].mxu0
        %v1987 = vpop.f32.mrb[0].mxu0
        %v1988 = vadd.f32 0.0, %v1987
        %v1989 = vpop.f32.mrb[0].mxu0
        %1990 = vmatprep.mubr.bf16.mxu0 0
        %1991 = vmatmul.mubr.bf16.gmra.mrb[0].mxu0 %v1904
        %v1992 = vpop.f32.mrb[0].mxu0
        %v1993 = vadd.f32 0.0, %v1992
        %v1994 = vpop.f32.mrb[0].mxu0
        %v1995 = vpop.f32.mrb[0].mxu0
        %v1996 = vadd.f32 0.0, %v1995
        %v1997 = vpop.f32.mrb[0].mxu0
        %1998 = vmatprep.mubr.bf16.mxu0 0
        %1999 = vmatmul.mubr.bf16.gmra.mrb[0].mxu0 %v1905
        %v2000 = vpop.f32.mrb[0].mxu0
        %v2001 = vadd.f32 0.0, %v2000
        %v2002 = vpop.f32.mrb[0].mxu0
        %v2003 = vpop.f32.mrb[0].mxu0
        %v2004 = vadd.f32 0.0, %v2003
        %v2005 = vpop.f32.mrb[0].mxu0
        %2006 = vmatprep.mubr.bf16.mxu0 0
        %2007 = vmatmul.mubr.bf16.gmra.mrb[0].mxu0 %v1906
        %v2008 = vpop.f32.mrb[0].mxu0
        %v2009 = vadd.f32 0.0, %v2008
        %v2010 = vpop.f32.mrb[0].mxu0
        %v2011 = vpop.f32.mrb[0].mxu0
        %v2012 = vadd.f32 0.0, %v2011
        %v2013 = vpop.f32.mrb[0].mxu0
        %2014 = vmatprep.mubr.bf16.mxu0 0
        %2015 = vmatmul.mubr.bf16.gmra.mrb[0].mxu0 %v1907
        %v2016 = vpop.f32.mrb[0].mxu0
        %v2017 = vadd.f32 0.0, %v2016
        %v2018 = vpop.f32.mrb[0].mxu0
        %v2019 = vpop.f32.mrb[0].mxu0
        %v2020 = vadd.f32 0.0, %v2019
        %v2021 = vpop.f32.mrb[0].mxu0
        %2022 = vmatprep.mubr.bf16.mxu0 0
        %2023 = vmatmul.mubr.bf16.gmra.mrb[0].mxu0 %v1908
        %v2024 = vpop.f32.mrb[0].mxu0
        %v2025 = vadd.f32 0.0, %v2024
        %v2026 = vpop.f32.mrb[0].mxu0
        %v2027 = vpop.f32.mrb[0].mxu0
        %v2028 = vadd.f32 0.0, %v2027
        %v2029 = vpop.f32.mrb[0].mxu0
        %2030 = vmatprep.mubr.bf16.mxu0 0
        %2031 = vmatmul.mubr.bf16.gmra.mrb[0].mxu0 %v1909
        %v2032 = vpop.f32.mrb[0].mxu0
        %v2033 = vadd.f32 0.0, %v2032
        %v2034 = vpop.f32.mrb[0].mxu0
        %v2035 = vpop.f32.mrb[0].mxu0
        %v2036 = vadd.f32 0.0, %v2035
        %v2037 = vpop.f32.mrb[0].mxu0
        %2038 = vdwg.mxu0
        %v2039 = vpack.c.bf16 %v1980, %v1977
        %v2040 = vpack.c.bf16 %v1988, %v1985
        %v2041 = vpack.c.bf16 %v1996, %v1993
        %v2042 = vpack.c.bf16 %v2004, %v2001
        %v2043 = vpack.c.bf16 %v2012, %v2009
        %v2044 = vpack.c.bf16 %v2020, %v2017
        %v2045 = vpack.c.bf16 %v2028, %v2025
        %v2046 = vpack.c.bf16 %v2036, %v2033
        %v2048 = vsel %vm1162, %v649, 0
        %v2051 = vsel %vm1162, %v651, 0
        %v2054 = vsel %vm1162, %v653, 0
        %v2057 = vsel %vm1162, %v655, 0
        %v2060 = vsel %vm1162, %v657, 0
        %v2063 = vsel %vm1162, %v659, 0
        %v2066 = vsel %vm1162, %v661, 0
        %v2069 = vsel %vm1162, %v663, 0
        %v2072 = vsel %vm1162, %v1131, 0
        %v2075 = vsel %vm1162, %v1135, 0
        %v2078 = vsel %vm1162, %v1139, 0
        %v2081 = vsel %vm1162, %v1143, 0
        %v2084 = vsel %vm1162, %v1147, 0
        %v2087 = vsel %vm1162, %v1151, 0
        %v2090 = vsel %vm1162, %v1155, 0
        %v2093 = vsel %vm1162, %v1159, 0
        %2095 = vmatprep.subr.bf16.mxu0 0
        %2096 = vmatpush1.bf16.xpose.msra.mxu0 %v2072
        %2097 = vmatprep.subr.bf16.mxu0 0
        %2098 = vmatpush1.bf16.xpose.msra.mxu0 %v2075
        %2099 = vmatprep.subr.bf16.mxu0 0
        %2100 = vmatpush1.bf16.xpose.msra.mxu0 %v2078
        %2101 = vmatprep.subr.bf16.mxu0 0
        %2102 = vmatpush1.bf16.xpose.msra.mxu0 %v2081
        %2103 = vmatprep.subr.bf16.mxu0 0
        %2104 = vmatpush1.bf16.xpose.msra.mxu0 %v2084
        %2105 = vmatprep.subr.bf16.mxu0 0
        %2106 = vmatpush1.bf16.xpose.msra.mxu0 %v2087
        %2107 = vmatprep.subr.bf16.mxu0 0
        %2108 = vmatpush1.bf16.xpose.msra.mxu0 %v2090
        %2109 = vmatprep.subr.bf16.mxu0 0
        %2110 = vmatpush1.bf16.xpose.msra.mxu0 %v2093
        %2111 = vmatprep.subr.bf16.mxu0 0
        %2112 = vmatpush1.bf16.xpose.msra.mxu0 0
        %2113 = vmatprep.subr.bf16.mxu0 0
        %2114 = vmatpush1.bf16.xpose.msra.mxu0 0
        %2115 = vmatprep.subr.bf16.mxu0 0
        %2116 = vmatpush1.bf16.xpose.msra.mxu0 0
        %2117 = vmatprep.subr.bf16.mxu0 0
        %2118 = vmatpush1.bf16.xpose.msra.mxu0 0
        %2119 = vmatprep.subr.bf16.mxu0 0
        %2120 = vmatpush1.bf16.xpose.msra.mxu0 0
        %2121 = vmatprep.subr.bf16.mxu0 0
        %2122 = vmatpush1.bf16.xpose.msra.mxu0 0
        %2123 = vmatprep.subr.bf16.mxu0 0
        %2124 = vmatpush1.bf16.xpose.msra.mxu0 0
        %2125 = vmatprep.subr.bf16.mxu0 0
        %2126 = vmatpush1.bf16.xpose.msra.mxu0 0
        %2127 = vmatprep.mubr.bf16.mxu0 0
        %2128 = vmatmul.mubr.bf16.gmra.mrb[0].mxu0 %v2048
        %v2129 = vpop.f32.mrb[0].mxu0
        %v2130 = vadd.f32 0.0, %v2129
        %v2131 = vpop.f32.mrb[0].mxu0
        %v2132 = vpop.f32.mrb[0].mxu0
        %v2133 = vadd.f32 0.0, %v2132
        %v2134 = vpop.f32.mrb[0].mxu0
        %2135 = vmatprep.mubr.bf16.mxu0 0
        %2136 = vmatmul.mubr.bf16.gmra.mrb[0].mxu0 %v2051
        %v2137 = vpop.f32.mrb[0].mxu0
        %v2138 = vadd.f32 0.0, %v2137
        %v2139 = vpop.f32.mrb[0].mxu0
        %v2140 = vpop.f32.mrb[0].mxu0
        %v2141 = vadd.f32 0.0, %v2140
        %v2142 = vpop.f32.mrb[0].mxu0
        %2143 = vmatprep.mubr.bf16.mxu0 0
        %2144 = vmatmul.mubr.bf16.gmra.mrb[0].mxu0 %v2054
        %v2145 = vpop.f32.mrb[0].mxu0
        %v2146 = vadd.f32 0.0, %v2145
        %v2147 = vpop.f32.mrb[0].mxu0
        %v2148 = vpop.f32.mrb[0].mxu0
        %v2149 = vadd.f32 0.0, %v2148
        %v2150 = vpop.f32.mrb[0].mxu0
        %2151 = vmatprep.mubr.bf16.mxu0 0
        %2152 = vmatmul.mubr.bf16.gmra.mrb[0].mxu0 %v2057
        %v2153 = vpop.f32.mrb[0].mxu0
        %v2154 = vadd.f32 0.0, %v2153
        %v2155 = vpop.f32.mrb[0].mxu0
        %v2156 = vpop.f32.mrb[0].mxu0
        %v2157 = vadd.f32 0.0, %v2156
        %v2158 = vpop.f32.mrb[0].mxu0
        %2159 = vmatprep.mubr.bf16.mxu0 0
        %2160 = vmatmul.mubr.bf16.gmra.mrb[0].mxu0 %v2060
        %v2161 = vpop.f32.mrb[0].mxu0
        %v2162 = vadd.f32 0.0, %v2161
        %v2163 = vpop.f32.mrb[0].mxu0
        %v2164 = vpop.f32.mrb[0].mxu0
        %v2165 = vadd.f32 0.0, %v2164
        %v2166 = vpop.f32.mrb[0].mxu0
        %2167 = vmatprep.mubr.bf16.mxu0 0
        %2168 = vmatmul.mubr.bf16.gmra.mrb[0].mxu0 %v2063
        %v2169 = vpop.f32.mrb[0].mxu0
        %v2170 = vadd.f32 0.0, %v2169
        %v2171 = vpop.f32.mrb[0].mxu0
        %v2172 = vpop.f32.mrb[0].mxu0
        %v2173 = vadd.f32 0.0, %v2172
        %v2174 = vpop.f32.mrb[0].mxu0
        %2175 = vmatprep.mubr.bf16.mxu0 0
        %2176 = vmatmul.mubr.bf16.gmra.mrb[0].mxu0 %v2066
        %v2177 = vpop.f32.mrb[0].mxu0
        %v2178 = vadd.f32 0.0, %v2177
        %v2179 = vpop.f32.mrb[0].mxu0
        %v2180 = vpop.f32.mrb[0].mxu0
        %v2181 = vadd.f32 0.0, %v2180
        %v2182 = vpop.f32.mrb[0].mxu0
        %2183 = vmatprep.mubr.bf16.mxu0 0
        %2184 = vmatmul.mubr.bf16.gmra.mrb[0].mxu0 %v2069
        %v2185 = vpop.f32.mrb[0].mxu0
        %v2186 = vadd.f32 0.0, %v2185
        %v2187 = vpop.f32.mrb[0].mxu0
        %v2188 = vpop.f32.mrb[0].mxu0
        %v2189 = vadd.f32 0.0, %v2188
        %v2190 = vpop.f32.mrb[0].mxu0
        %2191 = vdwg.mxu0
        %2192 = vmax.xlane.f32.xlu0 %v2130
        %v2193 = vpop.xlane.xlu0 %2192
        %2194 = vmax.xlane.f32.xlu0 %v2133
        %v2195 = vpop.xlane.xlu0 %2194
        %2196 = vmax.xlane.f32.xlu0 %v2138
        %v2197 = vpop.xlane.xlu0 %2196
        %2198 = vmax.xlane.f32.xlu0 %v2141
        %v2199 = vpop.xlane.xlu0 %2198
        %2200 = vmax.xlane.f32.xlu0 %v2146
        %v2201 = vpop.xlane.xlu0 %2200
        %2202 = vmax.xlane.f32.xlu0 %v2149
        %v2203 = vpop.xlane.xlu0 %2202
        %2204 = vmax.xlane.f32.xlu0 %v2154
        %v2205 = vpop.xlane.xlu0 %2204
        %2206 = vmax.xlane.f32.xlu0 %v2157
        %v2207 = vpop.xlane.xlu0 %2206
        %2208 = vmax.xlane.f32.xlu0 %v2162
        %v2209 = vpop.xlane.xlu0 %2208
        %2210 = vmax.xlane.f32.xlu0 %v2165
        %v2211 = vpop.xlane.xlu0 %2210
        %2212 = vmax.xlane.f32.xlu0 %v2170
        %v2213 = vpop.xlane.xlu0 %2212
        %2214 = vmax.xlane.f32.xlu0 %v2173
        %v2215 = vpop.xlane.xlu0 %2214
        %2216 = vmax.xlane.f32.xlu0 %v2178
        %v2217 = vpop.xlane.xlu0 %2216
        %2218 = vmax.xlane.f32.xlu0 %v2181
        %v2219 = vpop.xlane.xlu0 %2218
        %2220 = vmax.xlane.f32.xlu0 %v2186
        %v2221 = vpop.xlane.xlu0 %2220
        %2222 = vmax.xlane.f32.xlu0 %v2189
        %v2223 = vpop.xlane.xlu0 %2222
        %v2224 = vsub.f32 %v2130, %v2193
        %v2225 = vsub.f32 %v2133, %v2195
        %v2226 = vsub.f32 %v2138, %v2197
        %v2227 = vsub.f32 %v2141, %v2199
        %v2228 = vsub.f32 %v2146, %v2201
        %v2229 = vsub.f32 %v2149, %v2203
        %v2230 = vsub.f32 %v2154, %v2205
        %v2231 = vsub.f32 %v2157, %v2207
        %v2232 = vsub.f32 %v2162, %v2209
        %v2233 = vsub.f32 %v2165, %v2211
        %v2234 = vsub.f32 %v2170, %v2213
        %v2235 = vsub.f32 %v2173, %v2215
        %v2236 = vsub.f32 %v2178, %v2217
        %v2237 = vsub.f32 %v2181, %v2219
        %v2238 = vsub.f32 %v2186, %v2221
        %v2239 = vsub.f32 %v2189, %v2223
        %v2240 = vmul.f32 %v2224, 1.442695
        %v2241 = vpow.pop %v2240
        %v2242 = vmul.f32 %v2225, 1.442695
        %v2243 = vpow.pop %v2242
        %v2244 = vmul.f32 %v2226, 1.442695
        %v2245 = vpow.pop %v2244
        %v2246 = vmul.f32 %v2227, 1.442695
        %v2247 = vpow.pop %v2246
        %v2248 = vmul.f32 %v2228, 1.442695
        %v2249 = vpow.pop %v2248
        %v2250 = vmul.f32 %v2229, 1.442695
        %v2251 = vpow.pop %v2250
        %v2252 = vmul.f32 %v2230, 1.442695
        %v2253 = vpow.pop %v2252
        %v2254 = vmul.f32 %v2231, 1.442695
        %v2255 = vpow.pop %v2254
        %v2256 = vmul.f32 %v2232, 1.442695
        %v2257 = vpow.pop %v2256
        %v2258 = vmul.f32 %v2233, 1.442695
        %v2259 = vpow.pop %v2258
        %v2260 = vmul.f32 %v2234, 1.442695
        %v2261 = vpow.pop %v2260
        %v2262 = vmul.f32 %v2235, 1.442695
        %v2263 = vpow.pop %v2262
        %v2264 = vmul.f32 %v2236, 1.442695
        %v2265 = vpow.pop %v2264
        %v2266 = vmul.f32 %v2237, 1.442695
        %v2267 = vpow.pop %v2266
        %v2268 = vmul.f32 %v2238, 1.442695
        %v2269 = vpow.pop %v2268
        %v2270 = vmul.f32 %v2239, 1.442695
        %v2271 = vpow.pop %v2270
        %2272 = vadd.xlane.f32.xlu0 %v2241
        %v2273 = vpop.xlane.xlu0 %2272
        %2274 = vadd.xlane.f32.xlu0 %v2243
        %v2275 = vpop.xlane.xlu0 %2274
        %2276 = vadd.xlane.f32.xlu0 %v2245
        %v2277 = vpop.xlane.xlu0 %2276
        %2278 = vadd.xlane.f32.xlu0 %v2247
        %v2279 = vpop.xlane.xlu0 %2278
        %2280 = vadd.xlane.f32.xlu0 %v2249
        %v2281 = vpop.xlane.xlu0 %2280
        %2282 = vadd.xlane.f32.xlu0 %v2251
        %v2283 = vpop.xlane.xlu0 %2282
        %2284 = vadd.xlane.f32.xlu0 %v2253
        %v2285 = vpop.xlane.xlu0 %2284
        %2286 = vadd.xlane.f32.xlu0 %v2255
        %v2287 = vpop.xlane.xlu0 %2286
        %2288 = vadd.xlane.f32.xlu0 %v2257
        %v2289 = vpop.xlane.xlu0 %2288
        %2290 = vadd.xlane.f32.xlu0 %v2259
        %v2291 = vpop.xlane.xlu0 %2290
        %2292 = vadd.xlane.f32.xlu0 %v2261
        %v2293 = vpop.xlane.xlu0 %2292
        %2294 = vadd.xlane.f32.xlu0 %v2263
        %v2295 = vpop.xlane.xlu0 %2294
        %2296 = vadd.xlane.f32.xlu0 %v2265
        %v2297 = vpop.xlane.xlu0 %2296
        %2298 = vadd.xlane.f32.xlu0 %v2267
        %v2299 = vpop.xlane.xlu0 %2298
        %2300 = vadd.xlane.f32.xlu0 %v2269
        %v2301 = vpop.xlane.xlu0 %2300
        %2302 = vadd.xlane.f32.xlu0 %v2271
        %v2303 = vpop.xlane.xlu0 %2302
        %v2304 = vrcp.pop %v2273
        %v2305 = vrcp.pop %v2275
        %v2306 = vrcp.pop %v2277
        %v2307 = vrcp.pop %v2279
        %v2308 = vrcp.pop %v2281
        %v2309 = vrcp.pop %v2283
        %v2310 = vrcp.pop %v2285
        %v2311 = vrcp.pop %v2287
        %v2312 = vrcp.pop %v2289
        %v2313 = vrcp.pop %v2291
        %v2314 = vrcp.pop %v2293
        %v2315 = vrcp.pop %v2295
        %v2316 = vrcp.pop %v2297
        %v2317 = vrcp.pop %v2299
        %v2318 = vrcp.pop %v2301
        %v2319 = vrcp.pop %v2303
        %v2320 = vmul.f32 %v2241, %v2304
        %v2321 = vmul.f32 %v2243, %v2305
        %v2322 = vmul.f32 %v2245, %v2306
        %v2323 = vmul.f32 %v2247, %v2307
        %v2324 = vmul.f32 %v2249, %v2308
        %v2325 = vmul.f32 %v2251, %v2309
        %v2326 = vmul.f32 %v2253, %v2310
        %v2327 = vmul.f32 %v2255, %v2311
        %v2328 = vmul.f32 %v2257, %v2312
        %v2329 = vmul.f32 %v2259, %v2313
        %v2330 = vmul.f32 %v2261, %v2314
        %v2331 = vmul.f32 %v2263, %v2315
        %v2332 = vmul.f32 %v2265, %v2316
        %v2333 = vmul.f32 %v2267, %v2317
        %v2334 = vmul.f32 %v2269, %v2318
        %v2335 = vmul.f32 %v2271, %v2319
        %v2336 = vpack.c.bf16 %v2321, %v2320
        %v2337 = vpack.c.bf16 %v2323, %v2322
        %v2338 = vpack.c.bf16 %v2325, %v2324
        %v2339 = vpack.c.bf16 %v2327, %v2326
        %v2340 = vpack.c.bf16 %v2329, %v2328
        %v2341 = vpack.c.bf16 %v2331, %v2330
        %v2342 = vpack.c.bf16 %v2333, %v2332
        %v2343 = vpack.c.bf16 %v2335, %v2334
        %2344 = vmatprep.subr.bf16.mxu0 0
        %2345 = vmatpush1.bf16.msra.mxu0 %v1133
        %2346 = vmatprep.subr.bf16.mxu0 0
        %2347 = vmatpush1.bf16.msra.mxu0 %v1137
        %2348 = vmatprep.subr.bf16.mxu0 0
        %2349 = vmatpush1.bf16.msra.mxu0 %v1141
        %2350 = vmatprep.subr.bf16.mxu0 0
        %2351 = vmatpush1.bf16.msra.mxu0 %v1145
        %2352 = vmatprep.subr.bf16.mxu0 0
        %2353 = vmatpush1.bf16.msra.mxu0 %v1149
        %2354 = vmatprep.subr.bf16.mxu0 0
        %2355 = vmatpush1.bf16.msra.mxu0 %v1153
        %2356 = vmatprep.subr.bf16.mxu0 0
        %2357 = vmatpush1.bf16.msra.mxu0 %v1157
        %2358 = vmatprep.subr.bf16.mxu0 0
        %2359 = vmatpush1.bf16.msra.mxu0 %v1161
        %2360 = vmatprep.subr.bf16.mxu0 0
        %2361 = vmatpush1.bf16.msra.mxu0 0
        %2362 = vmatprep.subr.bf16.mxu0 0
        %2363 = vmatpush1.bf16.msra.mxu0 0
        %2364 = vmatprep.subr.bf16.mxu0 0
        %2365 = vmatpush1.bf16.msra.mxu0 0
        %2366 = vmatprep.subr.bf16.mxu0 0
        %2367 = vmatpush1.bf16.msra.mxu0 0
        %2368 = vmatprep.subr.bf16.mxu0 0
        %2369 = vmatpush1.bf16.msra.mxu0 0
        %2370 = vmatprep.subr.bf16.mxu0 0
        %2371 = vmatpush1.bf16.msra.mxu0 0
        %2372 = vmatprep.subr.bf16.mxu0 0
        %2373 = vmatpush1.bf16.msra.mxu0 0
        %2374 = vmatprep.subr.bf16.mxu0 0
        %2375 = vmatpush1.bf16.msra.mxu0 0
        %2376 = vmatprep.mubr.bf16.mxu0 0
        %2377 = vmatmul.mubr.bf16.gmra.mrb[0].mxu0 %v2336
        %v2378 = vpop.f32.mrb[0].mxu0
        %v2379 = vadd.f32 0.0, %v2378
        %v2380 = vpop.f32.mrb[0].mxu0
        %v2381 = vpop.f32.mrb[0].mxu0
        %v2382 = vadd.f32 0.0, %v2381
        %v2383 = vpop.f32.mrb[0].mxu0
        %2384 = vmatprep.mubr.bf16.mxu0 0
        %2385 = vmatmul.mubr.bf16.gmra.mrb[0].mxu0 %v2337
        %v2386 = vpop.f32.mrb[0].mxu0
        %v2387 = vadd.f32 0.0, %v2386
        %v2388 = vpop.f32.mrb[0].mxu0
        %v2389 = vpop.f32.mrb[0].mxu0
        %v2390 = vadd.f32 0.0, %v2389
        %v2391 = vpop.f32.mrb[0].mxu0
        %2392 = vmatprep.mubr.bf16.mxu0 0
        %2393 = vmatmul.mubr.bf16.gmra.mrb[0].mxu0 %v2338
        %v2394 = vpop.f32.mrb[0].mxu0
        %v2395 = vadd.f32 0.0, %v2394
        %v2396 = vpop.f32.mrb[0].mxu0
        %v2397 = vpop.f32.mrb[0].mxu0
        %v2398 = vadd.f32 0.0, %v2397
        %v2399 = vpop.f32.mrb[0].mxu0
        %2400 = vmatprep.mubr.bf16.mxu0 0
        %2401 = vmatmul.mubr.bf16.gmra.mrb[0].mxu0 %v2339
        %v2402 = vpop.f32.mrb[0].mxu0
        %v2403 = vadd.f32 0.0, %v2402
        %v2404 = vpop.f32.mrb[0].mxu0
        %v2405 = vpop.f32.mrb[0].mxu0
        %v2406 = vadd.f32 0.0, %v2405
        %v2407 = vpop.f32.mrb[0].mxu0
        %2408 = vmatprep.mubr.bf16.mxu0 0
        %2409 = vmatmul.mubr.bf16.gmra.mrb[0].mxu0 %v2340
        %v2410 = vpop.f32.mrb[0].mxu0
        %v2411 = vadd.f32 0.0, %v2410
        %v2412 = vpop.f32.mrb[0].mxu0
        %v2413 = vpop.f32.mrb[0].mxu0
        %v2414 = vadd.f32 0.0, %v2413
        %v2415 = vpop.f32.mrb[0].mxu0
        %2416 = vmatprep.mubr.bf16.mxu0 0
        %2417 = vmatmul.mubr.bf16.gmra.mrb[0].mxu0 %v2341
        %v2418 = vpop.f32.mrb[0].mxu0
        %v2419 = vadd.f32 0.0, %v2418
        %v2420 = vpop.f32.mrb[0].mxu0
        %v2421 = vpop.f32.mrb[0].mxu0
        %v2422 = vadd.f32 0.0, %v2421
        %v2423 = vpop.f32.mrb[0].mxu0
        %2424 = vmatprep.mubr.bf16.mxu0 0
        %2425 = vmatmul.mubr.bf16.gmra.mrb[0].mxu0 %v2342
        %v2426 = vpop.f32.mrb[0].mxu0
        %v2427 = vadd.f32 0.0, %v2426
        %v2428 = vpop.f32.mrb[0].mxu0
        %v2429 = vpop.f32.mrb[0].mxu0
        %v2430 = vadd.f32 0.0, %v2429
        %v2431 = vpop.f32.mrb[0].mxu0
        %2432 = vmatprep.mubr.bf16.mxu0 0
        %2433 = vmatmul.mubr.bf16.gmra.mrb[0].mxu0 %v2343
        %v2434 = vpop.f32.mrb[0].mxu0
        %v2435 = vadd.f32 0.0, %v2434
        %v2436 = vpop.f32.mrb[0].mxu0
        %v2437 = vpop.f32.mrb[0].mxu0
        %v2438 = vadd.f32 0.0, %v2437
        %v2439 = vpop.f32.mrb[0].mxu0
        %2440 = vdwg.mxu0
        %v2441 = vpack.c.bf16 %v2382, %v2379
        %v2442 = vpack.c.bf16 %v2390, %v2387
        %v2443 = vpack.c.bf16 %v2398, %v2395
        %v2444 = vpack.c.bf16 %v2406, %v2403
        %v2445 = vpack.c.bf16 %v2414, %v2411
        %v2446 = vpack.c.bf16 %v2422, %v2419
        %v2447 = vpack.c.bf16 %v2430, %v2427
        %v2448 = vpack.c.bf16 %v2438, %v2435
        %2457 = vrot.lane.b32.xlu0 %v649, 64
        %v2458 = vpop.permute.xlu0 %2457
        %2459 = vrot.lane.b32.xlu0 %v651, 64
        %v2460 = vpop.permute.xlu0 %2459
        %2461 = vrot.lane.b32.xlu0 %v653, 64
        %v2462 = vpop.permute.xlu0 %2461
        %2463 = vrot.lane.b32.xlu0 %v655, 64
        %v2464 = vpop.permute.xlu0 %2463
        %2465 = vrot.lane.b32.xlu0 %v657, 64
        %v2466 = vpop.permute.xlu0 %2465
        %2467 = vrot.lane.b32.xlu0 %v659, 64
        %v2468 = vpop.permute.xlu0 %2467
        %2469 = vrot.lane.b32.xlu0 %v661, 64
        %v2470 = vpop.permute.xlu0 %2469
        %2471 = vrot.lane.b32.xlu0 %v663, 64
        %v2472 = vpop.permute.xlu0 %2471
        %2481 = vrot.lane.b32.xlu0 %v1131, 64
        %v2482 = vpop.permute.xlu0 %2481
        %2483 = vrot.lane.b32.xlu0 %v1135, 64
        %v2484 = vpop.permute.xlu0 %2483
        %2485 = vrot.lane.b32.xlu0 %v1139, 64
        %v2486 = vpop.permute.xlu0 %2485
        %2487 = vrot.lane.b32.xlu0 %v1143, 64
        %v2488 = vpop.permute.xlu0 %2487
        %2489 = vrot.lane.b32.xlu0 %v1147, 64
        %v2490 = vpop.permute.xlu0 %2489
        %2491 = vrot.lane.b32.xlu0 %v1151, 64
        %v2492 = vpop.permute.xlu0 %2491
        %2493 = vrot.lane.b32.xlu0 %v1155, 64
        %v2494 = vpop.permute.xlu0 %2493
        %2495 = vrot.lane.b32.xlu0 %v1159, 64
        %v2496 = vpop.permute.xlu0 %2495
        %v2498 = vsel %vm1162, %v2458, 0
        %v2501 = vsel %vm1162, %v2460, 0
        %v2504 = vsel %vm1162, %v2462, 0
        %v2507 = vsel %vm1162, %v2464, 0
        %v2510 = vsel %vm1162, %v2466, 0
        %v2513 = vsel %vm1162, %v2468, 0
        %v2516 = vsel %vm1162, %v2470, 0
        %v2519 = vsel %vm1162, %v2472, 0
        %v2522 = vsel %vm1162, %v2482, 0
        %v2525 = vsel %vm1162, %v2484, 0
        %v2528 = vsel %vm1162, %v2486, 0
        %v2531 = vsel %vm1162, %v2488, 0
        %v2534 = vsel %vm1162, %v2490, 0
        %v2537 = vsel %vm1162, %v2492, 0
        %v2540 = vsel %vm1162, %v2494, 0
        %v2543 = vsel %vm1162, %v2496, 0
        %2545 = vmatprep.subr.bf16.mxu0 0
        %2546 = vmatpush1.bf16.xpose.msra.mxu0 %v2522
        %2547 = vmatprep.subr.bf16.mxu0 0
        %2548 = vmatpush1.bf16.xpose.msra.mxu0 %v2525
        %2549 = vmatprep.subr.bf16.mxu0 0
        %2550 = vmatpush1.bf16.xpose.msra.mxu0 %v2528
        %2551 = vmatprep.subr.bf16.mxu0 0
        %2552 = vmatpush1.bf16.xpose.msra.mxu0 %v2531
        %2553 = vmatprep.subr.bf16.mxu0 0
        %2554 = vmatpush1.bf16.xpose.msra.mxu0 %v2534
        %2555 = vmatprep.subr.bf16.mxu0 0
        %2556 = vmatpush1.bf16.xpose.msra.mxu0 %v2537
        %2557 = vmatprep.subr.bf16.mxu0 0
        %2558 = vmatpush1.bf16.xpose.msra.mxu0 %v2540
        %2559 = vmatprep.subr.bf16.mxu0 0
        %2560 = vmatpush1.bf16.xpose.msra.mxu0 %v2543
        %2561 = vmatprep.subr.bf16.mxu0 0
        %2562 = vmatpush1.bf16.xpose.msra.mxu0 0
        %2563 = vmatprep.subr.bf16.mxu0 0
        %2564 = vmatpush1.bf16.xpose.msra.mxu0 0
        %2565 = vmatprep.subr.bf16.mxu0 0
        %2566 = vmatpush1.bf16.xpose.msra.mxu0 0
        %2567 = vmatprep.subr.bf16.mxu0 0
        %2568 = vmatpush1.bf16.xpose.msra.mxu0 0
        %2569 = vmatprep.subr.bf16.mxu0 0
        %2570 = vmatpush1.bf16.xpose.msra.mxu0 0
        %2571 = vmatprep.subr.bf16.mxu0 0
        %2572 = vmatpush1.bf16.xpose.msra.mxu0 0
        %2573 = vmatprep.subr.bf16.mxu0 0
        %2574 = vmatpush1.bf16.xpose.msra.mxu0 0
        %2575 = vmatprep.subr.bf16.mxu0 0
        %2576 = vmatpush1.bf16.xpose.msra.mxu0 0
        %2577 = vmatprep.mubr.bf16.mxu0 0
        %2578 = vmatmul.mubr.bf16.gmra.mrb[0].mxu0 %v2498
        %v2579 = vpop.f32.mrb[0].mxu0
        %v2580 = vadd.f32 0.0, %v2579
        %v2581 = vpop.f32.mrb[0].mxu0
        %v2582 = vpop.f32.mrb[0].mxu0
        %v2583 = vadd.f32 0.0, %v2582
        %v2584 = vpop.f32.mrb[0].mxu0
        %2585 = vmatprep.mubr.bf16.mxu0 0
        %2586 = vmatmul.mubr.bf16.gmra.mrb[0].mxu0 %v2501
        %v2587 = vpop.f32.mrb[0].mxu0
        %v2588 = vadd.f32 0.0, %v2587
        %v2589 = vpop.f32.mrb[0].mxu0
        %v2590 = vpop.f32.mrb[0].mxu0
        %v2591 = vadd.f32 0.0, %v2590
        %v2592 = vpop.f32.mrb[0].mxu0
        %2593 = vmatprep.mubr.bf16.mxu0 0
        %2594 = vmatmul.mubr.bf16.gmra.mrb[0].mxu0 %v2504
        %v2595 = vpop.f32.mrb[0].mxu0
        %v2596 = vadd.f32 0.0, %v2595
        %v2597 = vpop.f32.mrb[0].mxu0
        %v2598 = vpop.f32.mrb[0].mxu0
        %v2599 = vadd.f32 0.0, %v2598
        %v2600 = vpop.f32.mrb[0].mxu0
        %2601 = vmatprep.mubr.bf16.mxu0 0
        %2602 = vmatmul.mubr.bf16.gmra.mrb[0].mxu0 %v2507
        %v2603 = vpop.f32.mrb[0].mxu0
        %v2604 = vadd.f32 0.0, %v2603
        %v2605 = vpop.f32.mrb[0].mxu0
        %v2606 = vpop.f32.mrb[0].mxu0
        %v2607 = vadd.f32 0.0, %v2606
        %v2608 = vpop.f32.mrb[0].mxu0
        %2609 = vmatprep.mubr.bf16.mxu0 0
        %2610 = vmatmul.mubr.bf16.gmra.mrb[0].mxu0 %v2510
        %v2611 = vpop.f32.mrb[0].mxu0
        %v2612 = vadd.f32 0.0, %v2611
        %v2613 = vpop.f32.mrb[0].mxu0
        %v2614 = vpop.f32.mrb[0].mxu0
        %v2615 = vadd.f32 0.0, %v2614
        %v2616 = vpop.f32.mrb[0].mxu0
        %2617 = vmatprep.mubr.bf16.mxu0 0
        %2618 = vmatmul.mubr.bf16.gmra.mrb[0].mxu0 %v2513
        %v2619 = vpop.f32.mrb[0].mxu0
        %v2620 = vadd.f32 0.0, %v2619
        %v2621 = vpop.f32.mrb[0].mxu0
        %v2622 = vpop.f32.mrb[0].mxu0
        %v2623 = vadd.f32 0.0, %v2622
        %v2624 = vpop.f32.mrb[0].mxu0
        %2625 = vmatprep.mubr.bf16.mxu0 0
        %2626 = vmatmul.mubr.bf16.gmra.mrb[0].mxu0 %v2516
        %v2627 = vpop.f32.mrb[0].mxu0
        %v2628 = vadd.f32 0.0, %v2627
        %v2629 = vpop.f32.mrb[0].mxu0
        %v2630 = vpop.f32.mrb[0].mxu0
        %v2631 = vadd.f32 0.0, %v2630
        %v2632 = vpop.f32.mrb[0].mxu0
        %2633 = vmatprep.mubr.bf16.mxu0 0
        %2634 = vmatmul.mubr.bf16.gmra.mrb[0].mxu0 %v2519
        %v2635 = vpop.f32.mrb[0].mxu0
        %v2636 = vadd.f32 0.0, %v2635
        %v2637 = vpop.f32.mrb[0].mxu0
        %v2638 = vpop.f32.mrb[0].mxu0
        %v2639 = vadd.f32 0.0, %v2638
        %v2640 = vpop.f32.mrb[0].mxu0
        %2641 = vdwg.mxu0
        %2642 = vmax.xlane.f32.xlu0 %v2580
        %v2643 = vpop.xlane.xlu0 %2642
        %2644 = vmax.xlane.f32.xlu0 %v2583
        %v2645 = vpop.xlane.xlu0 %2644
        %2646 = vmax.xlane.f32.xlu0 %v2588
        %v2647 = vpop.xlane.xlu0 %2646
        %2648 = vmax.xlane.f32.xlu0 %v2591
        %v2649 = vpop.xlane.xlu0 %2648
        %2650 = vmax.xlane.f32.xlu0 %v2596
        %v2651 = vpop.xlane.xlu0 %2650
        %2652 = vmax.xlane.f32.xlu0 %v2599
        %v2653 = vpop.xlane.xlu0 %2652
        %2654 = vmax.xlane.f32.xlu0 %v2604
        %v2655 = vpop.xlane.xlu0 %2654
        %2656 = vmax.xlane.f32.xlu0 %v2607
        %v2657 = vpop.xlane.xlu0 %2656
        %2658 = vmax.xlane.f32.xlu0 %v2612
        %v2659 = vpop.xlane.xlu0 %2658
        %2660 = vmax.xlane.f32.xlu0 %v2615
        %v2661 = vpop.xlane.xlu0 %2660
        %2662 = vmax.xlane.f32.xlu0 %v2620
        %v2663 = vpop.xlane.xlu0 %2662
        %2664 = vmax.xlane.f32.xlu0 %v2623
        %v2665 = vpop.xlane.xlu0 %2664
        %2666 = vmax.xlane.f32.xlu0 %v2628
        %v2667 = vpop.xlane.xlu0 %2666
        %2668 = vmax.xlane.f32.xlu0 %v2631
        %v2669 = vpop.xlane.xlu0 %2668
        %2670 = vmax.xlane.f32.xlu0 %v2636
        %v2671 = vpop.xlane.xlu0 %2670
        %2672 = vmax.xlane.f32.xlu0 %v2639
        %v2673 = vpop.xlane.xlu0 %2672
        %v2674 = vsub.f32 %v2580, %v2643
        %v2675 = vsub.f32 %v2583, %v2645
        %v2676 = vsub.f32 %v2588, %v2647
        %v2677 = vsub.f32 %v2591, %v2649
        %v2678 = vsub.f32 %v2596, %v2651
        %v2679 = vsub.f32 %v2599, %v2653
        %v2680 = vsub.f32 %v2604, %v2655
        %v2681 = vsub.f32 %v2607, %v2657
        %v2682 = vsub.f32 %v2612, %v2659
        %v2683 = vsub.f32 %v2615, %v2661
        %v2684 = vsub.f32 %v2620, %v2663
        %v2685 = vsub.f32 %v2623, %v2665
        %v2686 = vsub.f32 %v2628, %v2667
        %v2687 = vsub.f32 %v2631, %v2669
        %v2688 = vsub.f32 %v2636, %v2671
        %v2689 = vsub.f32 %v2639, %v2673
        %v2690 = vmul.f32 %v2674, 1.442695
        %v2691 = vpow.pop %v2690
        %v2692 = vmul.f32 %v2675, 1.442695
        %v2693 = vpow.pop %v2692
        %v2694 = vmul.f32 %v2676, 1.442695
        %v2695 = vpow.pop %v2694
        %v2696 = vmul.f32 %v2677, 1.442695
        %v2697 = vpow.pop %v2696
        %v2698 = vmul.f32 %v2678, 1.442695
        %v2699 = vpow.pop %v2698
        %v2700 = vmul.f32 %v2679, 1.442695
        %v2701 = vpow.pop %v2700
        %v2702 = vmul.f32 %v2680, 1.442695
        %v2703 = vpow.pop %v2702
        %v2704 = vmul.f32 %v2681, 1.442695
        %v2705 = vpow.pop %v2704
        %v2706 = vmul.f32 %v2682, 1.442695
        %v2707 = vpow.pop %v2706
        %v2708 = vmul.f32 %v2683, 1.442695
        %v2709 = vpow.pop %v2708
        %v2710 = vmul.f32 %v2684, 1.442695
        %v2711 = vpow.pop %v2710
        %v2712 = vmul.f32 %v2685, 1.442695
        %v2713 = vpow.pop %v2712
        %v2714 = vmul.f32 %v2686, 1.442695
        %v2715 = vpow.pop %v2714
        %v2716 = vmul.f32 %v2687, 1.442695
        %v2717 = vpow.pop %v2716
        %v2718 = vmul.f32 %v2688, 1.442695
        %v2719 = vpow.pop %v2718
        %v2720 = vmul.f32 %v2689, 1.442695
        %v2721 = vpow.pop %v2720
        %2722 = vadd.xlane.f32.xlu0 %v2691
        %v2723 = vpop.xlane.xlu0 %2722
        %2724 = vadd.xlane.f32.xlu0 %v2693
        %v2725 = vpop.xlane.xlu0 %2724
        %2726 = vadd.xlane.f32.xlu0 %v2695
        %v2727 = vpop.xlane.xlu0 %2726
        %2728 = vadd.xlane.f32.xlu0 %v2697
        %v2729 = vpop.xlane.xlu0 %2728
        %2730 = vadd.xlane.f32.xlu0 %v2699
        %v2731 = vpop.xlane.xlu0 %2730
        %2732 = vadd.xlane.f32.xlu0 %v2701
        %v2733 = vpop.xlane.xlu0 %2732
        %2734 = vadd.xlane.f32.xlu0 %v2703
        %v2735 = vpop.xlane.xlu0 %2734
        %2736 = vadd.xlane.f32.xlu0 %v2705
        %v2737 = vpop.xlane.xlu0 %2736
        %2738 = vadd.xlane.f32.xlu0 %v2707
        %v2739 = vpop.xlane.xlu0 %2738
        %2740 = vadd.xlane.f32.xlu0 %v2709
        %v2741 = vpop.xlane.xlu0 %2740
        %2742 = vadd.xlane.f32.xlu0 %v2711
        %v2743 = vpop.xlane.xlu0 %2742
        %2744 = vadd.xlane.f32.xlu0 %v2713
        %v2745 = vpop.xlane.xlu0 %2744
        %2746 = vadd.xlane.f32.xlu0 %v2715
        %v2747 = vpop.xlane.xlu0 %2746
        %2748 = vadd.xlane.f32.xlu0 %v2717
        %v2749 = vpop.xlane.xlu0 %2748
        %2750 = vadd.xlane.f32.xlu0 %v2719
        %v2751 = vpop.xlane.xlu0 %2750
        %2752 = vadd.xlane.f32.xlu0 %v2721
        %v2753 = vpop.xlane.xlu0 %2752
        %v2754 = vrcp.pop %v2723
        %v2755 = vrcp.pop %v2725
        %v2756 = vrcp.pop %v2727
        %v2757 = vrcp.pop %v2729
        %v2758 = vrcp.pop %v2731
        %v2759 = vrcp.pop %v2733
        %v2760 = vrcp.pop %v2735
        %v2761 = vrcp.pop %v2737
        %v2762 = vrcp.pop %v2739
        %v2763 = vrcp.pop %v2741
        %v2764 = vrcp.pop %v2743
        %v2765 = vrcp.pop %v2745
        %v2766 = vrcp.pop %v2747
        %v2767 = vrcp.pop %v2749
        %v2768 = vrcp.pop %v2751
        %v2769 = vrcp.pop %v2753
        %v2770 = vmul.f32 %v2691, %v2754
        %v2771 = vmul.f32 %v2693, %v2755
        %v2772 = vmul.f32 %v2695, %v2756
        %v2773 = vmul.f32 %v2697, %v2757
        %v2774 = vmul.f32 %v2699, %v2758
        %v2775 = vmul.f32 %v2701, %v2759
        %v2776 = vmul.f32 %v2703, %v2760
        %v2777 = vmul.f32 %v2705, %v2761
        %v2778 = vmul.f32 %v2707, %v2762
        %v2779 = vmul.f32 %v2709, %v2763
        %v2780 = vmul.f32 %v2711, %v2764
        %v2781 = vmul.f32 %v2713, %v2765
        %v2782 = vmul.f32 %v2715, %v2766
        %v2783 = vmul.f32 %v2717, %v2767
        %v2784 = vmul.f32 %v2719, %v2768
        %v2785 = vmul.f32 %v2721, %v2769
        %v2786 = vpack.c.bf16 %v2771, %v2770
        %v2787 = vpack.c.bf16 %v2773, %v2772
        %v2788 = vpack.c.bf16 %v2775, %v2774
        %v2789 = vpack.c.bf16 %v2777, %v2776
        %v2790 = vpack.c.bf16 %v2779, %v2778
        %v2791 = vpack.c.bf16 %v2781, %v2780
        %v2792 = vpack.c.bf16 %v2783, %v2782
        %v2793 = vpack.c.bf16 %v2785, %v2784
        %2802 = vrot.lane.b32.xlu0 %v1133, 64
        %v2803 = vpop.permute.xlu0 %2802
        %2804 = vrot.lane.b32.xlu0 %v1137, 64
        %v2805 = vpop.permute.xlu0 %2804
        %2806 = vrot.lane.b32.xlu0 %v1141, 64
        %v2807 = vpop.permute.xlu0 %2806
        %2808 = vrot.lane.b32.xlu0 %v1145, 64
        %v2809 = vpop.permute.xlu0 %2808
        %2810 = vrot.lane.b32.xlu0 %v1149, 64
        %v2811 = vpop.permute.xlu0 %2810
        %2812 = vrot.lane.b32.xlu0 %v1153, 64
        %v2813 = vpop.permute.xlu0 %2812
        %2814 = vrot.lane.b32.xlu0 %v1157, 64
        %v2815 = vpop.permute.xlu0 %2814
        %2816 = vrot.lane.b32.xlu0 %v1161, 64
        %v2817 = vpop.permute.xlu0 %2816
        %2826 = vmatprep.subr.bf16.mxu0 0
        %2827 = vmatpush1.bf16.msra.mxu0 %v2803
        %2828 = vmatprep.subr.bf16.mxu0 0
        %2829 = vmatpush1.bf16.msra.mxu0 %v2805
        %2830 = vmatprep.subr.bf16.mxu0 0
        %2831 = vmatpush1.bf16.msra.mxu0 %v2807
        %2832 = vmatprep.subr.bf16.mxu0 0
        %2833 = vmatpush1.bf16.msra.mxu0 %v2809
        %2834 = vmatprep.subr.bf16.mxu0 0
        %2835 = vmatpush1.bf16.msra.mxu0 %v2811
        %2836 = vmatprep.subr.bf16.mxu0 0
        %2837 = vmatpush1.bf16.msra.mxu0 %v2813
        %2838 = vmatprep.subr.bf16.mxu0 0
        %2839 = vmatpush1.bf16.msra.mxu0 %v2815
        %2840 = vmatprep.subr.bf16.mxu0 0
        %2841 = vmatpush1.bf16.msra.mxu0 %v2817
        %2842 = vmatprep.subr.bf16.mxu0 0
        %2843 = vmatpush1.bf16.msra.mxu0 0
        %2844 = vmatprep.subr.bf16.mxu0 0
        %2845 = vmatpush1.bf16.msra.mxu0 0
        %2846 = vmatprep.subr.bf16.mxu0 0
        %2847 = vmatpush1.bf16.msra.mxu0 0
        %2848 = vmatprep.subr.bf16.mxu0 0
        %2849 = vmatpush1.bf16.msra.mxu0 0
        %2850 = vmatprep.subr.bf16.mxu0 0
        %2851 = vmatpush1.bf16.msra.mxu0 0
        %2852 = vmatprep.subr.bf16.mxu0 0
        %2853 = vmatpush1.bf16.msra.mxu0 0
        %2854 = vmatprep.subr.bf16.mxu0 0
        %2855 = vmatpush1.bf16.msra.mxu0 0
        %2856 = vmatprep.subr.bf16.mxu0 0
        %2857 = vmatpush1.bf16.msra.mxu0 0
        %2858 = vmatprep.mubr.bf16.mxu0 0
        %2859 = vmatmul.mubr.bf16.gmra.mrb[0].mxu0 %v2786
        %v2860 = vpop.f32.mrb[0].mxu0
        %v2861 = vadd.f32 0.0, %v2860
        %v2862 = vpop.f32.mrb[0].mxu0
        %v2863 = vpop.f32.mrb[0].mxu0
        %v2864 = vadd.f32 0.0, %v2863
        %v2865 = vpop.f32.mrb[0].mxu0
        %2866 = vmatprep.mubr.bf16.mxu0 0
        %2867 = vmatmul.mubr.bf16.gmra.mrb[0].mxu0 %v2787
        %v2868 = vpop.f32.mrb[0].mxu0
        %v2869 = vadd.f32 0.0, %v2868
        %v2870 = vpop.f32.mrb[0].mxu0
        %v2871 = vpop.f32.mrb[0].mxu0
        %v2872 = vadd.f32 0.0, %v2871
        %v2873 = vpop.f32.mrb[0].mxu0
        %2874 = vmatprep.mubr.bf16.mxu0 0
        %2875 = vmatmul.mubr.bf16.gmra.mrb[0].mxu0 %v2788
        %v2876 = vpop.f32.mrb[0].mxu0
        %v2877 = vadd.f32 0.0, %v2876
        %v2878 = vpop.f32.mrb[0].mxu0
        %v2879 = vpop.f32.mrb[0].mxu0
        %v2880 = vadd.f32 0.0, %v2879
        %v2881 = vpop.f32.mrb[0].mxu0
        %2882 = vmatprep.mubr.bf16.mxu0 0
        %2883 = vmatmul.mubr.bf16.gmra.mrb[0].mxu0 %v2789
        %v2884 = vpop.f32.mrb[0].mxu0
        %v2885 = vadd.f32 0.0, %v2884
        %v2886 = vpop.f32.mrb[0].mxu0
        %v2887 = vpop.f32.mrb[0].mxu0
        %v2888 = vadd.f32 0.0, %v2887
        %v2889 = vpop.f32.mrb[0].mxu0
        %2890 = vmatprep.mubr.bf16.mxu0 0
        %2891 = vmatmul.mubr.bf16.gmra.mrb[0].mxu0 %v2790
        %v2892 = vpop.f32.mrb[0].mxu0
        %v2893 = vadd.f32 0.0, %v2892
        %v2894 = vpop.f32.mrb[0].mxu0
        %v2895 = vpop.f32.mrb[0].mxu0
        %v2896 = vadd.f32 0.0, %v2895
        %v2897 = vpop.f32.mrb[0].mxu0
        %2898 = vmatprep.mubr.bf16.mxu0 0
        %2899 = vmatmul.mubr.bf16.gmra.mrb[0].mxu0 %v2791
        %v2900 = vpop.f32.mrb[0].mxu0
        %v2901 = vadd.f32 0.0, %v2900
        %v2902 = vpop.f32.mrb[0].mxu0
        %v2903 = vpop.f32.mrb[0].mxu0
        %v2904 = vadd.f32 0.0, %v2903
        %v2905 = vpop.f32.mrb[0].mxu0
        %2906 = vmatprep.mubr.bf16.mxu0 0
        %2907 = vmatmul.mubr.bf16.gmra.mrb[0].mxu0 %v2792
        %v2908 = vpop.f32.mrb[0].mxu0
        %v2909 = vadd.f32 0.0, %v2908
        %v2910 = vpop.f32.mrb[0].mxu0
        %v2911 = vpop.f32.mrb[0].mxu0
        %v2912 = vadd.f32 0.0, %v2911
        %v2913 = vpop.f32.mrb[0].mxu0
        %2914 = vmatprep.mubr.bf16.mxu0 0
        %2915 = vmatmul.mubr.bf16.gmra.mrb[0].mxu0 %v2793
        %v2916 = vpop.f32.mrb[0].mxu0
        %v2917 = vadd.f32 0.0, %v2916
        %v2918 = vpop.f32.mrb[0].mxu0
        %v2919 = vpop.f32.mrb[0].mxu0
        %v2920 = vadd.f32 0.0, %v2919
        %v2921 = vpop.f32.mrb[0].mxu0
        %2922 = vdwg.mxu0
        %v2923 = vpack.c.bf16 %v2864, %v2861
        %v2924 = vpack.c.bf16 %v2872, %v2869
        %v2925 = vpack.c.bf16 %v2880, %v2877
        %v2926 = vpack.c.bf16 %v2888, %v2885
        %v2927 = vpack.c.bf16 %v2896, %v2893
        %v2928 = vpack.c.bf16 %v2904, %v2901
        %v2929 = vpack.c.bf16 %v2912, %v2909
        %v2930 = vpack.c.bf16 %v2920, %v2917
        %2939 = vrot.lane.b32.xlu0 %v2039, 64
        %v2940 = vpop.permute.xlu0 %2939
        %2941 = vrot.lane.b32.xlu0 %v2040, 64
        %v2942 = vpop.permute.xlu0 %2941
        %2943 = vrot.lane.b32.xlu0 %v2041, 64
        %v2944 = vpop.permute.xlu0 %2943
        %2945 = vrot.lane.b32.xlu0 %v2042, 64
        %v2946 = vpop.permute.xlu0 %2945
        %2947 = vrot.lane.b32.xlu0 %v2043, 64
        %v2948 = vpop.permute.xlu0 %2947
        %2949 = vrot.lane.b32.xlu0 %v2044, 64
        %v2950 = vpop.permute.xlu0 %2949
        %2951 = vrot.lane.b32.xlu0 %v2045, 64
        %v2952 = vpop.permute.xlu0 %2951
        %2953 = vrot.lane.b32.xlu0 %v2046, 64
        %v2954 = vpop.permute.xlu0 %2953
        %2963 = vrot.lane.b32.xlu0 %v2923, 64
        %v2964 = vpop.permute.xlu0 %2963
        %2965 = vrot.lane.b32.xlu0 %v2924, 64
        %v2966 = vpop.permute.xlu0 %2965
        %2967 = vrot.lane.b32.xlu0 %v2925, 64
        %v2968 = vpop.permute.xlu0 %2967
        %2969 = vrot.lane.b32.xlu0 %v2926, 64
        %v2970 = vpop.permute.xlu0 %2969
        %2971 = vrot.lane.b32.xlu0 %v2927, 64
        %v2972 = vpop.permute.xlu0 %2971
        %2973 = vrot.lane.b32.xlu0 %v2928, 64
        %v2974 = vpop.permute.xlu0 %2973
        %2975 = vrot.lane.b32.xlu0 %v2929, 64
        %v2976 = vpop.permute.xlu0 %2975
        %2977 = vrot.lane.b32.xlu0 %v2930, 64
        %v2978 = vpop.permute.xlu0 %2977
        %v2981 = vsel %vm1162, %v1557, %v2940
        %v2985 = vsel %vm1162, %v1558, %v2942
        %v2989 = vsel %vm1162, %v1559, %v2944
        %v2993 = vsel %vm1162, %v1560, %v2946
        %v2997 = vsel %vm1162, %v1561, %v2948
        %v3001 = vsel %vm1162, %v1562, %v2950
        %v3005 = vsel %vm1162, %v1563, %v2952
        %v3009 = vsel %vm1162, %v1564, %v2954
        %v3013 = vsel %vm1162, %v2441, %v2964
        %v3017 = vsel %vm1162, %v2442, %v2966
        %v3021 = vsel %vm1162, %v2443, %v2968
        %v3025 = vsel %vm1162, %v2444, %v2970
        %v3029 = vsel %vm1162, %v2445, %v2972
        %v3033 = vsel %vm1162, %v2446, %v2974
        %v3037 = vsel %vm1162, %v2447, %v2976
        %v3041 = vsel %vm1162, %v2448, %v2978
        %v3043 = vld [vmem:[#allocation10] sm:$0xf]
        %v3044 = vld [vmem:[#allocation10 + $0x4] sm:$0xf]
        %v3045 = vld [vmem:[#allocation10 + $0x8] sm:$0xf]
        %v3046 = vld [vmem:[#allocation10 + $0xc] sm:$0xf]
        %v3047 = vld [vmem:[#allocation10 + $0x10] sm:$0xf]
        %v3048 = vld [vmem:[#allocation10 + $0x14] sm:$0xf]
        %v3049 = vld [vmem:[#allocation10 + $0x18] sm:$0xf]
        %v3050 = vld [vmem:[#allocation10 + $0x1c] sm:$0xf]
        %v3051 = vld [vmem:[#allocation10 + $0x20] sm:$0xf]
        %v3052 = vld [vmem:[#allocation10 + $0x24] sm:$0xf]
        %v3053 = vld [vmem:[#allocation10 + $0x28] sm:$0xf]
        %v3054 = vld [vmem:[#allocation10 + $0x2c] sm:$0xf]
        %v3055 = vld [vmem:[#allocation10 + $0x30] sm:$0xf]
        %v3056 = vld [vmem:[#allocation10 + $0x34] sm:$0xf]
        %v3057 = vld [vmem:[#allocation10 + $0x38] sm:$0xf]
        %v3058 = vld [vmem:[#allocation10 + $0x3c] sm:$0xf]
        %v3059 = vld [vmem:[#allocation10 + $0x40] sm:$0xf]
        %v3060 = vld [vmem:[#allocation10 + $0x44] sm:$0xf]
        %v3061 = vld [vmem:[#allocation10 + $0x48] sm:$0xf]
        %v3062 = vld [vmem:[#allocation10 + $0x4c] sm:$0xf]
        %v3063 = vld [vmem:[#allocation10 + $0x50] sm:$0xf]
        %v3064 = vld [vmem:[#allocation10 + $0x54] sm:$0xf]
        %v3065 = vld [vmem:[#allocation10 + $0x58] sm:$0xf]
        %v3066 = vld [vmem:[#allocation10 + $0x5c] sm:$0xf]
        %v3067 = vld [vmem:[#allocation10 + $0x60] sm:$0xf]
        %v3068 = vld [vmem:[#allocation10 + $0x64] sm:$0xf]
        %v3069 = vld [vmem:[#allocation10 + $0x68] sm:$0xf]
        %v3070 = vld [vmem:[#allocation10 + $0x6c] sm:$0xf]
        %v3071 = vld [vmem:[#allocation10 + $0x70] sm:$0xf]
        %v3072 = vld [vmem:[#allocation10 + $0x74] sm:$0xf]
        %v3073 = vld [vmem:[#allocation10 + $0x78] sm:$0xf]
        %v3074 = vld [vmem:[#allocation10 + $0x7c] sm:$0xf]
        %v3107 = vunpack.c.l.b16 %v3043
        %v3108 = vunpack.c.l.b16 %v3044
        %v3109 = vunpack.c.l.b16 %v3045
        %v3110 = vunpack.c.l.b16 %v3046
        %v3111 = vunpack.c.l.b16 %v3047
        %v3112 = vunpack.c.l.b16 %v3048
        %v3113 = vunpack.c.l.b16 %v3049
        %v3114 = vunpack.c.l.b16 %v3050
        %v3115 = vunpack.c.l.b16 %v3051
        %v3116 = vunpack.c.l.b16 %v3052
        %v3117 = vunpack.c.l.b16 %v3053
        %v3118 = vunpack.c.l.b16 %v3054
        %v3119 = vunpack.c.l.b16 %v3055
        %v3120 = vunpack.c.l.b16 %v3056
        %v3121 = vunpack.c.l.b16 %v3057
        %v3122 = vunpack.c.l.b16 %v3058
        %v3123 = vunpack.c.l.b16 %v3059
        %v3124 = vunpack.c.l.b16 %v3060
        %v3125 = vunpack.c.l.b16 %v3061
        %v3126 = vunpack.c.l.b16 %v3062
        %v3127 = vunpack.c.l.b16 %v3063
        %v3128 = vunpack.c.l.b16 %v3064
        %v3129 = vunpack.c.l.b16 %v3065
        %v3130 = vunpack.c.l.b16 %v3066
        %v3131 = vunpack.c.l.b16 %v3067
        %v3132 = vunpack.c.l.b16 %v3068
        %v3133 = vunpack.c.l.b16 %v3069
        %v3134 = vunpack.c.l.b16 %v3070
        %v3135 = vunpack.c.l.b16 %v3071
        %v3136 = vunpack.c.l.b16 %v3072
        %v3137 = vunpack.c.l.b16 %v3073
        %v3138 = vunpack.c.l.b16 %v3074
        %v3139 = vpack.c.b16 %v3108, %v3107
        %v3140 = vpack.c.b16 %v3110, %v3109
        %v3141 = vpack.c.b16 %v3112, %v3111
        %v3142 = vpack.c.b16 %v3114, %v3113
        %v3143 = vpack.c.b16 %v3116, %v3115
        %v3144 = vpack.c.b16 %v3118, %v3117
        %v3145 = vpack.c.b16 %v3120, %v3119
        %v3146 = vpack.c.b16 %v3122, %v3121
        %v3147 = vpack.c.b16 %v3124, %v3123
        %v3148 = vpack.c.b16 %v3126, %v3125
        %v3149 = vpack.c.b16 %v3128, %v3127
        %v3150 = vpack.c.b16 %v3130, %v3129
        %v3151 = vpack.c.b16 %v3132, %v3131
        %v3152 = vpack.c.b16 %v3134, %v3133
        %v3153 = vpack.c.b16 %v3136, %v3135
        %v3154 = vpack.c.b16 %v3138, %v3137
        %3171 = vmatprep.subr.bf16.mxu0 0
        %3172 = vmatpush1.bf16.msra.mxu0 %v3139
        %3173 = vmatprep.subr.bf16.mxu0 0
        %3174 = vmatpush1.bf16.msra.mxu0 %v3140
        %3175 = vmatprep.subr.bf16.mxu0 0
        %3176 = vmatpush1.bf16.msra.mxu0 %v3141
        %3177 = vmatprep.subr.bf16.mxu0 0
        %3178 = vmatpush1.bf16.msra.mxu0 %v3142
        %3179 = vmatprep.subr.bf16.mxu0 0
        %3180 = vmatpush1.bf16.msra.mxu0 %v3143
        %3181 = vmatprep.subr.bf16.mxu0 0
        %3182 = vmatpush1.bf16.msra.mxu0 %v3144
        %3183 = vmatprep.subr.bf16.mxu0 0
        %3184 = vmatpush1.bf16.msra.mxu0 %v3145
        %3185 = vmatprep.subr.bf16.mxu0 0
        %3186 = vmatpush1.bf16.msra.mxu0 %v3146
        %3187 = vmatprep.subr.bf16.mxu0 0
        %3188 = vmatpush1.bf16.msra.mxu0 %v3147
        %3189 = vmatprep.subr.bf16.mxu0 0
        %3190 = vmatpush1.bf16.msra.mxu0 %v3148
        %3191 = vmatprep.subr.bf16.mxu0 0
        %3192 = vmatpush1.bf16.msra.mxu0 %v3149
        %3193 = vmatprep.subr.bf16.mxu0 0
        %3194 = vmatpush1.bf16.msra.mxu0 %v3150
        %3195 = vmatprep.subr.bf16.mxu0 0
        %3196 = vmatpush1.bf16.msra.mxu0 %v3151
        %3197 = vmatprep.subr.bf16.mxu0 0
        %3198 = vmatpush1.bf16.msra.mxu0 %v3152
        %3199 = vmatprep.subr.bf16.mxu0 0
        %3200 = vmatpush1.bf16.msra.mxu0 %v3153
        %3201 = vmatprep.subr.bf16.mxu0 0
        %3202 = vmatpush1.bf16.msra.mxu0 %v3154
        %3203 = vmatprep.mubr.bf16.mxu0 %v3013
        %3204 = vmatmul.mubr.bf16.gmra.mrb[0].mxu0 %v2981
        %v3205 = vpop.f32.mrb[0].mxu0
        %v3206 = vadd.f32 0.0, %v3205
        %v3207 = vpop.f32.mrb[0].mxu0
        %v3208 = vpop.f32.mrb[0].mxu0
        %v3209 = vadd.f32 0.0, %v3208
        %v3210 = vpop.f32.mrb[0].mxu0
        %3211 = vmatprep.mubr.bf16.mxu0 %v3017
        %3212 = vmatmul.mubr.bf16.gmra.mrb[0].mxu0 %v2985
        %v3213 = vpop.f32.mrb[0].mxu0
        %v3214 = vadd.f32 0.0, %v3213
        %v3215 = vpop.f32.mrb[0].mxu0
        %v3216 = vpop.f32.mrb[0].mxu0
        %v3217 = vadd.f32 0.0, %v3216
        %v3218 = vpop.f32.mrb[0].mxu0
        %3219 = vmatprep.mubr.bf16.mxu0 %v3021
        %3220 = vmatmul.mubr.bf16.gmra.mrb[0].mxu0 %v2989
        %v3221 = vpop.f32.mrb[0].mxu0
        %v3222 = vadd.f32 0.0, %v3221
        %v3223 = vpop.f32.mrb[0].mxu0
        %v3224 = vpop.f32.mrb[0].mxu0
        %v3225 = vadd.f32 0.0, %v3224
        %v3226 = vpop.f32.mrb[0].mxu0
        %3227 = vmatprep.mubr.bf16.mxu0 %v3025
        %3228 = vmatmul.mubr.bf16.gmra.mrb[0].mxu0 %v2993
        %v3229 = vpop.f32.mrb[0].mxu0
        %v3230 = vadd.f32 0.0, %v3229
        %v3231 = vpop.f32.mrb[0].mxu0
        %v3232 = vpop.f32.mrb[0].mxu0
        %v3233 = vadd.f32 0.0, %v3232
        %v3234 = vpop.f32.mrb[0].mxu0
        %3235 = vmatprep.mubr.bf16.mxu0 %v3029
        %3236 = vmatmul.mubr.bf16.gmra.mrb[0].mxu0 %v2997
        %v3237 = vpop.f32.mrb[0].mxu0
        %v3238 = vadd.f32 0.0, %v3237
        %v3239 = vpop.f32.mrb[0].mxu0
        %v3240 = vpop.f32.mrb[0].mxu0
        %v3241 = vadd.f32 0.0, %v3240
        %v3242 = vpop.f32.mrb[0].mxu0
        %3243 = vmatprep.mubr.bf16.mxu0 %v3033
        %3244 = vmatmul.mubr.bf16.gmra.mrb[0].mxu0 %v3001
        %v3245 = vpop.f32.mrb[0].mxu0
        %v3246 = vadd.f32 0.0, %v3245
        %v3247 = vpop.f32.mrb[0].mxu0
        %v3248 = vpop.f32.mrb[0].mxu0
        %v3249 = vadd.f32 0.0, %v3248
        %v3250 = vpop.f32.mrb[0].mxu0
        %3251 = vmatprep.mubr.bf16.mxu0 %v3037
        %3252 = vmatmul.mubr.bf16.gmra.mrb[0].mxu0 %v3005
        %v3253 = vpop.f32.mrb[0].mxu0
        %v3254 = vadd.f32 0.0, %v3253
        %v3255 = vpop.f32.mrb[0].mxu0
        %v3256 = vpop.f32.mrb[0].mxu0
        %v3257 = vadd.f32 0.0, %v3256
        %v3258 = vpop.f32.mrb[0].mxu0
        %3259 = vmatprep.mubr.bf16.mxu0 %v3041
        %3260 = vmatmul.mubr.bf16.gmra.mrb[0].mxu0 %v3009
        %v3261 = vpop.f32.mrb[0].mxu0
        %v3262 = vadd.f32 0.0, %v3261
        %v3263 = vpop.f32.mrb[0].mxu0
        %v3264 = vpop.f32.mrb[0].mxu0
        %v3265 = vadd.f32 0.0, %v3264
        %v3266 = vpop.f32.mrb[0].mxu0
        %3267 = vdwg.mxu0
        %v3268 = vpack.c.bf16 %v3209, %v3206
        %v3269 = vpack.c.bf16 %v3217, %v3214
        %v3270 = vpack.c.bf16 %v3225, %v3222
        %v3271 = vpack.c.bf16 %v3233, %v3230
        %v3272 = vpack.c.bf16 %v3241, %v3238
        %v3273 = vpack.c.bf16 %v3249, %v3246
        %v3274 = vpack.c.bf16 %v3257, %v3254
        %v3275 = vpack.c.bf16 %v3265, %v3262
        %v3284 = vunpack.c.l.b16 %v3268
        %v3285 = vunpack.c.h.b16 %v3268
        %v3286 = vunpack.c.l.b16 %v3269
        %v3287 = vunpack.c.h.b16 %v3269
        %v3288 = vunpack.c.l.b16 %v3270
        %v3289 = vunpack.c.h.b16 %v3270
        %v3290 = vunpack.c.l.b16 %v3271
        %v3291 = vunpack.c.h.b16 %v3271
        %v3292 = vunpack.c.l.b16 %v3272
        %v3293 = vunpack.c.h.b16 %v3272
        %v3294 = vunpack.c.l.b16 %v3273
        %v3295 = vunpack.c.h.b16 %v3273
        %v3296 = vunpack.c.l.b16 %v3274
        %v3297 = vunpack.c.h.b16 %v3274
        %v3298 = vunpack.c.l.b16 %v3275
        %v3299 = vunpack.c.h.b16 %v3275
        %v3300 = vpack.c.b16 %v3284, %v3284
        %v3301 = vpack.c.b16 %v3285, %v3285
        %v3302 = vpack.c.b16 %v3286, %v3286
        %v3303 = vpack.c.b16 %v3287, %v3287
        %v3304 = vpack.c.b16 %v3288, %v3288
        %v3305 = vpack.c.b16 %v3289, %v3289
        %v3306 = vpack.c.b16 %v3290, %v3290
        %v3307 = vpack.c.b16 %v3291, %v3291
        %v3308 = vpack.c.b16 %v3292, %v3292
        %v3309 = vpack.c.b16 %v3293, %v3293
        %v3310 = vpack.c.b16 %v3294, %v3294
        %v3311 = vpack.c.b16 %v3295, %v3295
        %v3312 = vpack.c.b16 %v3296, %v3296
        %v3313 = vpack.c.b16 %v3297, %v3297
        %v3314 = vpack.c.b16 %v3298, %v3298
        %v3315 = vpack.c.b16 %v3299, %v3299
        %3332 = vst [vmem:[%s325] sm:$0xf] %v3300
        %3333 = vst [vmem:[%s325 + $0x4] sm:$0xf] %v3301
        %3334 = vst [vmem:[%s325 + $0x8] sm:$0xf] %v3302
        %3335 = vst [vmem:[%s325 + $0xc] sm:$0xf] %v3303
        %3336 = vst [vmem:[%s325 + $0x10] sm:$0xf] %v3304
        %3337 = vst [vmem:[%s325 + $0x14] sm:$0xf] %v3305
        %3338 = vst [vmem:[%s325 + $0x18] sm:$0xf] %v3306
        %3339 = vst [vmem:[%s325 + $0x1c] sm:$0xf] %v3307
        %3340 = vst [vmem:[%s325 + $0x20] sm:$0xf] %v3308
        %3341 = vst [vmem:[%s325 + $0x24] sm:$0xf] %v3309
        %3342 = vst [vmem:[%s325 + $0x28] sm:$0xf] %v3310
        %3343 = vst [vmem:[%s325 + $0x2c] sm:$0xf] %v3311
        %3344 = vst [vmem:[%s325 + $0x30] sm:$0xf] %v3312
        %3345 = vst [vmem:[%s325 + $0x34] sm:$0xf] %v3313
        %3346 = vst [vmem:[%s325 + $0x38] sm:$0xf] %v3314
        %3347 = vst [vmem:[%s325 + $0x3c] sm:$0xf] %v3315
        %s3348 = sand.u32 %s149, 1
        %s3349 = scalar_lea.sflag [#allocation4], %s3348
        %s3350 = sand.u32 %s149, 1
        %s3351 = smul.addr %s3350, 64
        %s3352 = scalar_lea.vmem [#allocation11], %s3351
        // Predicated region
        $region61: #{tpu_custom_call.1} parent=39 // pred_check
          %p3353 = pneg %p159
        $region62: #{tpu_custom_call.1} parent=39 // pred_check_branch
          %3355 = sbr.rel (%p3353) target = $region64
        $region63: #{tpu_custom_call.1} parent=39 // pred_region
          %s3357 = ssub.s32 1024, 1024
          %3358 = vsyncadd %s3349, %s3357
          %s3359 = smul.addr %s26, 16
          %s3360 = smul.addr %s3359, 64
          %s3361 = scalar_lea.hbm %s5, %s3360
          %s3362 = sshll.u32 %s3352, 4
          %s3363 = int_to_ptr.vmem [resolvable:$true] %s3362
          %3368 = dma.vmem_to_hbm [thread:$0]  %s3363, 1024, %s3361, %s3349, 64, 64, 4
        $region64: #{tpu_custom_call.1} parent=39 // pred_fallthru
          _
      $region40: #{tpu_custom_call.1} parent=5 // pred_fallthru
        _
      %p3369 = scmp.le.s32.totalorder 2, %s21
      // Predicated region
      $region65: #{tpu_custom_call.1} parent=5 // pred_check
        %p3370 = pneg %p3369
      $region66: #{tpu_custom_call.1} parent=5 // pred_check_branch
        %3372 = sbr.rel (%p3370) target = $region68
      $region67: #{tpu_custom_call.1} parent=5 // pred_region
        %s3373 = ssub.s32 %s21, 2
        // Predicated region
        $region69: #{tpu_custom_call.1} parent=67 // pred_check
          %p3374 = pneg %p165
        $region70: #{tpu_custom_call.1} parent=67 // pred_check_branch
          %3376 = sbr.rel (%p3374) target = $region72
        $region71: #{tpu_custom_call.1} parent=67 // pred_region
          %s3377 = sand.u32 %s150, 1
          %s3378 = scalar_lea.sflag [#allocation4], %s3377
          %s3379 = sand.u32 %s150, 1
          %s3380 = smul.addr %s3379, 64
          %s3381 = scalar_lea.vmem [#allocation11], %s3380
          %3382 = dma.done %s3378, 1024
        $region72: #{tpu_custom_call.1} parent=67 // pred_fallthru
          _
      $region68: #{tpu_custom_call.1} parent=5 // pred_fallthru
        _
    $region6: #{tpu_custom_call.1} parent=1 // loop_footer
      %s25 = sadd.s32 1, %s21
    $region7: #{tpu_custom_call.1} parent=1 // loop_footer_branch
      %20 = sbr.rel target = $region3
    $region8: #{tpu_custom_call.1} parent=1 // loop_exit
      _
    %3383 = vsyncpa [#allocation3], 1
    %s3384 = scalar_lea.sflag [#allocation3], 1
    %3385 = vsyncpa %s3384, 1
    %3386 = vsyncpa [#allocation6], 1
    %s3387 = scalar_lea.sflag [#allocation6], 1
    %3388 = vsyncpa %s3387, 1
    %3389 = vsyncpa [#allocation9], 1
    %3390 = vsyncpa [#allocation4], 1
    %s3391 = scalar_lea.sflag [#allocation4], 1
    %3392 = vsyncpa %s3391, 1

</llo_original>
